<compile_context>
chip_gen: v5e
topology: v5e:2x2
jax: 0.10.0
libtpu: 0.0.40
codegen_flags: <defaults>
</compile_context>

<pallas_src>
import jax
import jax.numpy as jnp
from jax.experimental import pallas as pl
from jax.experimental.pallas import tpu as pltpu


def encoder_kernel(x_ref,
                   w1_ref, s1_ref, t1_ref,
                   w2_ref, b2_ref,
                   w3g_ref, w3f_ref, s2_ref, t2_ref,
                   w4_ref, b4_ref,
                   out_ref):
    """Processes TILE_G point groups (each with N points) per grid step."""
    tg, n, _ = x_ref.shape
    m = tg * n

    # ---- first_conv: Conv1d(3,128,1) -> BN(128) -> ReLU
    # K=3 is pathological for the systolic array; use 3 VPU FMAs instead.
    x = x_ref[...].astype(jnp.float32).reshape(m, 3)
    w1 = w1_ref[...]
    h = (x[:, 0:1] * w1[0:1, :]
         + x[:, 1:2] * w1[1:2, :]
         + x[:, 2:3] * w1[2:3, :])                                   # (m, 128)
    h = h * s1_ref[...] + t1_ref[...]                                # BN(eval), b1 folded
    h = jnp.maximum(h, 0.0)                                          # ReLU

    # ---- Conv1d(128,256,1)  (bf16 operands, f32 accumulation)
    feat = jnp.dot(h.astype(jnp.bfloat16), w2_ref[...],
                   preferred_element_type=jnp.float32) + b2_ref[...]  # (m, 256)

    # ---- per-group global max over points
    fg = jnp.max(feat.reshape(tg, n, -1), axis=1)                    # (tg, 256)

    # ---- second_conv: Conv1d(512,512,1) -> BN(512) -> ReLU
    # w3 is split so broadcast+concat becomes  feat @ w3_f  +  (fg @ w3_g).
    g_term = jnp.dot(fg.astype(jnp.bfloat16), w3g_ref[...],
                     preferred_element_type=jnp.float32)             # (tg, 512)
    h2 = jnp.dot(feat.astype(jnp.bfloat16), w3f_ref[...],
                 preferred_element_type=jnp.float32)                 # (m, 512)
    h2 = h2.reshape(tg, n, -1) + g_term[:, None, :]                  # (tg, n, 512)
    h2 = h2 * s2_ref[...] + t2_ref[...]                              # BN(eval), b3 folded
    h2 = jnp.maximum(h2, 0.0)                                        # ReLU

    # ---- Conv1d(512, C, 1)
    f2 = jnp.dot(h2.reshape(m, -1).astype(jnp.bfloat16), w4_ref[...],
                 preferred_element_type=jnp.float32) + b4_ref[...]   # (m, C)

    # ---- final per-group global max over points -> dense (tg, C) store
    out_ref[...] = jnp.max(f2.reshape(tg, n, -1), axis=1)


def _const_spec(shape):
    # Whole (small) parameter array resident in VMEM for every grid step.
    return pl.BlockSpec(shape, lambda i: tuple(0 for _ in shape))


def encoder_forward(point_groups, params, encoder_channel, tile_g=8):
    """point_groups: (B, G, N, 3) float32 -> (B, G, encoder_channel)."""
    bs, g, n, _ = point_groups.shape
    bg = bs * g
    c = encoder_channel

    x = point_groups.reshape(bg, n, 3).astype(jnp.float32)

    # Pad the group axis so it divides evenly into TILE_G-sized slabs.
    n_tiles = pl.cdiv(bg, tile_g)
    bg_pad = n_tiles * tile_g
    if bg_pad != bg:
        x = jnp.concatenate(
            [x, jnp.zeros((bg_pad - bg, n, 3), jnp.float32)], axis=0)

    (w1, b1, s1, t1, w2, b2, w3, b3, s2, t2, w4, b4) = params

    # Fold conv biases that are immediately followed by BN into the BN shift.
    t1f = t1 + b1 * s1
    t2f = t2 + b3 * s2
    # Split w3: rows 0:256 act on the broadcast global feature (concat order in
    # Point-MAE puts the global feature first), rows 256:512 act on feat.
    w3_g = w3[:256, :].astype(jnp.bfloat16)
    w3_f = w3[256:, :].astype(jnp.bfloat16)
    w2b = w2.astype(jnp.bfloat16)
    w4b = w4.astype(jnp.bfloat16)

    out = pl.pallas_call(
        encoder_kernel,
        out_shape=jax.ShapeDtypeStruct((bg_pad, c), jnp.float32),
        grid_spec=pltpu.PrefetchScalarGridSpec(
            num_scalar_prefetch=0,
            grid=(n_tiles,),
            in_specs=[
                pl.BlockSpec((tile_g, n, 3), lambda i: (i, 0, 0)),   # points
                _const_spec(w1.shape),
                _const_spec(s1.shape), _const_spec(t1f.shape),
                _const_spec(w2b.shape), _const_spec(b2.shape),
                _const_spec(w3_g.shape), _const_spec(w3_f.shape),
                _const_spec(s2.shape), _const_spec(t2f.shape),
                _const_spec(w4b.shape), _const_spec(b4.shape),
            ],
            out_specs=pl.BlockSpec((tile_g, c), lambda i: (i, 0)),
        ),
        compiler_params=pltpu.CompilerParams(
            dimension_semantics=("parallel",)),
    )(x, w1, s1, t1f, w2b, b2, w3_g, w3_f, s2, t2f, w4b, b4)

    return out[:bg].reshape(bs, g, c)


def init_params(key, encoder_channel, eps=1e-5):
    """Deterministic synthetic parameters matching the PyTorch module shapes.

    Conv1d(in,out,1).weight has shape (out, in, 1); we store its transpose
    (in, out) so the kernel matmul is x @ W. BatchNorm is folded into
    scale = gamma / sqrt(var + eps), shift = beta - mean * scale.
    """
    c = encoder_channel
    ks = jax.random.split(key, 12)

    def conv_w(k, cin, cout):
        return (jax.random.normal(k, (cin, cout), jnp.float32) * (1.0 / jnp.sqrt(cin)))

    def conv_b(k, cout):
        return jax.random.normal(k, (1, cout), jnp.float32) * 0.01

    def bn(k, cfeat):
        k1, k2, k3, k4 = jax.random.split(k, 4)
        gamma = 1.0 + 0.1 * jax.random.normal(k1, (1, cfeat), jnp.float32)
        beta = 0.1 * jax.random.normal(k2, (1, cfeat), jnp.float32)
        mean = 0.1 * jax.random.normal(k3, (1, cfeat), jnp.float32)
        var = 1.0 + 0.1 * jnp.abs(jax.random.normal(k4, (1, cfeat), jnp.float32))
        scale = gamma / jnp.sqrt(var + eps)
        shift = beta - mean * scale
        return scale, shift

    w1 = conv_w(ks[0], 3, 128)
    b1 = conv_b(ks[1], 128)
    s1, t1 = bn(ks[2], 128)
    w2 = conv_w(ks[3], 128, 256)
    b2 = conv_b(ks[4], 256)
    w3 = conv_w(ks[5], 512, 512)
    b3 = conv_b(ks[6], 512)
    s2, t2 = bn(ks[7], 512)
    w4 = conv_w(ks[8], 512, c)
    b4 = conv_b(ks[9], c)
    return (w1, b1, s1, t1, w2, b2, w3, b3, s2, t2, w4, b4)


if __name__ == "__main__":
    B, G, N, C = 2, 4, 32, 256   # encoder_channel = 256

    key = jax.random.PRNGKey(0)
    point_groups = jax.random.normal(key, (B, G, N, 3), dtype=jnp.float32)

    params = init_params(jax.random.PRNGKey(1), C)

    # TILE_G=8 -> TILE_G*N = 256 rows per step (fills the 256-deep MXU on
    # v6e/v7x; a multiple of 128 for v5e). bg=8 here, so a single grid step.
    out = encoder_forward(point_groups, params, C, tile_g=8)
    out = jax.block_until_ready(out)

    assert out.shape == (B, G, C), out.shape
    assert out.dtype == jnp.float32
    print("KERNEL_OK")
</pallas_src>

<mosaic_0001>
module attributes {stable_mosaic.version = 11 : i64} {
  func.func @encoder_kernel(%arg0: i32, %arg1: memref<8x32x3xf32, #tpu.memory_space<vmem>>, %arg2: memref<3x128xf32, #tpu.memory_space<vmem>>, %arg3: memref<1x128xf32, #tpu.memory_space<vmem>>, %arg4: memref<1x128xf32, #tpu.memory_space<vmem>>, %arg5: memref<128x256xbf16, #tpu.memory_space<vmem>>, %arg6: memref<1x256xf32, #tpu.memory_space<vmem>>, %arg7: memref<256x512xbf16, #tpu.memory_space<vmem>>, %arg8: memref<256x512xbf16, #tpu.memory_space<vmem>>, %arg9: memref<1x512xf32, #tpu.memory_space<vmem>>, %arg10: memref<1x512xf32, #tpu.memory_space<vmem>>, %arg11: memref<512x256xbf16, #tpu.memory_space<vmem>>, %arg12: memref<1x256xf32, #tpu.memory_space<vmem>>, %arg13: memref<8x256xf32, #tpu.memory_space<vmem>>) attributes {dimension_semantics = [#tpu.dimension_semantics<parallel>], iteration_bounds = array<i64: 1>, scalar_prefetch = 0 : i64, scratch_operands = 0 : i64, tpu.core_type = #tpu.core_type<tc>, window_params = [{transform_indices = @transform_0, window_bounds = array<i64: 8, 32, 3>}, {pipeline_mode = #tpu.pipeline_mode<synchronous>, transform_indices = @transform_1, window_bounds = array<i64: 3, 128>}, {pipeline_mode = #tpu.pipeline_mode<synchronous>, transform_indices = @transform_2, window_bounds = array<i64: 1, 128>}, {pipeline_mode = #tpu.pipeline_mode<synchronous>, transform_indices = @transform_3, window_bounds = array<i64: 1, 128>}, {pipeline_mode = #tpu.pipeline_mode<synchronous>, transform_indices = @transform_4, window_bounds = array<i64: 128, 256>}, {pipeline_mode = #tpu.pipeline_mode<synchronous>, transform_indices = @transform_5, window_bounds = array<i64: 1, 256>}, {pipeline_mode = #tpu.pipeline_mode<synchronous>, transform_indices = @transform_6, window_bounds = array<i64: 256, 512>}, {pipeline_mode = #tpu.pipeline_mode<synchronous>, transform_indices = @transform_7, window_bounds = array<i64: 256, 512>}, {pipeline_mode = #tpu.pipeline_mode<synchronous>, transform_indices = @transform_8, window_bounds = array<i64: 1, 512>}, {pipeline_mode = #tpu.pipeline_mode<synchronous>, transform_indices = @transform_9, window_bounds = array<i64: 1, 512>}, {pipeline_mode = #tpu.pipeline_mode<synchronous>, transform_indices = @transform_10, window_bounds = array<i64: 512, 256>}, {pipeline_mode = #tpu.pipeline_mode<synchronous>, transform_indices = @transform_11, window_bounds = array<i64: 1, 256>}, {transform_indices = @transform_12, window_bounds = array<i64: 8, 256>}]} {
    %c0 = arith.constant 0 : index
    %c0_0 = arith.constant 0 : index
    %c0_1 = arith.constant 0 : index
    %0 = vector.load %arg1[%c0, %c0_0, %c0_1] : memref<8x32x3xf32, #tpu.memory_space<vmem>>, vector<8x32x3xf32>
    %1 = vector.shape_cast %0 : vector<8x32x3xf32> to vector<256x3xf32>
    %c0_2 = arith.constant 0 : index
    %c0_3 = arith.constant 0 : index
    %2 = vector.load %arg2[%c0_2, %c0_3] : memref<3x128xf32, #tpu.memory_space<vmem>>, vector<3x128xf32>
    %3 = vector.extract_strided_slice %1 {offsets = [0, 0], sizes = [256, 1], strides = [1, 1]} : vector<256x3xf32> to vector<256x1xf32>
    %4 = vector.extract_strided_slice %2 {offsets = [0, 0], sizes = [1, 128], strides = [1, 1]} : vector<3x128xf32> to vector<1x128xf32>
    %5 = vector.broadcast %3 : vector<256x1xf32> to vector<256x128xf32>
    %6 = vector.broadcast %4 : vector<1x128xf32> to vector<256x128xf32>
    %7 = arith.mulf %5, %6 : vector<256x128xf32>
    %8 = vector.extract_strided_slice %1 {offsets = [0, 1], sizes = [256, 1], strides = [1, 1]} : vector<256x3xf32> to vector<256x1xf32>
    %9 = vector.extract_strided_slice %2 {offsets = [1, 0], sizes = [1, 128], strides = [1, 1]} : vector<3x128xf32> to vector<1x128xf32>
    %10 = vector.broadcast %8 : vector<256x1xf32> to vector<256x128xf32>
    %11 = vector.broadcast %9 : vector<1x128xf32> to vector<256x128xf32>
    %12 = arith.mulf %10, %11 : vector<256x128xf32>
    %13 = arith.addf %7, %12 : vector<256x128xf32>
    %14 = vector.extract_strided_slice %1 {offsets = [0, 2], sizes = [256, 1], strides = [1, 1]} : vector<256x3xf32> to vector<256x1xf32>
    %15 = vector.extract_strided_slice %2 {offsets = [2, 0], sizes = [1, 128], strides = [1, 1]} : vector<3x128xf32> to vector<1x128xf32>
    %16 = vector.broadcast %14 : vector<256x1xf32> to vector<256x128xf32>
    %17 = vector.broadcast %15 : vector<1x128xf32> to vector<256x128xf32>
    %18 = arith.mulf %16, %17 : vector<256x128xf32>
    %19 = arith.addf %13, %18 : vector<256x128xf32>
    %c0_4 = arith.constant 0 : index
    %c0_5 = arith.constant 0 : index
    %20 = vector.load %arg3[%c0_4, %c0_5] : memref<1x128xf32, #tpu.memory_space<vmem>>, vector<1x128xf32>
    %21 = vector.broadcast %20 : vector<1x128xf32> to vector<256x128xf32>
    %22 = arith.mulf %19, %21 : vector<256x128xf32>
    %c0_6 = arith.constant 0 : index
    %c0_7 = arith.constant 0 : index
    %23 = vector.load %arg4[%c0_6, %c0_7] : memref<1x128xf32, #tpu.memory_space<vmem>>, vector<1x128xf32>
    %24 = vector.broadcast %23 : vector<1x128xf32> to vector<256x128xf32>
    %25 = arith.addf %22, %24 : vector<256x128xf32>
    %cst = arith.constant 0.000000e+00 : f32
    %26 = vector.broadcast %cst : f32 to vector<256x128xf32>
    %27 = arith.maximumf %25, %26 : vector<256x128xf32>
    %28 = arith.truncf %27 : vector<256x128xf32> to vector<256x128xbf16>
    %c0_8 = arith.constant 0 : index
    %c0_9 = arith.constant 0 : index
    %29 = vector.load %arg5[%c0_8, %c0_9] : memref<128x256xbf16, #tpu.memory_space<vmem>>, vector<128x256xbf16>
    %cst_10 = arith.constant dense<0.000000e+00> : vector<256x256xf32>
    %30 = tpu.matmul %28, %29, %cst_10 {dimension_numbers = #tpu.dot_dimension_numbers<[1], [0], [0], [1], [0, 0, 1, 1], [], []>} : vector<256x128xbf16>, vector<128x256xbf16>, vector<256x256xf32> -> vector<256x256xf32>
    %c0_11 = arith.constant 0 : index
    %c0_12 = arith.constant 0 : index
    %31 = vector.load %arg6[%c0_11, %c0_12] : memref<1x256xf32, #tpu.memory_space<vmem>>, vector<1x256xf32>
    %32 = vector.broadcast %31 : vector<1x256xf32> to vector<256x256xf32>
    %33 = arith.addf %30, %32 : vector<256x256xf32>
    %34 = vector.shape_cast %33 : vector<256x256xf32> to vector<8x32x256xf32>
    %cst_13 = arith.constant dense<0xFF800000> : vector<8x256xf32>
    %35 = vector.multi_reduction <maximumf>, %34, %cst_13 [1] : vector<8x32x256xf32> to vector<8x256xf32>
    %36 = arith.truncf %35 : vector<8x256xf32> to vector<8x256xbf16>
    %c0_14 = arith.constant 0 : index
    %c0_15 = arith.constant 0 : index
    %37 = vector.load %arg7[%c0_14, %c0_15] : memref<256x512xbf16, #tpu.memory_space<vmem>>, vector<256x512xbf16>
    %cst_16 = arith.constant dense<0.000000e+00> : vector<8x512xf32>
    %38 = tpu.matmul %36, %37, %cst_16 {dimension_numbers = #tpu.dot_dimension_numbers<[1], [0], [0], [1], [0, 0, 1, 1], [], []>} : vector<8x256xbf16>, vector<256x512xbf16>, vector<8x512xf32> -> vector<8x512xf32>
    %39 = arith.truncf %33 : vector<256x256xf32> to vector<256x256xbf16>
    %c0_17 = arith.constant 0 : index
    %c0_18 = arith.constant 0 : index
    %40 = vector.load %arg8[%c0_17, %c0_18] : memref<256x512xbf16, #tpu.memory_space<vmem>>, vector<256x512xbf16>
    %cst_19 = arith.constant dense<0.000000e+00> : vector<256x512xf32>
    %41 = tpu.matmul %39, %40, %cst_19 {dimension_numbers = #tpu.dot_dimension_numbers<[1], [0], [0], [1], [0, 0, 1, 1], [], []>} : vector<256x256xbf16>, vector<256x512xbf16>, vector<256x512xf32> -> vector<256x512xf32>
    %42 = vector.shape_cast %41 : vector<256x512xf32> to vector<8x32x512xf32>
    %43 = vector.shape_cast %38 : vector<8x512xf32> to vector<8x1x512xf32>
    %44 = vector.broadcast %43 : vector<8x1x512xf32> to vector<8x32x512xf32>
    %45 = arith.addf %42, %44 : vector<8x32x512xf32>
    %c0_20 = arith.constant 0 : index
    %c0_21 = arith.constant 0 : index
    %46 = vector.load %arg9[%c0_20, %c0_21] : memref<1x512xf32, #tpu.memory_space<vmem>>, vector<1x512xf32>
    %47 = vector.shape_cast %46 : vector<1x512xf32> to vector<1x1x512xf32>
    %48 = vector.broadcast %47 : vector<1x1x512xf32> to vector<8x32x512xf32>
    %49 = arith.mulf %45, %48 : vector<8x32x512xf32>
    %c0_22 = arith.constant 0 : index
    %c0_23 = arith.constant 0 : index
    %50 = vector.load %arg10[%c0_22, %c0_23] : memref<1x512xf32, #tpu.memory_space<vmem>>, vector<1x512xf32>
    %51 = vector.shape_cast %50 : vector<1x512xf32> to vector<1x1x512xf32>
    %52 = vector.broadcast %51 : vector<1x1x512xf32> to vector<8x32x512xf32>
    %53 = arith.addf %49, %52 : vector<8x32x512xf32>
    %cst_24 = arith.constant 0.000000e+00 : f32
    %54 = vector.broadcast %cst_24 : f32 to vector<8x32x512xf32>
    %55 = arith.maximumf %53, %54 : vector<8x32x512xf32>
    %56 = vector.shape_cast %55 : vector<8x32x512xf32> to vector<256x512xf32>
    %57 = arith.truncf %56 : vector<256x512xf32> to vector<256x512xbf16>
    %c0_25 = arith.constant 0 : index
    %c0_26 = arith.constant 0 : index
    %58 = vector.load %arg11[%c0_25, %c0_26] : memref<512x256xbf16, #tpu.memory_space<vmem>>, vector<512x256xbf16>
    %cst_27 = arith.constant dense<0.000000e+00> : vector<256x256xf32>
    %59 = tpu.matmul %57, %58, %cst_27 {dimension_numbers = #tpu.dot_dimension_numbers<[1], [0], [0], [1], [0, 0, 1, 1], [], []>} : vector<256x512xbf16>, vector<512x256xbf16>, vector<256x256xf32> -> vector<256x256xf32>
    %c0_28 = arith.constant 0 : index
    %c0_29 = arith.constant 0 : index
    %60 = vector.load %arg12[%c0_28, %c0_29] : memref<1x256xf32, #tpu.memory_space<vmem>>, vector<1x256xf32>
    %61 = vector.broadcast %60 : vector<1x256xf32> to vector<256x256xf32>
    %62 = arith.addf %59, %61 : vector<256x256xf32>
    %63 = vector.shape_cast %62 : vector<256x256xf32> to vector<8x32x256xf32>
    %cst_30 = arith.constant dense<0xFF800000> : vector<8x256xf32>
    %64 = vector.multi_reduction <maximumf>, %63, %cst_30 [1] : vector<8x32x256xf32> to vector<8x256xf32>
    %c0_31 = arith.constant 0 : index
    %c0_32 = arith.constant 0 : index
    %65 = vector.load %arg13[%c0_31, %c0_32] : memref<8x256xf32, #tpu.memory_space<vmem>>, vector<8x256xf32>
    tpu.vector_store %arg13[%c0_31, %c0_32], %64 {strides = array<i32>} : memref<8x256xf32, #tpu.memory_space<vmem>>, vector<8x256xf32>,
    return
  }
  func.func @transform_0(%arg0: i32) -> (i32, i32, i32) {
    %c0_i32 = arith.constant 0 : i32
    %c0_i32_0 = arith.constant 0 : i32
    %c0_i32_1 = arith.constant 0 : i32
    return %arg0, %c0_i32, %c0_i32_0 : i32, i32, i32
  }
  func.func @transform_1(%arg0: i32) -> (i32, i32) {
    %c0_i32 = arith.constant 0 : i32
    %c0_i32_0 = arith.constant 0 : i32
    %c0_i32_1 = arith.constant 0 : i32
    return %c0_i32, %c0_i32_0 : i32, i32
  }
  func.func @transform_2(%arg0: i32) -> (i32, i32) {
    %c0_i32 = arith.constant 0 : i32
    %c0_i32_0 = arith.constant 0 : i32
    %c0_i32_1 = arith.constant 0 : i32
    return %c0_i32, %c0_i32_0 : i32, i32
  }
  func.func @transform_3(%arg0: i32) -> (i32, i32) {
    %c0_i32 = arith.constant 0 : i32
    %c0_i32_0 = arith.constant 0 : i32
    %c0_i32_1 = arith.constant 0 : i32
    return %c0_i32, %c0_i32_0 : i32, i32
  }
  func.func @transform_4(%arg0: i32) -> (i32, i32) {
    %c0_i32 = arith.constant 0 : i32
    %c0_i32_0 = arith.constant 0 : i32
    %c0_i32_1 = arith.constant 0 : i32
    return %c0_i32, %c0_i32_0 : i32, i32
  }
  func.func @transform_5(%arg0: i32) -> (i32, i32) {
    %c0_i32 = arith.constant 0 : i32
    %c0_i32_0 = arith.constant 0 : i32
    %c0_i32_1 = arith.constant 0 : i32
    return %c0_i32, %c0_i32_0 : i32, i32
  }
  func.func @transform_6(%arg0: i32) -> (i32, i32) {
    %c0_i32 = arith.constant 0 : i32
    %c0_i32_0 = arith.constant 0 : i32
    %c0_i32_1 = arith.constant 0 : i32
    return %c0_i32, %c0_i32_0 : i32, i32
  }
  func.func @transform_7(%arg0: i32) -> (i32, i32) {
    %c0_i32 = arith.constant 0 : i32
    %c0_i32_0 = arith.constant 0 : i32
    %c0_i32_1 = arith.constant 0 : i32
    return %c0_i32, %c0_i32_0 : i32, i32
  }
  func.func @transform_8(%arg0: i32) -> (i32, i32) {
    %c0_i32 = arith.constant 0 : i32
    %c0_i32_0 = arith.constant 0 : i32
    %c0_i32_1 = arith.constant 0 : i32
    return %c0_i32, %c0_i32_0 : i32, i32
  }
  func.func @transform_9(%arg0: i32) -> (i32, i32) {
    %c0_i32 = arith.constant 0 : i32
    %c0_i32_0 = arith.constant 0 : i32
    %c0_i32_1 = arith.constant 0 : i32
    return %c0_i32, %c0_i32_0 : i32, i32
  }
  func.func @transform_10(%arg0: i32) -> (i32, i32) {
    %c0_i32 = arith.constant 0 : i32
    %c0_i32_0 = arith.constant 0 : i32
    %c0_i32_1 = arith.constant 0 : i32
    return %c0_i32, %c0_i32_0 : i32, i32
  }
  func.func @transform_11(%arg0: i32) -> (i32, i32) {
    %c0_i32 = arith.constant 0 : i32
    %c0_i32_0 = arith.constant 0 : i32
    %c0_i32_1 = arith.constant 0 : i32
    return %c0_i32, %c0_i32_0 : i32, i32
  }
  func.func @transform_12(%arg0: i32) -> (i32, i32) {
    %c0_i32 = arith.constant 0 : i32
    %c0_i32_0 = arith.constant 0 : i32
    return %arg0, %c0_i32 : i32, i32
  }
}

</mosaic_0001>

<llo_original>
// kernel: tpu_custom_call.1
$region0: #{tpu_custom_call.1}
  #allocation0 [shape = 'u32[]', space=smem, size = 0x4, offset = 0x4, fixed_abs, tag = 'smem constant byte address 0x4 - core index']
  #allocation1 [shape = 'u32[72,128]{1,0:T(1,128)}', space=vmem, size = 0x9000, scoped, tag = 'internal scratch']
  %s0 = inlined_call_operand.vmem [shape: f32[8,32,3], index: 0, kind: input, shape index: {}]
  %s1 = inlined_call_operand.vmem [shape: f32[3,128], index: 1, kind: input, shape index: {}]
  %s2 = inlined_call_operand.vmem [shape: f32[1,128], index: 2, kind: input, shape index: {}]
  %s3 = inlined_call_operand.vmem [shape: f32[1,128], index: 3, kind: input, shape index: {}]
  %s4 = inlined_call_operand.vmem [shape: bf16[128,256], index: 4, kind: input, shape index: {}]
  %s5 = inlined_call_operand.vmem [shape: f32[1,256], index: 5, kind: input, shape index: {}]
  %s6 = inlined_call_operand.hbm [shape: bf16[256,512], index: 6, kind: input, shape index: {}]
  %s7 = inlined_call_operand.hbm [shape: bf16[256,512], index: 7, kind: input, shape index: {}]
  %s8 = inlined_call_operand.vmem [shape: f32[1,512], index: 8, kind: input, shape index: {}]
  %s9 = inlined_call_operand.vmem [shape: f32[1,512], index: 9, kind: input, shape index: {}]
  %s10 = inlined_call_operand.hbm [shape: bf16[512,256], index: 10, kind: input, shape index: {}]
  %s11 = inlined_call_operand.vmem [shape: f32[1,256], index: 11, kind: input, shape index: {}]
  %s12 = inlined_call_operand.hbm [shape: f32[8,256], index: 12, kind: output, shape index: {}]
  %s13 = sld [smem:[#allocation0]]
  $region70: #{tpu_custom_call.1} parent=0
    _
  %s15 = ssub.s32 1, %s13
  %s16 = scalar_select 0, %s15, %s13
  $region1: #{tpu_custom_call.1} parent=0
    #allocation2 [shape = 'u8[262144]{0}', space=vmem, size = 0x40000, scoped, tag = 'input window, operand 6, single buffered']
    #allocation3 [shape = 's32[1]{0}', space=sflag, size = 0x4, scoped, tag = 'scoped memory for tpu_custom_call.1']
    #allocation4 [shape = 's32[1]{0}', space=sflag, size = 0x4, scoped, tag = 'scoped memory for tpu_custom_call.1']
    #allocation5 [shape = 'u8[262144]{0}', space=vmem, size = 0x40000, scoped, tag = 'input window, operand 7, single buffered']
    #allocation6 [shape = 's32[1]{0}', space=sflag, size = 0x4, scoped, tag = 'scoped memory for tpu_custom_call.1']
    #allocation7 [shape = 'u8[262144]{0}', space=vmem, size = 0x40000, scoped, tag = 'input window, operand 10, single buffered']
    #allocation8 [shape = 'u8[8192]{0}', space=vmem, size = 0x2000, scoped, tag = 'output window, operand 0, single buffered']
    %17 = vsyncpa [#allocation3], 0
    %18 = vsyncpa [#allocation6], 0
    %19 = vsyncpa [#allocation4], 0
    // Predicated region
    $region2: #{tpu_custom_call.1} parent=1 // pred_check
      _
    $region3: #{tpu_custom_call.1} parent=1 // pred_check_branch
      %21 = sbr.rel (0) target = $region5
    $region4: #{tpu_custom_call.1} parent=1 // pred_region
      _
    $region5: #{tpu_custom_call.1} parent=1 // pred_fallthru
      _
    // Predicated region
    $region6: #{tpu_custom_call.1} parent=1 // pred_check
      _
    $region7: #{tpu_custom_call.1} parent=1 // pred_check_branch
      %23 = sbr.rel (0) target = $region9
    $region8: #{tpu_custom_call.1} parent=1 // pred_region
      _
    $region9: #{tpu_custom_call.1} parent=1 // pred_fallthru
      _
    // Predicated region
    $region10: #{tpu_custom_call.1} parent=1 // pred_check
      _
    $region11: #{tpu_custom_call.1} parent=1 // pred_check_branch
      %25 = sbr.rel (0) target = $region13
    $region12: #{tpu_custom_call.1} parent=1 // pred_region
      _
    $region13: #{tpu_custom_call.1} parent=1 // pred_fallthru
      _
    // Predicated region
    $region14: #{tpu_custom_call.1} parent=1 // pred_check
      _
    $region15: #{tpu_custom_call.1} parent=1 // pred_check_branch
      %27 = sbr.rel (0) target = $region17
    $region16: #{tpu_custom_call.1} parent=1 // pred_region
      _
    $region17: #{tpu_custom_call.1} parent=1 // pred_fallthru
      _
    // Predicated region
    $region18: #{tpu_custom_call.1} parent=1 // pred_check
      _
    $region19: #{tpu_custom_call.1} parent=1 // pred_check_branch
      %29 = sbr.rel (0) target = $region21
    $region20: #{tpu_custom_call.1} parent=1 // pred_region
      _
    $region21: #{tpu_custom_call.1} parent=1 // pred_fallthru
      _
    // Predicated region
    $region22: #{tpu_custom_call.1} parent=1 // pred_check
      _
    $region23: #{tpu_custom_call.1} parent=1 // pred_check_branch
      %31 = sbr.rel (0) target = $region25
    $region24: #{tpu_custom_call.1} parent=1 // pred_region
      _
    $region25: #{tpu_custom_call.1} parent=1 // pred_fallthru
      _
    // Predicated region
    $region26: #{tpu_custom_call.1} parent=1 // pred_check
      _
    $region27: #{tpu_custom_call.1} parent=1 // pred_check_branch
      %33 = sbr.rel (0) target = $region29
    $region28: #{tpu_custom_call.1} parent=1 // pred_region
      %35 = vsyncadd [#allocation3], 0
      %s36 = sshll.u32 %s6, 4
      %s37 = int_to_ptr.hbm [resolvable:$true] %s36
      %s38 = sshll.u32 [#allocation2], 4
      %s39 = int_to_ptr.vmem [resolvable:$true] %s38
      %44 = dma.hbm_to_vmem [thread:$0]  %s37, 8192, %s39, [#allocation3], 256, 256, 16
    $region29: #{tpu_custom_call.1} parent=1 // pred_fallthru
      _
    // Predicated region
    $region30: #{tpu_custom_call.1} parent=1 // pred_check
      _
    $region31: #{tpu_custom_call.1} parent=1 // pred_check_branch
      %46 = sbr.rel (0) target = $region33
    $region32: #{tpu_custom_call.1} parent=1 // pred_region
      %48 = vsyncadd [#allocation6], 0
      %s49 = sshll.u32 %s7, 4
      %s50 = int_to_ptr.hbm [resolvable:$true] %s49
      %s51 = sshll.u32 [#allocation5], 4
      %s52 = int_to_ptr.vmem [resolvable:$true] %s51
      %57 = dma.hbm_to_vmem [thread:$0]  %s50, 8192, %s52, [#allocation6], 256, 256, 16
    $region33: #{tpu_custom_call.1} parent=1 // pred_fallthru
      _
    // Predicated region
    $region34: #{tpu_custom_call.1} parent=1 // pred_check
      _
    $region35: #{tpu_custom_call.1} parent=1 // pred_check_branch
      %59 = sbr.rel (0) target = $region37
    $region36: #{tpu_custom_call.1} parent=1 // pred_region
      _
    $region37: #{tpu_custom_call.1} parent=1 // pred_fallthru
      _
    // Predicated region
    $region38: #{tpu_custom_call.1} parent=1 // pred_check
      _
    $region39: #{tpu_custom_call.1} parent=1 // pred_check_branch
      %61 = sbr.rel (0) target = $region41
    $region40: #{tpu_custom_call.1} parent=1 // pred_region
      _
    $region41: #{tpu_custom_call.1} parent=1 // pred_fallthru
      _
    // Predicated region
    $region42: #{tpu_custom_call.1} parent=1 // pred_check
      _
    $region43: #{tpu_custom_call.1} parent=1 // pred_check_branch
      %63 = sbr.rel (0) target = $region45
    $region44: #{tpu_custom_call.1} parent=1 // pred_region
      %65 = vsyncadd [#allocation6], 0
      %s66 = sshll.u32 %s10, 4
      %s67 = int_to_ptr.hbm [resolvable:$true] %s66
      %s68 = sshll.u32 [#allocation7], 4
      %s69 = int_to_ptr.vmem [resolvable:$true] %s68
      %74 = dma.hbm_to_vmem [thread:$0]  %s67, 8192, %s69, [#allocation6], 128, 128, 8
    $region45: #{tpu_custom_call.1} parent=1 // pred_fallthru
      _
    // Predicated region
    $region46: #{tpu_custom_call.1} parent=1 // pred_check
      _
    $region47: #{tpu_custom_call.1} parent=1 // pred_check_branch
      %76 = sbr.rel (0) target = $region49
    $region48: #{tpu_custom_call.1} parent=1 // pred_region
      _
    $region49: #{tpu_custom_call.1} parent=1 // pred_fallthru
      _
    // Predicated region
    $region50: #{tpu_custom_call.1} parent=1 // pred_check
      _
    $region51: #{tpu_custom_call.1} parent=1 // pred_check_branch
      %78 = sbr.rel (0) target = $region53
    $region52: #{tpu_custom_call.1} parent=1 // pred_region
      %80 = dma.done [#allocation3], 8192
    $region53: #{tpu_custom_call.1} parent=1 // pred_fallthru
      _
    // Predicated region
    $region54: #{tpu_custom_call.1} parent=1 // pred_check
      _
    $region55: #{tpu_custom_call.1} parent=1 // pred_check_branch
      %82 = sbr.rel (0) target = $region57
    $region56: #{tpu_custom_call.1} parent=1 // pred_region
      %84 = dma.done [#allocation6], 8192
    $region57: #{tpu_custom_call.1} parent=1 // pred_fallthru
      _
    // Predicated region
    $region58: #{tpu_custom_call.1} parent=1 // pred_check
      _
    $region59: #{tpu_custom_call.1} parent=1 // pred_check_branch
      %86 = sbr.rel (0) target = $region61
    $region60: #{tpu_custom_call.1} parent=1 // pred_region
      %88 = dma.done [#allocation6], 8192
    $region61: #{tpu_custom_call.1} parent=1 // pred_fallthru
      _
    %v89 = vld [vmem:[%s0] sm:$0xff]
    %v90 = vld [vmem:[%s0 + $0x8] sm:$0xff]
    %v91 = vld [vmem:[%s0 + $0x10] sm:$0xff]
    %v92 = vld [vmem:[%s0 + $0x18] sm:$0xff]
    %v93 = vld [vmem:[%s0 + $0x20] sm:$0xff]
    %v94 = vld [vmem:[%s0 + $0x28] sm:$0xff]
    %v95 = vld [vmem:[%s0 + $0x30] sm:$0xff]
    %v96 = vld [vmem:[%s0 + $0x38] sm:$0xff]
    %v97 = vld [vmem:[%s0 + $0x40] sm:$0xff]
    %v98 = vld [vmem:[%s0 + $0x48] sm:$0xff]
    %v99 = vld [vmem:[%s0 + $0x50] sm:$0xff]
    %v100 = vld [vmem:[%s0 + $0x58] sm:$0xff]
    %v101 = vld [vmem:[%s0 + $0x60] sm:$0xff]
    %v102 = vld [vmem:[%s0 + $0x68] sm:$0xff]
    %v103 = vld [vmem:[%s0 + $0x70] sm:$0xff]
    %v104 = vld [vmem:[%s0 + $0x78] sm:$0xff]
    %v105 = vld [vmem:[%s0 + $0x80] sm:$0xff]
    %v106 = vld [vmem:[%s0 + $0x88] sm:$0xff]
    %v107 = vld [vmem:[%s0 + $0x90] sm:$0xff]
    %v108 = vld [vmem:[%s0 + $0x98] sm:$0xff]
    %v109 = vld [vmem:[%s0 + $0xa0] sm:$0xff]
    %v110 = vld [vmem:[%s0 + $0xa8] sm:$0xff]
    %v111 = vld [vmem:[%s0 + $0xb0] sm:$0xff]
    %v112 = vld [vmem:[%s0 + $0xb8] sm:$0xff]
    %v113 = vld [vmem:[%s0 + $0xc0] sm:$0xff]
    %v114 = vld [vmem:[%s0 + $0xc8] sm:$0xff]
    %v115 = vld [vmem:[%s0 + $0xd0] sm:$0xff]
    %v116 = vld [vmem:[%s0 + $0xd8] sm:$0xff]
    %v117 = vld [vmem:[%s0 + $0xe0] sm:$0xff]
    %v118 = vld [vmem:[%s0 + $0xe8] sm:$0xff]
    %v119 = vld [vmem:[%s0 + $0xf0] sm:$0xff]
    %v120 = vld [vmem:[%s0 + $0xf8] sm:$0xff]
    %v121 = vld [vmem:[%s1] sm:$0x7]
    %123 = vset.pattern.permute.xlu0 0
    %124 = vperm.xlu0 %123, %v89
    %v125 = vpop.permute.xlu0 %124
    %128 = vset.pattern.permute.xlu0 0
    %129 = vperm.xlu0 %128, %v90
    %v130 = vpop.permute.xlu0 %129
    %133 = vset.pattern.permute.xlu0 0
    %134 = vperm.xlu0 %133, %v91
    %v135 = vpop.permute.xlu0 %134
    %138 = vset.pattern.permute.xlu0 0
    %139 = vperm.xlu0 %138, %v92
    %v140 = vpop.permute.xlu0 %139
    %143 = vset.pattern.permute.xlu0 0
    %144 = vperm.xlu0 %143, %v93
    %v145 = vpop.permute.xlu0 %144
    %148 = vset.pattern.permute.xlu0 0
    %149 = vperm.xlu0 %148, %v94
    %v150 = vpop.permute.xlu0 %149
    %153 = vset.pattern.permute.xlu0 0
    %154 = vperm.xlu0 %153, %v95
    %v155 = vpop.permute.xlu0 %154
    %158 = vset.pattern.permute.xlu0 0
    %159 = vperm.xlu0 %158, %v96
    %v160 = vpop.permute.xlu0 %159
    %163 = vset.pattern.permute.xlu0 0
    %164 = vperm.xlu0 %163, %v97
    %v165 = vpop.permute.xlu0 %164
    %168 = vset.pattern.permute.xlu0 0
    %169 = vperm.xlu0 %168, %v98
    %v170 = vpop.permute.xlu0 %169
    %173 = vset.pattern.permute.xlu0 0
    %174 = vperm.xlu0 %173, %v99
    %v175 = vpop.permute.xlu0 %174
    %178 = vset.pattern.permute.xlu0 0
    %179 = vperm.xlu0 %178, %v100
    %v180 = vpop.permute.xlu0 %179
    %183 = vset.pattern.permute.xlu0 0
    %184 = vperm.xlu0 %183, %v101
    %v185 = vpop.permute.xlu0 %184
    %188 = vset.pattern.permute.xlu0 0
    %189 = vperm.xlu0 %188, %v102
    %v190 = vpop.permute.xlu0 %189
    %193 = vset.pattern.permute.xlu0 0
    %194 = vperm.xlu0 %193, %v103
    %v195 = vpop.permute.xlu0 %194
    %198 = vset.pattern.permute.xlu0 0
    %199 = vperm.xlu0 %198, %v104
    %v200 = vpop.permute.xlu0 %199
    %203 = vset.pattern.permute.xlu0 0
    %204 = vperm.xlu0 %203, %v105
    %v205 = vpop.permute.xlu0 %204
    %208 = vset.pattern.permute.xlu0 0
    %209 = vperm.xlu0 %208, %v106
    %v210 = vpop.permute.xlu0 %209
    %213 = vset.pattern.permute.xlu0 0
    %214 = vperm.xlu0 %213, %v107
    %v215 = vpop.permute.xlu0 %214
    %218 = vset.pattern.permute.xlu0 0
    %219 = vperm.xlu0 %218, %v108
    %v220 = vpop.permute.xlu0 %219
    %223 = vset.pattern.permute.xlu0 0
    %224 = vperm.xlu0 %223, %v109
    %v225 = vpop.permute.xlu0 %224
    %228 = vset.pattern.permute.xlu0 0
    %229 = vperm.xlu0 %228, %v110
    %v230 = vpop.permute.xlu0 %229
    %233 = vset.pattern.permute.xlu0 0
    %234 = vperm.xlu0 %233, %v111
    %v235 = vpop.permute.xlu0 %234
    %238 = vset.pattern.permute.xlu0 0
    %239 = vperm.xlu0 %238, %v112
    %v240 = vpop.permute.xlu0 %239
    %243 = vset.pattern.permute.xlu0 0
    %244 = vperm.xlu0 %243, %v113
    %v245 = vpop.permute.xlu0 %244
    %248 = vset.pattern.permute.xlu0 0
    %249 = vperm.xlu0 %248, %v114
    %v250 = vpop.permute.xlu0 %249
    %253 = vset.pattern.permute.xlu0 0
    %254 = vperm.xlu0 %253, %v115
    %v255 = vpop.permute.xlu0 %254
    %258 = vset.pattern.permute.xlu0 0
    %259 = vperm.xlu0 %258, %v116
    %v260 = vpop.permute.xlu0 %259
    %263 = vset.pattern.permute.xlu0 0
    %264 = vperm.xlu0 %263, %v117
    %v265 = vpop.permute.xlu0 %264
    %268 = vset.pattern.permute.xlu0 0
    %269 = vperm.xlu0 %268, %v118
    %v270 = vpop.permute.xlu0 %269
    %273 = vset.pattern.permute.xlu0 0
    %274 = vperm.xlu0 %273, %v119
    %v275 = vpop.permute.xlu0 %274
    %278 = vset.pattern.permute.xlu0 0
    %279 = vperm.xlu0 %278, %v120
    %v280 = vpop.permute.xlu0 %279
    %v282 = vperm.slane %v121, 0
    %v283 = vmul.f32 %v125, %v282
    %v284 = vmul.f32 %v130, %v282
    %v285 = vmul.f32 %v135, %v282
    %v286 = vmul.f32 %v140, %v282
    %v287 = vmul.f32 %v145, %v282
    %v288 = vmul.f32 %v150, %v282
    %v289 = vmul.f32 %v155, %v282
    %v290 = vmul.f32 %v160, %v282
    %v291 = vmul.f32 %v165, %v282
    %v292 = vmul.f32 %v170, %v282
    %v293 = vmul.f32 %v175, %v282
    %v294 = vmul.f32 %v180, %v282
    %v295 = vmul.f32 %v185, %v282
    %v296 = vmul.f32 %v190, %v282
    %v297 = vmul.f32 %v195, %v282
    %v298 = vmul.f32 %v200, %v282
    %v299 = vmul.f32 %v205, %v282
    %v300 = vmul.f32 %v210, %v282
    %v301 = vmul.f32 %v215, %v282
    %v302 = vmul.f32 %v220, %v282
    %v303 = vmul.f32 %v225, %v282
    %v304 = vmul.f32 %v230, %v282
    %v305 = vmul.f32 %v235, %v282
    %v306 = vmul.f32 %v240, %v282
    %v307 = vmul.f32 %v245, %v282
    %v308 = vmul.f32 %v250, %v282
    %v309 = vmul.f32 %v255, %v282
    %v310 = vmul.f32 %v260, %v282
    %v311 = vmul.f32 %v265, %v282
    %v312 = vmul.f32 %v270, %v282
    %v313 = vmul.f32 %v275, %v282
    %v314 = vmul.f32 %v280, %v282
    %315 = vset.pattern.permute.xlu0 1
    %316 = vperm.xlu0 %315, %v89
    %v317 = vpop.permute.xlu0 %316
    %319 = vset.pattern.permute.xlu0 1
    %320 = vperm.xlu0 %319, %v90
    %v321 = vpop.permute.xlu0 %320
    %323 = vset.pattern.permute.xlu0 1
    %324 = vperm.xlu0 %323, %v91
    %v325 = vpop.permute.xlu0 %324
    %327 = vset.pattern.permute.xlu0 1
    %328 = vperm.xlu0 %327, %v92
    %v329 = vpop.permute.xlu0 %328
    %331 = vset.pattern.permute.xlu0 1
    %332 = vperm.xlu0 %331, %v93
    %v333 = vpop.permute.xlu0 %332
    %335 = vset.pattern.permute.xlu0 1
    %336 = vperm.xlu0 %335, %v94
    %v337 = vpop.permute.xlu0 %336
    %339 = vset.pattern.permute.xlu0 1
    %340 = vperm.xlu0 %339, %v95
    %v341 = vpop.permute.xlu0 %340
    %343 = vset.pattern.permute.xlu0 1
    %344 = vperm.xlu0 %343, %v96
    %v345 = vpop.permute.xlu0 %344
    %347 = vset.pattern.permute.xlu0 1
    %348 = vperm.xlu0 %347, %v97
    %v349 = vpop.permute.xlu0 %348
    %351 = vset.pattern.permute.xlu0 1
    %352 = vperm.xlu0 %351, %v98
    %v353 = vpop.permute.xlu0 %352
    %355 = vset.pattern.permute.xlu0 1
    %356 = vperm.xlu0 %355, %v99
    %v357 = vpop.permute.xlu0 %356
    %359 = vset.pattern.permute.xlu0 1
    %360 = vperm.xlu0 %359, %v100
    %v361 = vpop.permute.xlu0 %360
    %363 = vset.pattern.permute.xlu0 1
    %364 = vperm.xlu0 %363, %v101
    %v365 = vpop.permute.xlu0 %364
    %367 = vset.pattern.permute.xlu0 1
    %368 = vperm.xlu0 %367, %v102
    %v369 = vpop.permute.xlu0 %368
    %371 = vset.pattern.permute.xlu0 1
    %372 = vperm.xlu0 %371, %v103
    %v373 = vpop.permute.xlu0 %372
    %375 = vset.pattern.permute.xlu0 1
    %376 = vperm.xlu0 %375, %v104
    %v377 = vpop.permute.xlu0 %376
    %379 = vset.pattern.permute.xlu0 1
    %380 = vperm.xlu0 %379, %v105
    %v381 = vpop.permute.xlu0 %380
    %383 = vset.pattern.permute.xlu0 1
    %384 = vperm.xlu0 %383, %v106
    %v385 = vpop.permute.xlu0 %384
    %387 = vset.pattern.permute.xlu0 1
    %388 = vperm.xlu0 %387, %v107
    %v389 = vpop.permute.xlu0 %388
    %391 = vset.pattern.permute.xlu0 1
    %392 = vperm.xlu0 %391, %v108
    %v393 = vpop.permute.xlu0 %392
    %395 = vset.pattern.permute.xlu0 1
    %396 = vperm.xlu0 %395, %v109
    %v397 = vpop.permute.xlu0 %396
    %399 = vset.pattern.permute.xlu0 1
    %400 = vperm.xlu0 %399, %v110
    %v401 = vpop.permute.xlu0 %400
    %403 = vset.pattern.permute.xlu0 1
    %404 = vperm.xlu0 %403, %v111
    %v405 = vpop.permute.xlu0 %404
    %407 = vset.pattern.permute.xlu0 1
    %408 = vperm.xlu0 %407, %v112
    %v409 = vpop.permute.xlu0 %408
    %411 = vset.pattern.permute.xlu0 1
    %412 = vperm.xlu0 %411, %v113
    %v413 = vpop.permute.xlu0 %412
    %415 = vset.pattern.permute.xlu0 1
    %416 = vperm.xlu0 %415, %v114
    %v417 = vpop.permute.xlu0 %416
    %419 = vset.pattern.permute.xlu0 1
    %420 = vperm.xlu0 %419, %v115
    %v421 = vpop.permute.xlu0 %420
    %423 = vset.pattern.permute.xlu0 1
    %424 = vperm.xlu0 %423, %v116
    %v425 = vpop.permute.xlu0 %424
    %427 = vset.pattern.permute.xlu0 1
    %428 = vperm.xlu0 %427, %v117
    %v429 = vpop.permute.xlu0 %428
    %431 = vset.pattern.permute.xlu0 1
    %432 = vperm.xlu0 %431, %v118
    %v433 = vpop.permute.xlu0 %432
    %435 = vset.pattern.permute.xlu0 1
    %436 = vperm.xlu0 %435, %v119
    %v437 = vpop.permute.xlu0 %436
    %439 = vset.pattern.permute.xlu0 1
    %440 = vperm.xlu0 %439, %v120
    %v441 = vpop.permute.xlu0 %440
    %v443 = vperm.slane %v121, 1
    %v444 = vmul.f32 %v317, %v443
    %v445 = vmul.f32 %v321, %v443
    %v446 = vmul.f32 %v325, %v443
    %v447 = vmul.f32 %v329, %v443
    %v448 = vmul.f32 %v333, %v443
    %v449 = vmul.f32 %v337, %v443
    %v450 = vmul.f32 %v341, %v443
    %v451 = vmul.f32 %v345, %v443
    %v452 = vmul.f32 %v349, %v443
    %v453 = vmul.f32 %v353, %v443
    %v454 = vmul.f32 %v357, %v443
    %v455 = vmul.f32 %v361, %v443
    %v456 = vmul.f32 %v365, %v443
    %v457 = vmul.f32 %v369, %v443
    %v458 = vmul.f32 %v373, %v443
    %v459 = vmul.f32 %v377, %v443
    %v460 = vmul.f32 %v381, %v443
    %v461 = vmul.f32 %v385, %v443
    %v462 = vmul.f32 %v389, %v443
    %v463 = vmul.f32 %v393, %v443
    %v464 = vmul.f32 %v397, %v443
    %v465 = vmul.f32 %v401, %v443
    %v466 = vmul.f32 %v405, %v443
    %v467 = vmul.f32 %v409, %v443
    %v468 = vmul.f32 %v413, %v443
    %v469 = vmul.f32 %v417, %v443
    %v470 = vmul.f32 %v421, %v443
    %v471 = vmul.f32 %v425, %v443
    %v472 = vmul.f32 %v429, %v443
    %v473 = vmul.f32 %v433, %v443
    %v474 = vmul.f32 %v437, %v443
    %v475 = vmul.f32 %v441, %v443
    %v476 = vadd.f32 %v283, %v444
    %v477 = vadd.f32 %v284, %v445
    %v478 = vadd.f32 %v285, %v446
    %v479 = vadd.f32 %v286, %v447
    %v480 = vadd.f32 %v287, %v448
    %v481 = vadd.f32 %v288, %v449
    %v482 = vadd.f32 %v289, %v450
    %v483 = vadd.f32 %v290, %v451
    %v484 = vadd.f32 %v291, %v452
    %v485 = vadd.f32 %v292, %v453
    %v486 = vadd.f32 %v293, %v454
    %v487 = vadd.f32 %v294, %v455
    %v488 = vadd.f32 %v295, %v456
    %v489 = vadd.f32 %v296, %v457
    %v490 = vadd.f32 %v297, %v458
    %v491 = vadd.f32 %v298, %v459
    %v492 = vadd.f32 %v299, %v460
    %v493 = vadd.f32 %v300, %v461
    %v494 = vadd.f32 %v301, %v462
    %v495 = vadd.f32 %v302, %v463
    %v496 = vadd.f32 %v303, %v464
    %v497 = vadd.f32 %v304, %v465
    %v498 = vadd.f32 %v305, %v466
    %v499 = vadd.f32 %v306, %v467
    %v500 = vadd.f32 %v307, %v468
    %v501 = vadd.f32 %v308, %v469
    %v502 = vadd.f32 %v309, %v470
    %v503 = vadd.f32 %v310, %v471
    %v504 = vadd.f32 %v311, %v472
    %v505 = vadd.f32 %v312, %v473
    %v506 = vadd.f32 %v313, %v474
    %v507 = vadd.f32 %v314, %v475
    %508 = vset.pattern.permute.xlu0 2
    %509 = vperm.xlu0 %508, %v89
    %v510 = vpop.permute.xlu0 %509
    %512 = vset.pattern.permute.xlu0 2
    %513 = vperm.xlu0 %512, %v90
    %v514 = vpop.permute.xlu0 %513
    %516 = vset.pattern.permute.xlu0 2
    %517 = vperm.xlu0 %516, %v91
    %v518 = vpop.permute.xlu0 %517
    %520 = vset.pattern.permute.xlu0 2
    %521 = vperm.xlu0 %520, %v92
    %v522 = vpop.permute.xlu0 %521
    %524 = vset.pattern.permute.xlu0 2
    %525 = vperm.xlu0 %524, %v93
    %v526 = vpop.permute.xlu0 %525
    %528 = vset.pattern.permute.xlu0 2
    %529 = vperm.xlu0 %528, %v94
    %v530 = vpop.permute.xlu0 %529
    %532 = vset.pattern.permute.xlu0 2
    %533 = vperm.xlu0 %532, %v95
    %v534 = vpop.permute.xlu0 %533
    %536 = vset.pattern.permute.xlu0 2
    %537 = vperm.xlu0 %536, %v96
    %v538 = vpop.permute.xlu0 %537
    %540 = vset.pattern.permute.xlu0 2
    %541 = vperm.xlu0 %540, %v97
    %v542 = vpop.permute.xlu0 %541
    %544 = vset.pattern.permute.xlu0 2
    %545 = vperm.xlu0 %544, %v98
    %v546 = vpop.permute.xlu0 %545
    %548 = vset.pattern.permute.xlu0 2
    %549 = vperm.xlu0 %548, %v99
    %v550 = vpop.permute.xlu0 %549
    %552 = vset.pattern.permute.xlu0 2
    %553 = vperm.xlu0 %552, %v100
    %v554 = vpop.permute.xlu0 %553
    %556 = vset.pattern.permute.xlu0 2
    %557 = vperm.xlu0 %556, %v101
    %v558 = vpop.permute.xlu0 %557
    %560 = vset.pattern.permute.xlu0 2
    %561 = vperm.xlu0 %560, %v102
    %v562 = vpop.permute.xlu0 %561
    %564 = vset.pattern.permute.xlu0 2
    %565 = vperm.xlu0 %564, %v103
    %v566 = vpop.permute.xlu0 %565
    %568 = vset.pattern.permute.xlu0 2
    %569 = vperm.xlu0 %568, %v104
    %v570 = vpop.permute.xlu0 %569
    %572 = vset.pattern.permute.xlu0 2
    %573 = vperm.xlu0 %572, %v105
    %v574 = vpop.permute.xlu0 %573
    %576 = vset.pattern.permute.xlu0 2
    %577 = vperm.xlu0 %576, %v106
    %v578 = vpop.permute.xlu0 %577
    %580 = vset.pattern.permute.xlu0 2
    %581 = vperm.xlu0 %580, %v107
    %v582 = vpop.permute.xlu0 %581
    %584 = vset.pattern.permute.xlu0 2
    %585 = vperm.xlu0 %584, %v108
    %v586 = vpop.permute.xlu0 %585
    %588 = vset.pattern.permute.xlu0 2
    %589 = vperm.xlu0 %588, %v109
    %v590 = vpop.permute.xlu0 %589
    %592 = vset.pattern.permute.xlu0 2
    %593 = vperm.xlu0 %592, %v110
    %v594 = vpop.permute.xlu0 %593
    %596 = vset.pattern.permute.xlu0 2
    %597 = vperm.xlu0 %596, %v111
    %v598 = vpop.permute.xlu0 %597
    %600 = vset.pattern.permute.xlu0 2
    %601 = vperm.xlu0 %600, %v112
    %v602 = vpop.permute.xlu0 %601
    %604 = vset.pattern.permute.xlu0 2
    %605 = vperm.xlu0 %604, %v113
    %v606 = vpop.permute.xlu0 %605
    %608 = vset.pattern.permute.xlu0 2
    %609 = vperm.xlu0 %608, %v114
    %v610 = vpop.permute.xlu0 %609
    %612 = vset.pattern.permute.xlu0 2
    %613 = vperm.xlu0 %612, %v115
    %v614 = vpop.permute.xlu0 %613
    %616 = vset.pattern.permute.xlu0 2
    %617 = vperm.xlu0 %616, %v116
    %v618 = vpop.permute.xlu0 %617
    %620 = vset.pattern.permute.xlu0 2
    %621 = vperm.xlu0 %620, %v117
    %v622 = vpop.permute.xlu0 %621
    %624 = vset.pattern.permute.xlu0 2
    %625 = vperm.xlu0 %624, %v118
    %v626 = vpop.permute.xlu0 %625
    %628 = vset.pattern.permute.xlu0 2
    %629 = vperm.xlu0 %628, %v119
    %v630 = vpop.permute.xlu0 %629
    %632 = vset.pattern.permute.xlu0 2
    %633 = vperm.xlu0 %632, %v120
    %v634 = vpop.permute.xlu0 %633
    %v636 = vperm.slane %v121, 2
    %v637 = vmul.f32 %v510, %v636
    %v638 = vmul.f32 %v514, %v636
    %v639 = vmul.f32 %v518, %v636
    %v640 = vmul.f32 %v522, %v636
    %v641 = vmul.f32 %v526, %v636
    %v642 = vmul.f32 %v530, %v636
    %v643 = vmul.f32 %v534, %v636
    %v644 = vmul.f32 %v538, %v636
    %v645 = vmul.f32 %v542, %v636
    %v646 = vmul.f32 %v546, %v636
    %v647 = vmul.f32 %v550, %v636
    %v648 = vmul.f32 %v554, %v636
    %v649 = vmul.f32 %v558, %v636
    %v650 = vmul.f32 %v562, %v636
    %v651 = vmul.f32 %v566, %v636
    %v652 = vmul.f32 %v570, %v636
    %v653 = vmul.f32 %v574, %v636
    %v654 = vmul.f32 %v578, %v636
    %v655 = vmul.f32 %v582, %v636
    %v656 = vmul.f32 %v586, %v636
    %v657 = vmul.f32 %v590, %v636
    %v658 = vmul.f32 %v594, %v636
    %v659 = vmul.f32 %v598, %v636
    %v660 = vmul.f32 %v602, %v636
    %v661 = vmul.f32 %v606, %v636
    %v662 = vmul.f32 %v610, %v636
    %v663 = vmul.f32 %v614, %v636
    %v664 = vmul.f32 %v618, %v636
    %v665 = vmul.f32 %v622, %v636
    %v666 = vmul.f32 %v626, %v636
    %v667 = vmul.f32 %v630, %v636
    %v668 = vmul.f32 %v634, %v636
    %v669 = vadd.f32 %v476, %v637
    %v670 = vadd.f32 %v477, %v638
    %v671 = vadd.f32 %v478, %v639
    %v672 = vadd.f32 %v479, %v640
    %v673 = vadd.f32 %v480, %v641
    %v674 = vadd.f32 %v481, %v642
    %v675 = vadd.f32 %v482, %v643
    %v676 = vadd.f32 %v483, %v644
    %v677 = vadd.f32 %v484, %v645
    %v678 = vadd.f32 %v485, %v646
    %v679 = vadd.f32 %v486, %v647
    %v680 = vadd.f32 %v487, %v648
    %v681 = vadd.f32 %v488, %v649
    %v682 = vadd.f32 %v489, %v650
    %v683 = vadd.f32 %v490, %v651
    %v684 = vadd.f32 %v491, %v652
    %v685 = vadd.f32 %v492, %v653
    %v686 = vadd.f32 %v493, %v654
    %v687 = vadd.f32 %v494, %v655
    %v688 = vadd.f32 %v495, %v656
    %v689 = vadd.f32 %v496, %v657
    %v690 = vadd.f32 %v497, %v658
    %v691 = vadd.f32 %v498, %v659
    %v692 = vadd.f32 %v499, %v660
    %v693 = vadd.f32 %v500, %v661
    %v694 = vadd.f32 %v501, %v662
    %v695 = vadd.f32 %v502, %v663
    %v696 = vadd.f32 %v503, %v664
    %v697 = vadd.f32 %v504, %v665
    %v698 = vadd.f32 %v505, %v666
    %v699 = vadd.f32 %v506, %v667
    %v700 = vadd.f32 %v507, %v668
    %v701 = vld [vmem:[%s2] sm:$0x1]
    %v703 = vperm.slane %v701, 0
    %v705 = vmul.f32 %v669, %v703
    %v706 = vmul.f32 %v670, %v703
    %v707 = vmul.f32 %v671, %v703
    %v708 = vmul.f32 %v672, %v703
    %v709 = vmul.f32 %v673, %v703
    %v710 = vmul.f32 %v674, %v703
    %v711 = vmul.f32 %v675, %v703
    %v712 = vmul.f32 %v676, %v703
    %v713 = vmul.f32 %v677, %v703
    %v714 = vmul.f32 %v678, %v703
    %v715 = vmul.f32 %v679, %v703
    %v716 = vmul.f32 %v680, %v703
    %v717 = vmul.f32 %v681, %v703
    %v718 = vmul.f32 %v682, %v703
    %v719 = vmul.f32 %v683, %v703
    %v720 = vmul.f32 %v684, %v703
    %v721 = vmul.f32 %v685, %v703
    %v722 = vmul.f32 %v686, %v703
    %v723 = vmul.f32 %v687, %v703
    %v724 = vmul.f32 %v688, %v703
    %v725 = vmul.f32 %v689, %v703
    %v726 = vmul.f32 %v690, %v703
    %v727 = vmul.f32 %v691, %v703
    %v728 = vmul.f32 %v692, %v703
    %v729 = vmul.f32 %v693, %v703
    %v730 = vmul.f32 %v694, %v703
    %v731 = vmul.f32 %v695, %v703
    %v732 = vmul.f32 %v696, %v703
    %v733 = vmul.f32 %v697, %v703
    %v734 = vmul.f32 %v698, %v703
    %v735 = vmul.f32 %v699, %v703
    %v736 = vmul.f32 %v700, %v703
    %v737 = vld [vmem:[%s3] sm:$0x1]
    %v739 = vperm.slane %v737, 0
    %v741 = vadd.f32 %v705, %v739
    %v742 = vadd.f32 %v706, %v739
    %v743 = vadd.f32 %v707, %v739
    %v744 = vadd.f32 %v708, %v739
    %v745 = vadd.f32 %v709, %v739
    %v746 = vadd.f32 %v710, %v739
    %v747 = vadd.f32 %v711, %v739
    %v748 = vadd.f32 %v712, %v739
    %v749 = vadd.f32 %v713, %v739
    %v750 = vadd.f32 %v714, %v739
    %v751 = vadd.f32 %v715, %v739
    %v752 = vadd.f32 %v716, %v739
    %v753 = vadd.f32 %v717, %v739
    %v754 = vadd.f32 %v718, %v739
    %v755 = vadd.f32 %v719, %v739
    %v756 = vadd.f32 %v720, %v739
    %v757 = vadd.f32 %v721, %v739
    %v758 = vadd.f32 %v722, %v739
    %v759 = vadd.f32 %v723, %v739
    %v760 = vadd.f32 %v724, %v739
    %v761 = vadd.f32 %v725, %v739
    %v762 = vadd.f32 %v726, %v739
    %v763 = vadd.f32 %v727, %v739
    %v764 = vadd.f32 %v728, %v739
    %v765 = vadd.f32 %v729, %v739
    %v766 = vadd.f32 %v730, %v739
    %v767 = vadd.f32 %v731, %v739
    %v768 = vadd.f32 %v732, %v739
    %v769 = vadd.f32 %v733, %v739
    %v770 = vadd.f32 %v734, %v739
    %v771 = vadd.f32 %v735, %v739
    %v772 = vadd.f32 %v736, %v739
    %v773 = vmax.f32 %v741, 0.0
    %v774 = vmax.f32 %v742, 0.0
    %v775 = vmax.f32 %v743, 0.0
    %v776 = vmax.f32 %v744, 0.0
    %v777 = vmax.f32 %v745, 0.0
    %v778 = vmax.f32 %v746, 0.0
    %v779 = vmax.f32 %v747, 0.0
    %v780 = vmax.f32 %v748, 0.0
    %v781 = vmax.f32 %v749, 0.0
    %v782 = vmax.f32 %v750, 0.0
    %v783 = vmax.f32 %v751, 0.0
    %v784 = vmax.f32 %v752, 0.0
    %v785 = vmax.f32 %v753, 0.0
    %v786 = vmax.f32 %v754, 0.0
    %v787 = vmax.f32 %v755, 0.0
    %v788 = vmax.f32 %v756, 0.0
    %v789 = vmax.f32 %v757, 0.0
    %v790 = vmax.f32 %v758, 0.0
    %v791 = vmax.f32 %v759, 0.0
    %v792 = vmax.f32 %v760, 0.0
    %v793 = vmax.f32 %v761, 0.0
    %v794 = vmax.f32 %v762, 0.0
    %v795 = vmax.f32 %v763, 0.0
    %v796 = vmax.f32 %v764, 0.0
    %v797 = vmax.f32 %v765, 0.0
    %v798 = vmax.f32 %v766, 0.0
    %v799 = vmax.f32 %v767, 0.0
    %v800 = vmax.f32 %v768, 0.0
    %v801 = vmax.f32 %v769, 0.0
    %v802 = vmax.f32 %v770, 0.0
    %v803 = vmax.f32 %v771, 0.0
    %v804 = vmax.f32 %v772, 0.0
    %v805 = vpack.c.bf16 %v774, %v773
    %v806 = vpack.c.bf16 %v776, %v775
    %v807 = vpack.c.bf16 %v778, %v777
    %v808 = vpack.c.bf16 %v780, %v779
    %v809 = vpack.c.bf16 %v782, %v781
    %v810 = vpack.c.bf16 %v784, %v783
    %v811 = vpack.c.bf16 %v786, %v785
    %v812 = vpack.c.bf16 %v788, %v787
    %v813 = vpack.c.bf16 %v790, %v789
    %v814 = vpack.c.bf16 %v792, %v791
    %v815 = vpack.c.bf16 %v794, %v793
    %v816 = vpack.c.bf16 %v796, %v795
    %v817 = vpack.c.bf16 %v798, %v797
    %v818 = vpack.c.bf16 %v800, %v799
    %v819 = vpack.c.bf16 %v802, %v801
    %v820 = vpack.c.bf16 %v804, %v803
    %v821 = vld [vmem:[%s4] sm:$0xff]
    %v822 = vld [vmem:[%s4 + $0x8] sm:$0xff]
    %v823 = vld [vmem:[%s4 + $0x10] sm:$0xff]
    %v824 = vld [vmem:[%s4 + $0x18] sm:$0xff]
    %v825 = vld [vmem:[%s4 + $0x20] sm:$0xff]
    %v826 = vld [vmem:[%s4 + $0x28] sm:$0xff]
    %v827 = vld [vmem:[%s4 + $0x30] sm:$0xff]
    %v828 = vld [vmem:[%s4 + $0x38] sm:$0xff]
    %v829 = vld [vmem:[%s4 + $0x40] sm:$0xff]
    %v830 = vld [vmem:[%s4 + $0x48] sm:$0xff]
    %v831 = vld [vmem:[%s4 + $0x50] sm:$0xff]
    %v832 = vld [vmem:[%s4 + $0x58] sm:$0xff]
    %v833 = vld [vmem:[%s4 + $0x60] sm:$0xff]
    %v834 = vld [vmem:[%s4 + $0x68] sm:$0xff]
    %v835 = vld [vmem:[%s4 + $0x70] sm:$0xff]
    %v836 = vld [vmem:[%s4 + $0x78] sm:$0xff]
    %v837 = vld [vmem:[%s5] sm:$0x3]
    %v839 = vperm.slane %v837, 0
    %v840 = vperm.slane %v837, 1
    %v859 = vunpack.c.l.b16 %v821
    %v860 = vunpack.c.h.b16 %v821
    %v861 = vunpack.c.l.b16 %v822
    %v862 = vunpack.c.h.b16 %v822
    %v863 = vunpack.c.l.b16 %v823
    %v864 = vunpack.c.h.b16 %v823
    %v865 = vunpack.c.l.b16 %v824
    %v866 = vunpack.c.h.b16 %v824
    %v867 = vunpack.c.l.b16 %v825
    %v868 = vunpack.c.h.b16 %v825
    %v869 = vunpack.c.l.b16 %v826
    %v870 = vunpack.c.h.b16 %v826
    %v871 = vunpack.c.l.b16 %v827
    %v872 = vunpack.c.h.b16 %v827
    %v873 = vunpack.c.l.b16 %v828
    %v874 = vunpack.c.h.b16 %v828
    %v875 = vunpack.c.l.b16 %v829
    %v876 = vunpack.c.h.b16 %v829
    %v877 = vunpack.c.l.b16 %v830
    %v878 = vunpack.c.h.b16 %v830
    %v879 = vunpack.c.l.b16 %v831
    %v880 = vunpack.c.h.b16 %v831
    %v881 = vunpack.c.l.b16 %v832
    %v882 = vunpack.c.h.b16 %v832
    %v883 = vunpack.c.l.b16 %v833
    %v884 = vunpack.c.h.b16 %v833
    %v885 = vunpack.c.l.b16 %v834
    %v886 = vunpack.c.h.b16 %v834
    %v887 = vunpack.c.l.b16 %v835
    %v888 = vunpack.c.h.b16 %v835
    %v889 = vunpack.c.l.b16 %v836
    %v890 = vunpack.c.h.b16 %v836
    %v891 = vpack.c.b16 %v861, %v859
    %v892 = vpack.c.b16 %v862, %v860
    %v893 = vpack.c.b16 %v865, %v863
    %v894 = vpack.c.b16 %v866, %v864
    %v895 = vpack.c.b16 %v869, %v867
    %v896 = vpack.c.b16 %v870, %v868
    %v897 = vpack.c.b16 %v873, %v871
    %v898 = vpack.c.b16 %v874, %v872
    %v899 = vpack.c.b16 %v877, %v875
    %v900 = vpack.c.b16 %v878, %v876
    %v901 = vpack.c.b16 %v881, %v879
    %v902 = vpack.c.b16 %v882, %v880
    %v903 = vpack.c.b16 %v885, %v883
    %v904 = vpack.c.b16 %v886, %v884
    %v905 = vpack.c.b16 %v889, %v887
    %v906 = vpack.c.b16 %v890, %v888
    %923 = vmatpush.bf16.msra.mxu0 %v905
    %924 = vmatpush.bf16.msra.mxu0 %v903
    %925 = vmatpush.bf16.msra.mxu0 %v901
    %926 = vmatpush.bf16.msra.mxu0 %v899
    %927 = vmatpush.bf16.msra.mxu0 %v897
    %928 = vmatpush.bf16.msra.mxu0 %v895
    %929 = vmatpush.bf16.msra.mxu0 %v893
    %930 = vmatpush.bf16.msra.mxu0 %v891
    %931 = vmatmul.bf16.gmra.mxu0 %v805
    %v932 = vpop.f32.mrf.mxu0
    %v933 = vadd.f32 %v839, %v932
    %v934 = vpop.f32.mrf.mxu0
    %v935 = vadd.f32 %v839, %v934
    %936 = vmatmul.bf16.gmra.mxu0 %v806
    %v937 = vpop.f32.mrf.mxu0
    %v938 = vadd.f32 %v839, %v937
    %v939 = vpop.f32.mrf.mxu0
    %v940 = vadd.f32 %v839, %v939
    %941 = vmatmul.bf16.gmra.mxu0 %v807
    %v942 = vpop.f32.mrf.mxu0
    %v943 = vadd.f32 %v839, %v942
    %v944 = vpop.f32.mrf.mxu0
    %v945 = vadd.f32 %v839, %v944
    %946 = vmatmul.bf16.gmra.mxu0 %v808
    %v947 = vpop.f32.mrf.mxu0
    %v948 = vadd.f32 %v839, %v947
    %v949 = vpop.f32.mrf.mxu0
    %v950 = vadd.f32 %v839, %v949
    %951 = vmatmul.bf16.gmra.mxu0 %v809
    %v952 = vpop.f32.mrf.mxu0
    %v953 = vadd.f32 %v839, %v952
    %v954 = vpop.f32.mrf.mxu0
    %v955 = vadd.f32 %v839, %v954
    %956 = vmatmul.bf16.gmra.mxu0 %v810
    %v957 = vpop.f32.mrf.mxu0
    %v958 = vadd.f32 %v839, %v957
    %v959 = vpop.f32.mrf.mxu0
    %v960 = vadd.f32 %v839, %v959
    %961 = vmatmul.bf16.gmra.mxu0 %v811
    %v962 = vpop.f32.mrf.mxu0
    %v963 = vadd.f32 %v839, %v962
    %v964 = vpop.f32.mrf.mxu0
    %v965 = vadd.f32 %v839, %v964
    %966 = vmatmul.bf16.gmra.mxu0 %v812
    %v967 = vpop.f32.mrf.mxu0
    %v968 = vadd.f32 %v839, %v967
    %v969 = vpop.f32.mrf.mxu0
    %v970 = vadd.f32 %v839, %v969
    %971 = vmatmul.bf16.gmra.mxu0 %v813
    %v972 = vpop.f32.mrf.mxu0
    %v973 = vadd.f32 %v839, %v972
    %v974 = vpop.f32.mrf.mxu0
    %v975 = vadd.f32 %v839, %v974
    %976 = vmatmul.bf16.gmra.mxu0 %v814
    %v977 = vpop.f32.mrf.mxu0
    %v978 = vadd.f32 %v839, %v977
    %v979 = vpop.f32.mrf.mxu0
    %v980 = vadd.f32 %v839, %v979
    %981 = vmatmul.bf16.gmra.mxu0 %v815
    %v982 = vpop.f32.mrf.mxu0
    %v983 = vadd.f32 %v839, %v982
    %v984 = vpop.f32.mrf.mxu0
    %v985 = vadd.f32 %v839, %v984
    %986 = vmatmul.bf16.gmra.mxu0 %v816
    %v987 = vpop.f32.mrf.mxu0
    %v988 = vadd.f32 %v839, %v987
    %v989 = vpop.f32.mrf.mxu0
    %v990 = vadd.f32 %v839, %v989
    %991 = vmatmul.bf16.gmra.mxu0 %v817
    %v992 = vpop.f32.mrf.mxu0
    %v993 = vadd.f32 %v839, %v992
    %v994 = vpop.f32.mrf.mxu0
    %v995 = vadd.f32 %v839, %v994
    %996 = vmatmul.bf16.gmra.mxu0 %v818
    %v997 = vpop.f32.mrf.mxu0
    %v998 = vadd.f32 %v839, %v997
    %v999 = vpop.f32.mrf.mxu0
    %v1000 = vadd.f32 %v839, %v999
    %1001 = vmatmul.bf16.gmra.mxu0 %v819
    %v1002 = vpop.f32.mrf.mxu0
    %v1003 = vadd.f32 %v839, %v1002
    %v1004 = vpop.f32.mrf.mxu0
    %v1005 = vadd.f32 %v839, %v1004
    %1006 = vmatmul.bf16.gmra.mxu0 %v820
    %v1007 = vpop.f32.mrf.mxu0
    %v1008 = vadd.f32 %v839, %v1007
    %v1009 = vpop.f32.mrf.mxu0
    %v1010 = vadd.f32 %v839, %v1009
    %1011 = vdwg.mxu0
    %1012 = vmatpush.bf16.msra.mxu0 %v906
    %1013 = vmatpush.bf16.msra.mxu0 %v904
    %1014 = vmatpush.bf16.msra.mxu0 %v902
    %1015 = vmatpush.bf16.msra.mxu0 %v900
    %1016 = vmatpush.bf16.msra.mxu0 %v898
    %1017 = vmatpush.bf16.msra.mxu0 %v896
    %1018 = vmatpush.bf16.msra.mxu0 %v894
    %1019 = vmatpush.bf16.msra.mxu0 %v892
    %1020 = vmatmul.bf16.gmra.mxu0 %v805
    %v1021 = vpop.f32.mrf.mxu0
    %v1022 = vadd.f32 %v840, %v1021
    %v1023 = vpop.f32.mrf.mxu0
    %v1024 = vadd.f32 %v840, %v1023
    %1025 = vmatmul.bf16.gmra.mxu0 %v806
    %v1026 = vpop.f32.mrf.mxu0
    %v1027 = vadd.f32 %v840, %v1026
    %v1028 = vpop.f32.mrf.mxu0
    %v1029 = vadd.f32 %v840, %v1028
    %1030 = vmatmul.bf16.gmra.mxu0 %v807
    %v1031 = vpop.f32.mrf.mxu0
    %v1032 = vadd.f32 %v840, %v1031
    %v1033 = vpop.f32.mrf.mxu0
    %v1034 = vadd.f32 %v840, %v1033
    %1035 = vmatmul.bf16.gmra.mxu0 %v808
    %v1036 = vpop.f32.mrf.mxu0
    %v1037 = vadd.f32 %v840, %v1036
    %v1038 = vpop.f32.mrf.mxu0
    %v1039 = vadd.f32 %v840, %v1038
    %1040 = vmatmul.bf16.gmra.mxu0 %v809
    %v1041 = vpop.f32.mrf.mxu0
    %v1042 = vadd.f32 %v840, %v1041
    %v1043 = vpop.f32.mrf.mxu0
    %v1044 = vadd.f32 %v840, %v1043
    %1045 = vmatmul.bf16.gmra.mxu0 %v810
    %v1046 = vpop.f32.mrf.mxu0
    %v1047 = vadd.f32 %v840, %v1046
    %v1048 = vpop.f32.mrf.mxu0
    %v1049 = vadd.f32 %v840, %v1048
    %1050 = vmatmul.bf16.gmra.mxu0 %v811
    %v1051 = vpop.f32.mrf.mxu0
    %v1052 = vadd.f32 %v840, %v1051
    %v1053 = vpop.f32.mrf.mxu0
    %v1054 = vadd.f32 %v840, %v1053
    %1055 = vmatmul.bf16.gmra.mxu0 %v812
    %v1056 = vpop.f32.mrf.mxu0
    %v1057 = vadd.f32 %v840, %v1056
    %v1058 = vpop.f32.mrf.mxu0
    %v1059 = vadd.f32 %v840, %v1058
    %1060 = vmatmul.bf16.gmra.mxu0 %v813
    %v1061 = vpop.f32.mrf.mxu0
    %v1062 = vadd.f32 %v840, %v1061
    %v1063 = vpop.f32.mrf.mxu0
    %v1064 = vadd.f32 %v840, %v1063
    %1065 = vmatmul.bf16.gmra.mxu0 %v814
    %v1066 = vpop.f32.mrf.mxu0
    %v1067 = vadd.f32 %v840, %v1066
    %v1068 = vpop.f32.mrf.mxu0
    %v1069 = vadd.f32 %v840, %v1068
    %1070 = vmatmul.bf16.gmra.mxu0 %v815
    %v1071 = vpop.f32.mrf.mxu0
    %v1072 = vadd.f32 %v840, %v1071
    %v1073 = vpop.f32.mrf.mxu0
    %v1074 = vadd.f32 %v840, %v1073
    %1075 = vmatmul.bf16.gmra.mxu0 %v816
    %v1076 = vpop.f32.mrf.mxu0
    %v1077 = vadd.f32 %v840, %v1076
    %v1078 = vpop.f32.mrf.mxu0
    %v1079 = vadd.f32 %v840, %v1078
    %1080 = vmatmul.bf16.gmra.mxu0 %v817
    %v1081 = vpop.f32.mrf.mxu0
    %v1082 = vadd.f32 %v840, %v1081
    %v1083 = vpop.f32.mrf.mxu0
    %v1084 = vadd.f32 %v840, %v1083
    %1085 = vmatmul.bf16.gmra.mxu0 %v818
    %v1086 = vpop.f32.mrf.mxu0
    %v1087 = vadd.f32 %v840, %v1086
    %v1088 = vpop.f32.mrf.mxu0
    %v1089 = vadd.f32 %v840, %v1088
    %1090 = vmatmul.bf16.gmra.mxu0 %v819
    %v1091 = vpop.f32.mrf.mxu0
    %v1092 = vadd.f32 %v840, %v1091
    %v1093 = vpop.f32.mrf.mxu0
    %v1094 = vadd.f32 %v840, %v1093
    %1095 = vmatmul.bf16.gmra.mxu0 %v820
    %v1096 = vpop.f32.mrf.mxu0
    %v1097 = vadd.f32 %v840, %v1096
    %v1098 = vpop.f32.mrf.mxu0
    %v1099 = vadd.f32 %v840, %v1098
    %1100 = vdwg.mxu0
    %v1101 = vmax.f32 %v933, %v935
    %v1102 = vmax.f32 %v1101, %v938
    %v1103 = vmax.f32 %v1102, %v940
    %v1104 = vrot.slane %v1103, 4
    %v1105 = vmax.f32 %v1103, %v1104
    %v1106 = vrot.slane %v1105, 2
    %v1107 = vmax.f32 %v1105, %v1106
    %v1108 = vrot.slane %v1107, 1
    %v1109 = vmax.f32 %v1107, %v1108
    %v1110 = vmax.f32 %v1022, %v1024
    %v1111 = vmax.f32 %v1110, %v1027
    %v1112 = vmax.f32 %v1111, %v1029
    %v1113 = vrot.slane %v1112, 4
    %v1114 = vmax.f32 %v1112, %v1113
    %v1115 = vrot.slane %v1114, 2
    %v1116 = vmax.f32 %v1114, %v1115
    %v1117 = vrot.slane %v1116, 1
    %v1118 = vmax.f32 %v1116, %v1117
    %v1119 = vmax.f32 %v943, %v945
    %v1120 = vmax.f32 %v1119, %v948
    %v1121 = vmax.f32 %v1120, %v950
    %v1122 = vrot.slane %v1121, 4
    %v1123 = vmax.f32 %v1121, %v1122
    %v1124 = vrot.slane %v1123, 2
    %v1125 = vmax.f32 %v1123, %v1124
    %v1126 = vrot.slane %v1125, 1
    %v1127 = vmax.f32 %v1125, %v1126
    %v1128 = vmax.f32 %v1032, %v1034
    %v1129 = vmax.f32 %v1128, %v1037
    %v1130 = vmax.f32 %v1129, %v1039
    %v1131 = vrot.slane %v1130, 4
    %v1132 = vmax.f32 %v1130, %v1131
    %v1133 = vrot.slane %v1132, 2
    %v1134 = vmax.f32 %v1132, %v1133
    %v1135 = vrot.slane %v1134, 1
    %v1136 = vmax.f32 %v1134, %v1135
    %v1137 = vmax.f32 %v953, %v955
    %v1138 = vmax.f32 %v1137, %v958
    %v1139 = vmax.f32 %v1138, %v960
    %v1140 = vrot.slane %v1139, 4
    %v1141 = vmax.f32 %v1139, %v1140
    %v1142 = vrot.slane %v1141, 2
    %v1143 = vmax.f32 %v1141, %v1142
    %v1144 = vrot.slane %v1143, 1
    %v1145 = vmax.f32 %v1143, %v1144
    %v1146 = vmax.f32 %v1042, %v1044
    %v1147 = vmax.f32 %v1146, %v1047
    %v1148 = vmax.f32 %v1147, %v1049
    %v1149 = vrot.slane %v1148, 4
    %v1150 = vmax.f32 %v1148, %v1149
    %v1151 = vrot.slane %v1150, 2
    %v1152 = vmax.f32 %v1150, %v1151
    %v1153 = vrot.slane %v1152, 1
    %v1154 = vmax.f32 %v1152, %v1153
    %v1155 = vmax.f32 %v963, %v965
    %v1156 = vmax.f32 %v1155, %v968
    %v1157 = vmax.f32 %v1156, %v970
    %v1158 = vrot.slane %v1157, 4
    %v1159 = vmax.f32 %v1157, %v1158
    %v1160 = vrot.slane %v1159, 2
    %v1161 = vmax.f32 %v1159, %v1160
    %v1162 = vrot.slane %v1161, 1
    %v1163 = vmax.f32 %v1161, %v1162
    %v1164 = vmax.f32 %v1052, %v1054
    %v1165 = vmax.f32 %v1164, %v1057
    %v1166 = vmax.f32 %v1165, %v1059
    %v1167 = vrot.slane %v1166, 4
    %v1168 = vmax.f32 %v1166, %v1167
    %v1169 = vrot.slane %v1168, 2
    %v1170 = vmax.f32 %v1168, %v1169
    %v1171 = vrot.slane %v1170, 1
    %v1172 = vmax.f32 %v1170, %v1171
    %v1173 = vmax.f32 %v973, %v975
    %v1174 = vmax.f32 %v1173, %v978
    %v1175 = vmax.f32 %v1174, %v980
    %v1176 = vrot.slane %v1175, 4
    %v1177 = vmax.f32 %v1175, %v1176
    %v1178 = vrot.slane %v1177, 2
    %v1179 = vmax.f32 %v1177, %v1178
    %v1180 = vrot.slane %v1179, 1
    %v1181 = vmax.f32 %v1179, %v1180
    %v1182 = vmax.f32 %v1062, %v1064
    %v1183 = vmax.f32 %v1182, %v1067
    %v1184 = vmax.f32 %v1183, %v1069
    %v1185 = vrot.slane %v1184, 4
    %v1186 = vmax.f32 %v1184, %v1185
    %v1187 = vrot.slane %v1186, 2
    %v1188 = vmax.f32 %v1186, %v1187
    %v1189 = vrot.slane %v1188, 1
    %v1190 = vmax.f32 %v1188, %v1189
    %v1191 = vmax.f32 %v983, %v985
    %v1192 = vmax.f32 %v1191, %v988
    %v1193 = vmax.f32 %v1192, %v990
    %v1194 = vrot.slane %v1193, 4
    %v1195 = vmax.f32 %v1193, %v1194
    %v1196 = vrot.slane %v1195, 2
    %v1197 = vmax.f32 %v1195, %v1196
    %v1198 = vrot.slane %v1197, 1
    %v1199 = vmax.f32 %v1197, %v1198
    %v1200 = vmax.f32 %v1072, %v1074
    %v1201 = vmax.f32 %v1200, %v1077
    %v1202 = vmax.f32 %v1201, %v1079
    %v1203 = vrot.slane %v1202, 4
    %v1204 = vmax.f32 %v1202, %v1203
    %v1205 = vrot.slane %v1204, 2
    %v1206 = vmax.f32 %v1204, %v1205
    %v1207 = vrot.slane %v1206, 1
    %v1208 = vmax.f32 %v1206, %v1207
    %v1209 = vmax.f32 %v993, %v995
    %v1210 = vmax.f32 %v1209, %v998
    %v1211 = vmax.f32 %v1210, %v1000
    %v1212 = vrot.slane %v1211, 4
    %v1213 = vmax.f32 %v1211, %v1212
    %v1214 = vrot.slane %v1213, 2
    %v1215 = vmax.f32 %v1213, %v1214
    %v1216 = vrot.slane %v1215, 1
    %v1217 = vmax.f32 %v1215, %v1216
    %v1218 = vmax.f32 %v1082, %v1084
    %v1219 = vmax.f32 %v1218, %v1087
    %v1220 = vmax.f32 %v1219, %v1089
    %v1221 = vrot.slane %v1220, 4
    %v1222 = vmax.f32 %v1220, %v1221
    %v1223 = vrot.slane %v1222, 2
    %v1224 = vmax.f32 %v1222, %v1223
    %v1225 = vrot.slane %v1224, 1
    %v1226 = vmax.f32 %v1224, %v1225
    %v1227 = vmax.f32 %v1003, %v1005
    %v1228 = vmax.f32 %v1227, %v1008
    %v1229 = vmax.f32 %v1228, %v1010
    %v1230 = vrot.slane %v1229, 4
    %v1231 = vmax.f32 %v1229, %v1230
    %v1232 = vrot.slane %v1231, 2
    %v1233 = vmax.f32 %v1231, %v1232
    %v1234 = vrot.slane %v1233, 1
    %v1235 = vmax.f32 %v1233, %v1234
    %v1236 = vmax.f32 %v1092, %v1094
    %v1237 = vmax.f32 %v1236, %v1097
    %v1238 = vmax.f32 %v1237, %v1099
    %v1239 = vrot.slane %v1238, 4
    %v1240 = vmax.f32 %v1238, %v1239
    %v1241 = vrot.slane %v1240, 2
    %v1242 = vmax.f32 %v1240, %v1241
    %v1243 = vrot.slane %v1242, 1
    %v1244 = vmax.f32 %v1242, %v1243
    %v1245 = vpack.c.bf16 %v1109, %v1109
    %v1246 = vpack.c.bf16 %v1118, %v1118
    %v1247 = vpack.c.bf16 %v1127, %v1127
    %v1248 = vpack.c.bf16 %v1136, %v1136
    %v1249 = vpack.c.bf16 %v1145, %v1145
    %v1250 = vpack.c.bf16 %v1154, %v1154
    %v1251 = vpack.c.bf16 %v1163, %v1163
    %v1252 = vpack.c.bf16 %v1172, %v1172
    %v1253 = vpack.c.bf16 %v1181, %v1181
    %v1254 = vpack.c.bf16 %v1190, %v1190
    %v1255 = vpack.c.bf16 %v1199, %v1199
    %v1256 = vpack.c.bf16 %v1208, %v1208
    %v1257 = vpack.c.bf16 %v1217, %v1217
    %v1258 = vpack.c.bf16 %v1226, %v1226
    %v1259 = vpack.c.bf16 %v1235, %v1235
    %v1260 = vpack.c.bf16 %v1244, %v1244
    %v1261 = vld [vmem:[#allocation2] sm:$0xff]
    %v1262 = vld [vmem:[#allocation2 + $0x8] sm:$0xff]
    %v1263 = vld [vmem:[#allocation2 + $0x10] sm:$0xff]
    %v1264 = vld [vmem:[#allocation2 + $0x18] sm:$0xff]
    %v1265 = vld [vmem:[#allocation2 + $0x20] sm:$0xff]
    %v1266 = vld [vmem:[#allocation2 + $0x28] sm:$0xff]
    %v1267 = vld [vmem:[#allocation2 + $0x30] sm:$0xff]
    %v1268 = vld [vmem:[#allocation2 + $0x38] sm:$0xff]
    %v1269 = vld [vmem:[#allocation2 + $0x40] sm:$0xff]
    %v1270 = vld [vmem:[#allocation2 + $0x48] sm:$0xff]
    %v1271 = vld [vmem:[#allocation2 + $0x50] sm:$0xff]
    %v1272 = vld [vmem:[#allocation2 + $0x58] sm:$0xff]
    %v1273 = vld [vmem:[#allocation2 + $0x60] sm:$0xff]
    %v1274 = vld [vmem:[#allocation2 + $0x68] sm:$0xff]
    %v1275 = vld [vmem:[#allocation2 + $0x70] sm:$0xff]
    %v1276 = vld [vmem:[#allocation2 + $0x78] sm:$0xff]
    %v1277 = vld [vmem:[#allocation2 + $0x80] sm:$0xff]
    %v1278 = vld [vmem:[#allocation2 + $0x88] sm:$0xff]
    %v1279 = vld [vmem:[#allocation2 + $0x90] sm:$0xff]
    %v1280 = vld [vmem:[#allocation2 + $0x98] sm:$0xff]
    %v1281 = vld [vmem:[#allocation2 + $0xa0] sm:$0xff]
    %v1282 = vld [vmem:[#allocation2 + $0xa8] sm:$0xff]
    %v1283 = vld [vmem:[#allocation2 + $0xb0] sm:$0xff]
    %v1284 = vld [vmem:[#allocation2 + $0xb8] sm:$0xff]
    %v1285 = vld [vmem:[#allocation2 + $0xc0] sm:$0xff]
    %v1286 = vld [vmem:[#allocation2 + $0xc8] sm:$0xff]
    %v1287 = vld [vmem:[#allocation2 + $0xd0] sm:$0xff]
    %v1288 = vld [vmem:[#allocation2 + $0xd8] sm:$0xff]
    %v1289 = vld [vmem:[#allocation2 + $0xe0] sm:$0xff]
    %v1290 = vld [vmem:[#allocation2 + $0xe8] sm:$0xff]
    %v1291 = vld [vmem:[#allocation2 + $0xf0] sm:$0xff]
    %v1292 = vld [vmem:[#allocation2 + $0xf8] sm:$0xff]
    %v1293 = vld [vmem:[#allocation2 + $0x100] sm:$0xff]
    %v1294 = vld [vmem:[#allocation2 + $0x108] sm:$0xff]
    %v1295 = vld [vmem:[#allocation2 + $0x110] sm:$0xff]
    %v1296 = vld [vmem:[#allocation2 + $0x118] sm:$0xff]
    %v1297 = vld [vmem:[#allocation2 + $0x120] sm:$0xff]
    %v1298 = vld [vmem:[#allocation2 + $0x128] sm:$0xff]
    %v1299 = vld [vmem:[#allocation2 + $0x130] sm:$0xff]
    %v1300 = vld [vmem:[#allocation2 + $0x138] sm:$0xff]
    %v1301 = vld [vmem:[#allocation2 + $0x140] sm:$0xff]
    %v1302 = vld [vmem:[#allocation2 + $0x148] sm:$0xff]
    %v1303 = vld [vmem:[#allocation2 + $0x150] sm:$0xff]
    %v1304 = vld [vmem:[#allocation2 + $0x158] sm:$0xff]
    %v1305 = vld [vmem:[#allocation2 + $0x160] sm:$0xff]
    %v1306 = vld [vmem:[#allocation2 + $0x168] sm:$0xff]
    %v1307 = vld [vmem:[#allocation2 + $0x170] sm:$0xff]
    %v1308 = vld [vmem:[#allocation2 + $0x178] sm:$0xff]
    %v1309 = vld [vmem:[#allocation2 + $0x180] sm:$0xff]
    %v1310 = vld [vmem:[#allocation2 + $0x188] sm:$0xff]
    %v1311 = vld [vmem:[#allocation2 + $0x190] sm:$0xff]
    %v1312 = vld [vmem:[#allocation2 + $0x198] sm:$0xff]
    %v1313 = vld [vmem:[#allocation2 + $0x1a0] sm:$0xff]
    %v1314 = vld [vmem:[#allocation2 + $0x1a8] sm:$0xff]
    %v1315 = vld [vmem:[#allocation2 + $0x1b0] sm:$0xff]
    %v1316 = vld [vmem:[#allocation2 + $0x1b8] sm:$0xff]
    %v1317 = vld [vmem:[#allocation2 + $0x1c0] sm:$0xff]
    %v1318 = vld [vmem:[#allocation2 + $0x1c8] sm:$0xff]
    %v1319 = vld [vmem:[#allocation2 + $0x1d0] sm:$0xff]
    %v1320 = vld [vmem:[#allocation2 + $0x1d8] sm:$0xff]
    %v1321 = vld [vmem:[#allocation2 + $0x1e0] sm:$0xff]
    %v1322 = vld [vmem:[#allocation2 + $0x1e8] sm:$0xff]
    %v1323 = vld [vmem:[#allocation2 + $0x1f0] sm:$0xff]
    %v1324 = vld [vmem:[#allocation2 + $0x1f8] sm:$0xff]
    %v1341 = vunpack.c.l.b16 %v1245
    %v1342 = vunpack.c.l.b16 %v1246
    %v1343 = vunpack.c.l.b16 %v1247
    %v1344 = vunpack.c.l.b16 %v1248
    %v1345 = vunpack.c.l.b16 %v1249
    %v1346 = vunpack.c.l.b16 %v1250
    %v1347 = vunpack.c.l.b16 %v1251
    %v1348 = vunpack.c.l.b16 %v1252
    %v1349 = vunpack.c.l.b16 %v1253
    %v1350 = vunpack.c.l.b16 %v1254
    %v1351 = vunpack.c.l.b16 %v1255
    %v1352 = vunpack.c.l.b16 %v1256
    %v1353 = vunpack.c.l.b16 %v1257
    %v1354 = vunpack.c.l.b16 %v1258
    %v1355 = vunpack.c.l.b16 %v1259
    %v1356 = vunpack.c.l.b16 %v1260
    %vm1357 = vcmask 1041409
    %v1358 = vsel %vm1357, %v1343, %v1341
    %vm1359 = vcmask 1042434
    %v1360 = vsel %vm1359, %v1345, %v1358
    %vm1361 = vcmask 1043459
    %v1362 = vsel %vm1361, %v1347, %v1360
    %vm1363 = vcmask 1044484
    %v1364 = vsel %vm1363, %v1349, %v1362
    %vm1365 = vcmask 1045509
    %v1366 = vsel %vm1365, %v1351, %v1364
    %vm1367 = vcmask 1046534
    %v1368 = vsel %vm1367, %v1353, %v1366
    %vm1369 = vcmask 1047559
    %v1370 = vsel %vm1369, %v1355, %v1368
    %v1371 = vsel %vm1357, %v1344, %v1342
    %v1372 = vsel %vm1359, %v1346, %v1371
    %v1373 = vsel %vm1361, %v1348, %v1372
    %v1374 = vsel %vm1363, %v1350, %v1373
    %v1375 = vsel %vm1365, %v1352, %v1374
    %v1376 = vsel %vm1367, %v1354, %v1375
    %v1377 = vsel %vm1369, %v1356, %v1376
    %v1378 = vpack.c.b16 %v1370, %v1370
    %v1379 = vpack.c.b16 %v1377, %v1377
    %v1446 = vunpack.c.l.b16 %v1261
    %v1447 = vunpack.c.h.b16 %v1261
    %v1448 = vunpack.c.l.b16 %v1262
    %v1449 = vunpack.c.h.b16 %v1262
    %v1450 = vunpack.c.l.b16 %v1263
    %v1451 = vunpack.c.h.b16 %v1263
    %v1452 = vunpack.c.l.b16 %v1264
    %v1453 = vunpack.c.h.b16 %v1264
    %v1454 = vunpack.c.l.b16 %v1265
    %v1455 = vunpack.c.h.b16 %v1265
    %v1456 = vunpack.c.l.b16 %v1266
    %v1457 = vunpack.c.h.b16 %v1266
    %v1458 = vunpack.c.l.b16 %v1267
    %v1459 = vunpack.c.h.b16 %v1267
    %v1460 = vunpack.c.l.b16 %v1268
    %v1461 = vunpack.c.h.b16 %v1268
    %v1462 = vunpack.c.l.b16 %v1269
    %v1463 = vunpack.c.h.b16 %v1269
    %v1464 = vunpack.c.l.b16 %v1270
    %v1465 = vunpack.c.h.b16 %v1270
    %v1466 = vunpack.c.l.b16 %v1271
    %v1467 = vunpack.c.h.b16 %v1271
    %v1468 = vunpack.c.l.b16 %v1272
    %v1469 = vunpack.c.h.b16 %v1272
    %v1470 = vunpack.c.l.b16 %v1273
    %v1471 = vunpack.c.h.b16 %v1273
    %v1472 = vunpack.c.l.b16 %v1274
    %v1473 = vunpack.c.h.b16 %v1274
    %v1474 = vunpack.c.l.b16 %v1275
    %v1475 = vunpack.c.h.b16 %v1275
    %v1476 = vunpack.c.l.b16 %v1276
    %v1477 = vunpack.c.h.b16 %v1276
    %v1478 = vunpack.c.l.b16 %v1277
    %v1479 = vunpack.c.h.b16 %v1277
    %v1480 = vunpack.c.l.b16 %v1278
    %v1481 = vunpack.c.h.b16 %v1278
    %v1482 = vunpack.c.l.b16 %v1279
    %v1483 = vunpack.c.h.b16 %v1279
    %v1484 = vunpack.c.l.b16 %v1280
    %v1485 = vunpack.c.h.b16 %v1280
    %v1486 = vunpack.c.l.b16 %v1281
    %v1487 = vunpack.c.h.b16 %v1281
    %v1488 = vunpack.c.l.b16 %v1282
    %v1489 = vunpack.c.h.b16 %v1282
    %v1490 = vunpack.c.l.b16 %v1283
    %v1491 = vunpack.c.h.b16 %v1283
    %v1492 = vunpack.c.l.b16 %v1284
    %v1493 = vunpack.c.h.b16 %v1284
    %v1494 = vunpack.c.l.b16 %v1285
    %v1495 = vunpack.c.h.b16 %v1285
    %v1496 = vunpack.c.l.b16 %v1286
    %v1497 = vunpack.c.h.b16 %v1286
    %v1498 = vunpack.c.l.b16 %v1287
    %v1499 = vunpack.c.h.b16 %v1287
    %v1500 = vunpack.c.l.b16 %v1288
    %v1501 = vunpack.c.h.b16 %v1288
    %v1502 = vunpack.c.l.b16 %v1289
    %v1503 = vunpack.c.h.b16 %v1289
    %v1504 = vunpack.c.l.b16 %v1290
    %v1505 = vunpack.c.h.b16 %v1290
    %v1506 = vunpack.c.l.b16 %v1291
    %v1507 = vunpack.c.h.b16 %v1291
    %v1508 = vunpack.c.l.b16 %v1292
    %v1509 = vunpack.c.h.b16 %v1292
    %v1510 = vunpack.c.l.b16 %v1293
    %v1511 = vunpack.c.h.b16 %v1293
    %v1512 = vunpack.c.l.b16 %v1294
    %v1513 = vunpack.c.h.b16 %v1294
    %v1514 = vunpack.c.l.b16 %v1295
    %v1515 = vunpack.c.h.b16 %v1295
    %v1516 = vunpack.c.l.b16 %v1296
    %v1517 = vunpack.c.h.b16 %v1296
    %v1518 = vunpack.c.l.b16 %v1297
    %v1519 = vunpack.c.h.b16 %v1297
    %v1520 = vunpack.c.l.b16 %v1298
    %v1521 = vunpack.c.h.b16 %v1298
    %v1522 = vunpack.c.l.b16 %v1299
    %v1523 = vunpack.c.h.b16 %v1299
    %v1524 = vunpack.c.l.b16 %v1300
    %v1525 = vunpack.c.h.b16 %v1300
    %v1526 = vunpack.c.l.b16 %v1301
    %v1527 = vunpack.c.h.b16 %v1301
    %v1528 = vunpack.c.l.b16 %v1302
    %v1529 = vunpack.c.h.b16 %v1302
    %v1530 = vunpack.c.l.b16 %v1303
    %v1531 = vunpack.c.h.b16 %v1303
    %v1532 = vunpack.c.l.b16 %v1304
    %v1533 = vunpack.c.h.b16 %v1304
    %v1534 = vunpack.c.l.b16 %v1305
    %v1535 = vunpack.c.h.b16 %v1305
    %v1536 = vunpack.c.l.b16 %v1306
    %v1537 = vunpack.c.h.b16 %v1306
    %v1538 = vunpack.c.l.b16 %v1307
    %v1539 = vunpack.c.h.b16 %v1307
    %v1540 = vunpack.c.l.b16 %v1308
    %v1541 = vunpack.c.h.b16 %v1308
    %v1542 = vunpack.c.l.b16 %v1309
    %v1543 = vunpack.c.h.b16 %v1309
    %v1544 = vunpack.c.l.b16 %v1310
    %v1545 = vunpack.c.h.b16 %v1310
    %v1546 = vunpack.c.l.b16 %v1311
    %v1547 = vunpack.c.h.b16 %v1311
    %v1548 = vunpack.c.l.b16 %v1312
    %v1549 = vunpack.c.h.b16 %v1312
    %v1550 = vunpack.c.l.b16 %v1313
    %v1551 = vunpack.c.h.b16 %v1313
    %v1552 = vunpack.c.l.b16 %v1314
    %v1553 = vunpack.c.h.b16 %v1314
    %v1554 = vunpack.c.l.b16 %v1315
    %v1555 = vunpack.c.h.b16 %v1315
    %v1556 = vunpack.c.l.b16 %v1316
    %v1557 = vunpack.c.h.b16 %v1316
    %v1558 = vunpack.c.l.b16 %v1317
    %v1559 = vunpack.c.h.b16 %v1317
    %v1560 = vunpack.c.l.b16 %v1318
    %v1561 = vunpack.c.h.b16 %v1318
    %v1562 = vunpack.c.l.b16 %v1319
    %v1563 = vunpack.c.h.b16 %v1319
    %v1564 = vunpack.c.l.b16 %v1320
    %v1565 = vunpack.c.h.b16 %v1320
    %v1566 = vunpack.c.l.b16 %v1321
    %v1567 = vunpack.c.h.b16 %v1321
    %v1568 = vunpack.c.l.b16 %v1322
    %v1569 = vunpack.c.h.b16 %v1322
    %v1570 = vunpack.c.l.b16 %v1323
    %v1571 = vunpack.c.h.b16 %v1323
    %v1572 = vunpack.c.l.b16 %v1324
    %v1573 = vunpack.c.h.b16 %v1324
    %v1574 = vpack.c.b16 %v1450, %v1446
    %v1575 = vpack.c.b16 %v1451, %v1447
    %v1576 = vpack.c.b16 %v1452, %v1448
    %v1577 = vpack.c.b16 %v1453, %v1449
    %v1578 = vpack.c.b16 %v1458, %v1454
    %v1579 = vpack.c.b16 %v1459, %v1455
    %v1580 = vpack.c.b16 %v1460, %v1456
    %v1581 = vpack.c.b16 %v1461, %v1457
    %v1582 = vpack.c.b16 %v1466, %v1462
    %v1583 = vpack.c.b16 %v1467, %v1463
    %v1584 = vpack.c.b16 %v1468, %v1464
    %v1585 = vpack.c.b16 %v1469, %v1465
    %v1586 = vpack.c.b16 %v1474, %v1470
    %v1587 = vpack.c.b16 %v1475, %v1471
    %v1588 = vpack.c.b16 %v1476, %v1472
    %v1589 = vpack.c.b16 %v1477, %v1473
    %v1590 = vpack.c.b16 %v1482, %v1478
    %v1591 = vpack.c.b16 %v1483, %v1479
    %v1592 = vpack.c.b16 %v1484, %v1480
    %v1593 = vpack.c.b16 %v1485, %v1481
    %v1594 = vpack.c.b16 %v1490, %v1486
    %v1595 = vpack.c.b16 %v1491, %v1487
    %v1596 = vpack.c.b16 %v1492, %v1488
    %v1597 = vpack.c.b16 %v1493, %v1489
    %v1598 = vpack.c.b16 %v1498, %v1494
    %v1599 = vpack.c.b16 %v1499, %v1495
    %v1600 = vpack.c.b16 %v1500, %v1496
    %v1601 = vpack.c.b16 %v1501, %v1497
    %v1602 = vpack.c.b16 %v1506, %v1502
    %v1603 = vpack.c.b16 %v1507, %v1503
    %v1604 = vpack.c.b16 %v1508, %v1504
    %v1605 = vpack.c.b16 %v1509, %v1505
    %v1606 = vpack.c.b16 %v1514, %v1510
    %v1607 = vpack.c.b16 %v1515, %v1511
    %v1608 = vpack.c.b16 %v1516, %v1512
    %v1609 = vpack.c.b16 %v1517, %v1513
    %v1610 = vpack.c.b16 %v1522, %v1518
    %v1611 = vpack.c.b16 %v1523, %v1519
    %v1612 = vpack.c.b16 %v1524, %v1520
    %v1613 = vpack.c.b16 %v1525, %v1521
    %v1614 = vpack.c.b16 %v1530, %v1526
    %v1615 = vpack.c.b16 %v1531, %v1527
    %v1616 = vpack.c.b16 %v1532, %v1528
    %v1617 = vpack.c.b16 %v1533, %v1529
    %v1618 = vpack.c.b16 %v1538, %v1534
    %v1619 = vpack.c.b16 %v1539, %v1535
    %v1620 = vpack.c.b16 %v1540, %v1536
    %v1621 = vpack.c.b16 %v1541, %v1537
    %v1622 = vpack.c.b16 %v1546, %v1542
    %v1623 = vpack.c.b16 %v1547, %v1543
    %v1624 = vpack.c.b16 %v1548, %v1544
    %v1625 = vpack.c.b16 %v1549, %v1545
    %v1626 = vpack.c.b16 %v1554, %v1550
    %v1627 = vpack.c.b16 %v1555, %v1551
    %v1628 = vpack.c.b16 %v1556, %v1552
    %v1629 = vpack.c.b16 %v1557, %v1553
    %v1630 = vpack.c.b16 %v1562, %v1558
    %v1631 = vpack.c.b16 %v1563, %v1559
    %v1632 = vpack.c.b16 %v1564, %v1560
    %v1633 = vpack.c.b16 %v1565, %v1561
    %v1634 = vpack.c.b16 %v1570, %v1566
    %v1635 = vpack.c.b16 %v1571, %v1567
    %v1636 = vpack.c.b16 %v1572, %v1568
    %v1637 = vpack.c.b16 %v1573, %v1569
    %1702 = vmatpush.bf16.msra.mxu0 %v1602
    %1703 = vmatpush.bf16.msra.mxu0 %v1598
    %1704 = vmatpush.bf16.msra.mxu0 %v1594
    %1705 = vmatpush.bf16.msra.mxu0 %v1590
    %1706 = vmatpush.bf16.msra.mxu0 %v1586
    %1707 = vmatpush.bf16.msra.mxu0 %v1582
    %1708 = vmatpush.bf16.msra.mxu0 %v1578
    %1709 = vmatpush.bf16.msra.mxu0 %v1574
    %1710 = vmatmul.bf16.gmra.mxu0 %v1378
    %v1711 = vpop.f32.mrf.mxu0
    %v1712 = vadd.f32 0.0, %v1711
    %v1713 = vpop.f32.mrf.mxu0
    %1714 = vdwg.mxu0
    %1715 = vmatpush.bf16.msra.mxu0 %v1634
    %1716 = vmatpush.bf16.msra.mxu0 %v1630
    %1717 = vmatpush.bf16.msra.mxu0 %v1626
    %1718 = vmatpush.bf16.msra.mxu0 %v1622
    %1719 = vmatpush.bf16.msra.mxu0 %v1618
    %1720 = vmatpush.bf16.msra.mxu0 %v1614
    %1721 = vmatpush.bf16.msra.mxu0 %v1610
    %1722 = vmatpush.bf16.msra.mxu0 %v1606
    %1723 = vmatmul.bf16.gmra.mxu0 %v1379
    %v1724 = vpop.f32.mrf.mxu0
    %v1725 = vadd.f32 %v1712, %v1724
    %v1726 = vpop.f32.mrf.mxu0
    %1727 = vdwg.mxu0
    %1728 = vmatpush.bf16.msra.mxu0 %v1603
    %1729 = vmatpush.bf16.msra.mxu0 %v1599
    %1730 = vmatpush.bf16.msra.mxu0 %v1595
    %1731 = vmatpush.bf16.msra.mxu0 %v1591
    %1732 = vmatpush.bf16.msra.mxu0 %v1587
    %1733 = vmatpush.bf16.msra.mxu0 %v1583
    %1734 = vmatpush.bf16.msra.mxu0 %v1579
    %1735 = vmatpush.bf16.msra.mxu0 %v1575
    %1736 = vmatmul.bf16.gmra.mxu0 %v1378
    %v1737 = vpop.f32.mrf.mxu0
    %v1738 = vadd.f32 0.0, %v1737
    %v1739 = vpop.f32.mrf.mxu0
    %1740 = vdwg.mxu0
    %1741 = vmatpush.bf16.msra.mxu0 %v1635
    %1742 = vmatpush.bf16.msra.mxu0 %v1631
    %1743 = vmatpush.bf16.msra.mxu0 %v1627
    %1744 = vmatpush.bf16.msra.mxu0 %v1623
    %1745 = vmatpush.bf16.msra.mxu0 %v1619
    %1746 = vmatpush.bf16.msra.mxu0 %v1615
    %1747 = vmatpush.bf16.msra.mxu0 %v1611
    %1748 = vmatpush.bf16.msra.mxu0 %v1607
    %1749 = vmatmul.bf16.gmra.mxu0 %v1379
    %v1750 = vpop.f32.mrf.mxu0
    %v1751 = vadd.f32 %v1738, %v1750
    %v1752 = vpop.f32.mrf.mxu0
    %1753 = vdwg.mxu0
    %1754 = vmatpush.bf16.msra.mxu0 %v1604
    %1755 = vmatpush.bf16.msra.mxu0 %v1600
    %1756 = vmatpush.bf16.msra.mxu0 %v1596
    %1757 = vmatpush.bf16.msra.mxu0 %v1592
    %1758 = vmatpush.bf16.msra.mxu0 %v1588
    %1759 = vmatpush.bf16.msra.mxu0 %v1584
    %1760 = vmatpush.bf16.msra.mxu0 %v1580
    %1761 = vmatpush.bf16.msra.mxu0 %v1576
    %1762 = vmatmul.bf16.gmra.mxu0 %v1378
    %v1763 = vpop.f32.mrf.mxu0
    %v1764 = vadd.f32 0.0, %v1763
    %v1765 = vpop.f32.mrf.mxu0
    %1766 = vdwg.mxu0
    %1767 = vmatpush.bf16.msra.mxu0 %v1636
    %1768 = vmatpush.bf16.msra.mxu0 %v1632
    %1769 = vmatpush.bf16.msra.mxu0 %v1628
    %1770 = vmatpush.bf16.msra.mxu0 %v1624
    %1771 = vmatpush.bf16.msra.mxu0 %v1620
    %1772 = vmatpush.bf16.msra.mxu0 %v1616
    %1773 = vmatpush.bf16.msra.mxu0 %v1612
    %1774 = vmatpush.bf16.msra.mxu0 %v1608
    %1775 = vmatmul.bf16.gmra.mxu0 %v1379
    %v1776 = vpop.f32.mrf.mxu0
    %v1777 = vadd.f32 %v1764, %v1776
    %v1778 = vpop.f32.mrf.mxu0
    %1779 = vdwg.mxu0
    %1780 = vmatpush.bf16.msra.mxu0 %v1605
    %1781 = vmatpush.bf16.msra.mxu0 %v1601
    %1782 = vmatpush.bf16.msra.mxu0 %v1597
    %1783 = vmatpush.bf16.msra.mxu0 %v1593
    %1784 = vmatpush.bf16.msra.mxu0 %v1589
    %1785 = vmatpush.bf16.msra.mxu0 %v1585
    %1786 = vmatpush.bf16.msra.mxu0 %v1581
    %1787 = vmatpush.bf16.msra.mxu0 %v1577
    %1788 = vmatmul.bf16.gmra.mxu0 %v1378
    %v1789 = vpop.f32.mrf.mxu0
    %v1790 = vadd.f32 0.0, %v1789
    %v1791 = vpop.f32.mrf.mxu0
    %1792 = vdwg.mxu0
    %1793 = vmatpush.bf16.msra.mxu0 %v1637
    %1794 = vmatpush.bf16.msra.mxu0 %v1633
    %1795 = vmatpush.bf16.msra.mxu0 %v1629
    %1796 = vmatpush.bf16.msra.mxu0 %v1625
    %1797 = vmatpush.bf16.msra.mxu0 %v1621
    %1798 = vmatpush.bf16.msra.mxu0 %v1617
    %1799 = vmatpush.bf16.msra.mxu0 %v1613
    %1800 = vmatpush.bf16.msra.mxu0 %v1609
    %1801 = vmatmul.bf16.gmra.mxu0 %v1379
    %v1802 = vpop.f32.mrf.mxu0
    %v1803 = vadd.f32 %v1790, %v1802
    %v1804 = vpop.f32.mrf.mxu0
    %1805 = vdwg.mxu0
    %v1806 = vpack.c.bf16 %v935, %v933
    %v1807 = vpack.c.bf16 %v1024, %v1022
    %v1808 = vpack.c.bf16 %v940, %v938
    %v1809 = vpack.c.bf16 %v1029, %v1027
    %v1810 = vpack.c.bf16 %v945, %v943
    %v1811 = vpack.c.bf16 %v1034, %v1032
    %v1812 = vpack.c.bf16 %v950, %v948
    %v1813 = vpack.c.bf16 %v1039, %v1037
    %v1814 = vpack.c.bf16 %v955, %v953
    %v1815 = vpack.c.bf16 %v1044, %v1042
    %v1816 = vpack.c.bf16 %v960, %v958
    %v1817 = vpack.c.bf16 %v1049, %v1047
    %v1818 = vpack.c.bf16 %v965, %v963
    %v1819 = vpack.c.bf16 %v1054, %v1052
    %v1820 = vpack.c.bf16 %v970, %v968
    %v1821 = vpack.c.bf16 %v1059, %v1057
    %v1822 = vpack.c.bf16 %v975, %v973
    %v1823 = vpack.c.bf16 %v1064, %v1062
    %v1824 = vpack.c.bf16 %v980, %v978
    %v1825 = vpack.c.bf16 %v1069, %v1067
    %v1826 = vpack.c.bf16 %v985, %v983
    %v1827 = vpack.c.bf16 %v1074, %v1072
    %v1828 = vpack.c.bf16 %v990, %v988
    %v1829 = vpack.c.bf16 %v1079, %v1077
    %v1830 = vpack.c.bf16 %v995, %v993
    %v1831 = vpack.c.bf16 %v1084, %v1082
    %v1832 = vpack.c.bf16 %v1000, %v998
    %v1833 = vpack.c.bf16 %v1089, %v1087
    %v1834 = vpack.c.bf16 %v1005, %v1003
    %v1835 = vpack.c.bf16 %v1094, %v1092
    %v1836 = vpack.c.bf16 %v1010, %v1008
    %v1837 = vpack.c.bf16 %v1099, %v1097
    %v1838 = vld [vmem:[#allocation5] sm:$0xff]
    %v1839 = vld [vmem:[#allocation5 + $0x8] sm:$0xff]
    %v1840 = vld [vmem:[#allocation5 + $0x10] sm:$0xff]
    %v1841 = vld [vmem:[#allocation5 + $0x18] sm:$0xff]
    %v1842 = vld [vmem:[#allocation5 + $0x20] sm:$0xff]
    %v1843 = vld [vmem:[#allocation5 + $0x28] sm:$0xff]
    %v1844 = vld [vmem:[#allocation5 + $0x30] sm:$0xff]
    %v1845 = vld [vmem:[#allocation5 + $0x38] sm:$0xff]
    %v1846 = vld [vmem:[#allocation5 + $0x40] sm:$0xff]
    %v1847 = vld [vmem:[#allocation5 + $0x48] sm:$0xff]
    %v1848 = vld [vmem:[#allocation5 + $0x50] sm:$0xff]
    %v1849 = vld [vmem:[#allocation5 + $0x58] sm:$0xff]
    %v1850 = vld [vmem:[#allocation5 + $0x60] sm:$0xff]
    %v1851 = vld [vmem:[#allocation5 + $0x68] sm:$0xff]
    %v1852 = vld [vmem:[#allocation5 + $0x70] sm:$0xff]
    %v1853 = vld [vmem:[#allocation5 + $0x78] sm:$0xff]
    %v1854 = vld [vmem:[#allocation5 + $0x80] sm:$0xff]
    %v1855 = vld [vmem:[#allocation5 + $0x88] sm:$0xff]
    %v1856 = vld [vmem:[#allocation5 + $0x90] sm:$0xff]
    %v1857 = vld [vmem:[#allocation5 + $0x98] sm:$0xff]
    %v1858 = vld [vmem:[#allocation5 + $0xa0] sm:$0xff]
    %v1859 = vld [vmem:[#allocation5 + $0xa8] sm:$0xff]
    %v1860 = vld [vmem:[#allocation5 + $0xb0] sm:$0xff]
    %v1861 = vld [vmem:[#allocation5 + $0xb8] sm:$0xff]
    %v1862 = vld [vmem:[#allocation5 + $0xc0] sm:$0xff]
    %v1863 = vld [vmem:[#allocation5 + $0xc8] sm:$0xff]
    %v1864 = vld [vmem:[#allocation5 + $0xd0] sm:$0xff]
    %v1865 = vld [vmem:[#allocation5 + $0xd8] sm:$0xff]
    %v1866 = vld [vmem:[#allocation5 + $0xe0] sm:$0xff]
    %v1867 = vld [vmem:[#allocation5 + $0xe8] sm:$0xff]
    %v1868 = vld [vmem:[#allocation5 + $0xf0] sm:$0xff]
    %v1869 = vld [vmem:[#allocation5 + $0xf8] sm:$0xff]
    %v1870 = vld [vmem:[#allocation5 + $0x100] sm:$0xff]
    %v1871 = vld [vmem:[#allocation5 + $0x108] sm:$0xff]
    %v1872 = vld [vmem:[#allocation5 + $0x110] sm:$0xff]
    %v1873 = vld [vmem:[#allocation5 + $0x118] sm:$0xff]
    %v1874 = vld [vmem:[#allocation5 + $0x120] sm:$0xff]
    %v1875 = vld [vmem:[#allocation5 + $0x128] sm:$0xff]
    %v1876 = vld [vmem:[#allocation5 + $0x130] sm:$0xff]
    %v1877 = vld [vmem:[#allocation5 + $0x138] sm:$0xff]
    %v1878 = vld [vmem:[#allocation5 + $0x140] sm:$0xff]
    %v1879 = vld [vmem:[#allocation5 + $0x148] sm:$0xff]
    %v1880 = vld [vmem:[#allocation5 + $0x150] sm:$0xff]
    %v1881 = vld [vmem:[#allocation5 + $0x158] sm:$0xff]
    %v1882 = vld [vmem:[#allocation5 + $0x160] sm:$0xff]
    %v1883 = vld [vmem:[#allocation5 + $0x168] sm:$0xff]
    %v1884 = vld [vmem:[#allocation5 + $0x170] sm:$0xff]
    %v1885 = vld [vmem:[#allocation5 + $0x178] sm:$0xff]
    %v1886 = vld [vmem:[#allocation5 + $0x180] sm:$0xff]
    %v1887 = vld [vmem:[#allocation5 + $0x188] sm:$0xff]
    %v1888 = vld [vmem:[#allocation5 + $0x190] sm:$0xff]
    %v1889 = vld [vmem:[#allocation5 + $0x198] sm:$0xff]
    %v1890 = vld [vmem:[#allocation5 + $0x1a0] sm:$0xff]
    %v1891 = vld [vmem:[#allocation5 + $0x1a8] sm:$0xff]
    %v1892 = vld [vmem:[#allocation5 + $0x1b0] sm:$0xff]
    %v1893 = vld [vmem:[#allocation5 + $0x1b8] sm:$0xff]
    %v1894 = vld [vmem:[#allocation5 + $0x1c0] sm:$0xff]
    %v1895 = vld [vmem:[#allocation5 + $0x1c8] sm:$0xff]
    %v1896 = vld [vmem:[#allocation5 + $0x1d0] sm:$0xff]
    %v1897 = vld [vmem:[#allocation5 + $0x1d8] sm:$0xff]
    %v1898 = vld [vmem:[#allocation5 + $0x1e0] sm:$0xff]
    %v1899 = vld [vmem:[#allocation5 + $0x1e8] sm:$0xff]
    %v1900 = vld [vmem:[#allocation5 + $0x1f0] sm:$0xff]
    %v1901 = vld [vmem:[#allocation5 + $0x1f8] sm:$0xff]
    %v1966 = vunpack.c.l.b16 %v1838
    %v1967 = vunpack.c.h.b16 %v1838
    %v1968 = vunpack.c.l.b16 %v1839
    %v1969 = vunpack.c.h.b16 %v1839
    %v1970 = vunpack.c.l.b16 %v1840
    %v1971 = vunpack.c.h.b16 %v1840
    %v1972 = vunpack.c.l.b16 %v1841
    %v1973 = vunpack.c.h.b16 %v1841
    %v1974 = vunpack.c.l.b16 %v1842
    %v1975 = vunpack.c.h.b16 %v1842
    %v1976 = vunpack.c.l.b16 %v1843
    %v1977 = vunpack.c.h.b16 %v1843
    %v1978 = vunpack.c.l.b16 %v1844
    %v1979 = vunpack.c.h.b16 %v1844
    %v1980 = vunpack.c.l.b16 %v1845
    %v1981 = vunpack.c.h.b16 %v1845
    %v1982 = vunpack.c.l.b16 %v1846
    %v1983 = vunpack.c.h.b16 %v1846
    %v1984 = vunpack.c.l.b16 %v1847
    %v1985 = vunpack.c.h.b16 %v1847
    %v1986 = vunpack.c.l.b16 %v1848
    %v1987 = vunpack.c.h.b16 %v1848
    %v1988 = vunpack.c.l.b16 %v1849
    %v1989 = vunpack.c.h.b16 %v1849
    %v1990 = vunpack.c.l.b16 %v1850
    %v1991 = vunpack.c.h.b16 %v1850
    %v1992 = vunpack.c.l.b16 %v1851
    %v1993 = vunpack.c.h.b16 %v1851
    %v1994 = vunpack.c.l.b16 %v1852
    %v1995 = vunpack.c.h.b16 %v1852
    %v1996 = vunpack.c.l.b16 %v1853
    %v1997 = vunpack.c.h.b16 %v1853
    %v1998 = vunpack.c.l.b16 %v1854
    %v1999 = vunpack.c.h.b16 %v1854
    %v2000 = vunpack.c.l.b16 %v1855
    %v2001 = vunpack.c.h.b16 %v1855
    %v2002 = vunpack.c.l.b16 %v1856
    %v2003 = vunpack.c.h.b16 %v1856
    %v2004 = vunpack.c.l.b16 %v1857
    %v2005 = vunpack.c.h.b16 %v1857
    %v2006 = vunpack.c.l.b16 %v1858
    %v2007 = vunpack.c.h.b16 %v1858
    %v2008 = vunpack.c.l.b16 %v1859
    %v2009 = vunpack.c.h.b16 %v1859
    %v2010 = vunpack.c.l.b16 %v1860
    %v2011 = vunpack.c.h.b16 %v1860
    %v2012 = vunpack.c.l.b16 %v1861
    %v2013 = vunpack.c.h.b16 %v1861
    %v2014 = vunpack.c.l.b16 %v1862
    %v2015 = vunpack.c.h.b16 %v1862
    %v2016 = vunpack.c.l.b16 %v1863
    %v2017 = vunpack.c.h.b16 %v1863
    %v2018 = vunpack.c.l.b16 %v1864
    %v2019 = vunpack.c.h.b16 %v1864
    %v2020 = vunpack.c.l.b16 %v1865
    %v2021 = vunpack.c.h.b16 %v1865
    %v2022 = vunpack.c.l.b16 %v1866
    %v2023 = vunpack.c.h.b16 %v1866
    %v2024 = vunpack.c.l.b16 %v1867
    %v2025 = vunpack.c.h.b16 %v1867
    %v2026 = vunpack.c.l.b16 %v1868
    %v2027 = vunpack.c.h.b16 %v1868
    %v2028 = vunpack.c.l.b16 %v1869
    %v2029 = vunpack.c.h.b16 %v1869
    %v2030 = vunpack.c.l.b16 %v1870
    %v2031 = vunpack.c.h.b16 %v1870
    %v2032 = vunpack.c.l.b16 %v1871
    %v2033 = vunpack.c.h.b16 %v1871
    %v2034 = vunpack.c.l.b16 %v1872
    %v2035 = vunpack.c.h.b16 %v1872
    %v2036 = vunpack.c.l.b16 %v1873
    %v2037 = vunpack.c.h.b16 %v1873
    %v2038 = vunpack.c.l.b16 %v1874
    %v2039 = vunpack.c.h.b16 %v1874
    %v2040 = vunpack.c.l.b16 %v1875
    %v2041 = vunpack.c.h.b16 %v1875
    %v2042 = vunpack.c.l.b16 %v1876
    %v2043 = vunpack.c.h.b16 %v1876
    %v2044 = vunpack.c.l.b16 %v1877
    %v2045 = vunpack.c.h.b16 %v1877
    %v2046 = vunpack.c.l.b16 %v1878
    %v2047 = vunpack.c.h.b16 %v1878
    %v2048 = vunpack.c.l.b16 %v1879
    %v2049 = vunpack.c.h.b16 %v1879
    %v2050 = vunpack.c.l.b16 %v1880
    %v2051 = vunpack.c.h.b16 %v1880
    %v2052 = vunpack.c.l.b16 %v1881
    %v2053 = vunpack.c.h.b16 %v1881
    %v2054 = vunpack.c.l.b16 %v1882
    %v2055 = vunpack.c.h.b16 %v1882
    %v2056 = vunpack.c.l.b16 %v1883
    %v2057 = vunpack.c.h.b16 %v1883
    %v2058 = vunpack.c.l.b16 %v1884
    %v2059 = vunpack.c.h.b16 %v1884
    %v2060 = vunpack.c.l.b16 %v1885
    %v2061 = vunpack.c.h.b16 %v1885
    %v2062 = vunpack.c.l.b16 %v1886
    %v2063 = vunpack.c.h.b16 %v1886
    %v2064 = vunpack.c.l.b16 %v1887
    %v2065 = vunpack.c.h.b16 %v1887
    %v2066 = vunpack.c.l.b16 %v1888
    %v2067 = vunpack.c.h.b16 %v1888
    %v2068 = vunpack.c.l.b16 %v1889
    %v2069 = vunpack.c.h.b16 %v1889
    %v2070 = vunpack.c.l.b16 %v1890
    %v2071 = vunpack.c.h.b16 %v1890
    %v2072 = vunpack.c.l.b16 %v1891
    %v2073 = vunpack.c.h.b16 %v1891
    %v2074 = vunpack.c.l.b16 %v1892
    %v2075 = vunpack.c.h.b16 %v1892
    %v2076 = vunpack.c.l.b16 %v1893
    %v2077 = vunpack.c.h.b16 %v1893
    %v2078 = vunpack.c.l.b16 %v1894
    %v2079 = vunpack.c.h.b16 %v1894
    %v2080 = vunpack.c.l.b16 %v1895
    %v2081 = vunpack.c.h.b16 %v1895
    %v2082 = vunpack.c.l.b16 %v1896
    %v2083 = vunpack.c.h.b16 %v1896
    %v2084 = vunpack.c.l.b16 %v1897
    %v2085 = vunpack.c.h.b16 %v1897
    %v2086 = vunpack.c.l.b16 %v1898
    %v2087 = vunpack.c.h.b16 %v1898
    %v2088 = vunpack.c.l.b16 %v1899
    %v2089 = vunpack.c.h.b16 %v1899
    %v2090 = vunpack.c.l.b16 %v1900
    %v2091 = vunpack.c.h.b16 %v1900
    %v2092 = vunpack.c.l.b16 %v1901
    %v2093 = vunpack.c.h.b16 %v1901
    %v2094 = vpack.c.b16 %v1970, %v1966
    %v2095 = vpack.c.b16 %v1971, %v1967
    %v2096 = vpack.c.b16 %v1972, %v1968
    %v2097 = vpack.c.b16 %v1973, %v1969
    %v2098 = vpack.c.b16 %v1978, %v1974
    %v2099 = vpack.c.b16 %v1979, %v1975
    %v2100 = vpack.c.b16 %v1980, %v1976
    %v2101 = vpack.c.b16 %v1981, %v1977
    %v2102 = vpack.c.b16 %v1986, %v1982
    %v2103 = vpack.c.b16 %v1987, %v1983
    %v2104 = vpack.c.b16 %v1988, %v1984
    %v2105 = vpack.c.b16 %v1989, %v1985
    %v2106 = vpack.c.b16 %v1994, %v1990
    %v2107 = vpack.c.b16 %v1995, %v1991
    %v2108 = vpack.c.b16 %v1996, %v1992
    %v2109 = vpack.c.b16 %v1997, %v1993
    %v2110 = vpack.c.b16 %v2002, %v1998
    %v2111 = vpack.c.b16 %v2003, %v1999
    %v2112 = vpack.c.b16 %v2004, %v2000
    %v2113 = vpack.c.b16 %v2005, %v2001
    %v2114 = vpack.c.b16 %v2010, %v2006
    %v2115 = vpack.c.b16 %v2011, %v2007
    %v2116 = vpack.c.b16 %v2012, %v2008
    %v2117 = vpack.c.b16 %v2013, %v2009
    %v2118 = vpack.c.b16 %v2018, %v2014
    %v2119 = vpack.c.b16 %v2019, %v2015
    %v2120 = vpack.c.b16 %v2020, %v2016
    %v2121 = vpack.c.b16 %v2021, %v2017
    %v2122 = vpack.c.b16 %v2026, %v2022
    %v2123 = vpack.c.b16 %v2027, %v2023
    %v2124 = vpack.c.b16 %v2028, %v2024
    %v2125 = vpack.c.b16 %v2029, %v2025
    %v2126 = vpack.c.b16 %v2034, %v2030
    %v2127 = vpack.c.b16 %v2035, %v2031
    %v2128 = vpack.c.b16 %v2036, %v2032
    %v2129 = vpack.c.b16 %v2037, %v2033
    %v2130 = vpack.c.b16 %v2042, %v2038
    %v2131 = vpack.c.b16 %v2043, %v2039
    %v2132 = vpack.c.b16 %v2044, %v2040
    %v2133 = vpack.c.b16 %v2045, %v2041
    %v2134 = vpack.c.b16 %v2050, %v2046
    %v2135 = vpack.c.b16 %v2051, %v2047
    %v2136 = vpack.c.b16 %v2052, %v2048
    %v2137 = vpack.c.b16 %v2053, %v2049
    %v2138 = vpack.c.b16 %v2058, %v2054
    %v2139 = vpack.c.b16 %v2059, %v2055
    %v2140 = vpack.c.b16 %v2060, %v2056
    %v2141 = vpack.c.b16 %v2061, %v2057
    %v2142 = vpack.c.b16 %v2066, %v2062
    %v2143 = vpack.c.b16 %v2067, %v2063
    %v2144 = vpack.c.b16 %v2068, %v2064
    %v2145 = vpack.c.b16 %v2069, %v2065
    %v2146 = vpack.c.b16 %v2074, %v2070
    %v2147 = vpack.c.b16 %v2075, %v2071
    %v2148 = vpack.c.b16 %v2076, %v2072
    %v2149 = vpack.c.b16 %v2077, %v2073
    %v2150 = vpack.c.b16 %v2082, %v2078
    %v2151 = vpack.c.b16 %v2083, %v2079
    %v2152 = vpack.c.b16 %v2084, %v2080
    %v2153 = vpack.c.b16 %v2085, %v2081
    %v2154 = vpack.c.b16 %v2090, %v2086
    %v2155 = vpack.c.b16 %v2091, %v2087
    %v2156 = vpack.c.b16 %v2092, %v2088
    %v2157 = vpack.c.b16 %v2093, %v2089
    %2222 = vmatpush.bf16.msra.mxu0 %v2122
    %2223 = vmatpush.bf16.msra.mxu0 %v2118
    %2224 = vmatpush.bf16.msra.mxu0 %v2114
    %2225 = vmatpush.bf16.msra.mxu0 %v2110
    %2226 = vmatpush.bf16.msra.mxu0 %v2106
    %2227 = vmatpush.bf16.msra.mxu0 %v2102
    %2228 = vmatpush.bf16.msra.mxu0 %v2098
    %2229 = vmatpush.bf16.msra.mxu0 %v2094
    %2230 = vmatmul.bf16.gmra.mxu0 %v1806
    %v2231 = vpop.f32.mrf.mxu0
    %v2232 = vadd.f32 0.0, %v2231
    %v2233 = vpop.f32.mrf.mxu0
    %v2234 = vadd.f32 0.0, %v2233
    %2235 = vmatmul.bf16.gmra.mxu0 %v1808
    %v2236 = vpop.f32.mrf.mxu0
    %v2237 = vadd.f32 0.0, %v2236
    %v2238 = vpop.f32.mrf.mxu0
    %v2239 = vadd.f32 0.0, %v2238
    %2240 = vmatmul.bf16.gmra.mxu0 %v1810
    %v2241 = vpop.f32.mrf.mxu0
    %v2242 = vadd.f32 0.0, %v2241
    %v2243 = vpop.f32.mrf.mxu0
    %v2244 = vadd.f32 0.0, %v2243
    %2245 = vmatmul.bf16.gmra.mxu0 %v1812
    %v2246 = vpop.f32.mrf.mxu0
    %v2247 = vadd.f32 0.0, %v2246
    %v2248 = vpop.f32.mrf.mxu0
    %v2249 = vadd.f32 0.0, %v2248
    %2250 = vmatmul.bf16.gmra.mxu0 %v1814
    %v2251 = vpop.f32.mrf.mxu0
    %v2252 = vadd.f32 0.0, %v2251
    %v2253 = vpop.f32.mrf.mxu0
    %v2254 = vadd.f32 0.0, %v2253
    %2255 = vmatmul.bf16.gmra.mxu0 %v1816
    %v2256 = vpop.f32.mrf.mxu0
    %v2257 = vadd.f32 0.0, %v2256
    %v2258 = vpop.f32.mrf.mxu0
    %v2259 = vadd.f32 0.0, %v2258
    %2260 = vmatmul.bf16.gmra.mxu0 %v1818
    %v2261 = vpop.f32.mrf.mxu0
    %v2262 = vadd.f32 0.0, %v2261
    %v2263 = vpop.f32.mrf.mxu0
    %v2264 = vadd.f32 0.0, %v2263
    %2265 = vmatmul.bf16.gmra.mxu0 %v1820
    %v2266 = vpop.f32.mrf.mxu0
    %v2267 = vadd.f32 0.0, %v2266
    %v2268 = vpop.f32.mrf.mxu0
    %v2269 = vadd.f32 0.0, %v2268
    %2270 = vmatmul.bf16.gmra.mxu0 %v1822
    %v2271 = vpop.f32.mrf.mxu0
    %v2272 = vadd.f32 0.0, %v2271
    %v2273 = vpop.f32.mrf.mxu0
    %v2274 = vadd.f32 0.0, %v2273
    %2275 = vmatmul.bf16.gmra.mxu0 %v1824
    %v2276 = vpop.f32.mrf.mxu0
    %v2277 = vadd.f32 0.0, %v2276
    %v2278 = vpop.f32.mrf.mxu0
    %v2279 = vadd.f32 0.0, %v2278
    %2280 = vmatmul.bf16.gmra.mxu0 %v1826
    %v2281 = vpop.f32.mrf.mxu0
    %v2282 = vadd.f32 0.0, %v2281
    %v2283 = vpop.f32.mrf.mxu0
    %v2284 = vadd.f32 0.0, %v2283
    %2285 = vmatmul.bf16.gmra.mxu0 %v1828
    %v2286 = vpop.f32.mrf.mxu0
    %v2287 = vadd.f32 0.0, %v2286
    %v2288 = vpop.f32.mrf.mxu0
    %v2289 = vadd.f32 0.0, %v2288
    %2290 = vmatmul.bf16.gmra.mxu0 %v1830
    %v2291 = vpop.f32.mrf.mxu0
    %v2292 = vadd.f32 0.0, %v2291
    %v2293 = vpop.f32.mrf.mxu0
    %v2294 = vadd.f32 0.0, %v2293
    %2295 = vmatmul.bf16.gmra.mxu0 %v1832
    %v2296 = vpop.f32.mrf.mxu0
    %v2297 = vadd.f32 0.0, %v2296
    %v2298 = vpop.f32.mrf.mxu0
    %v2299 = vadd.f32 0.0, %v2298
    %2300 = vmatmul.bf16.gmra.mxu0 %v1834
    %v2301 = vpop.f32.mrf.mxu0
    %v2302 = vadd.f32 0.0, %v2301
    %v2303 = vpop.f32.mrf.mxu0
    %v2304 = vadd.f32 0.0, %v2303
    %2305 = vmatmul.bf16.gmra.mxu0 %v1836
    %v2306 = vpop.f32.mrf.mxu0
    %v2307 = vadd.f32 0.0, %v2306
    %v2308 = vpop.f32.mrf.mxu0
    %v2309 = vadd.f32 0.0, %v2308
    %2310 = vdwg.mxu0
    %2311 = vmatpush.bf16.msra.mxu0 %v2154
    %2312 = vmatpush.bf16.msra.mxu0 %v2150
    %2313 = vmatpush.bf16.msra.mxu0 %v2146
    %2314 = vmatpush.bf16.msra.mxu0 %v2142
    %2315 = vmatpush.bf16.msra.mxu0 %v2138
    %2316 = vmatpush.bf16.msra.mxu0 %v2134
    %2317 = vmatpush.bf16.msra.mxu0 %v2130
    %2318 = vmatpush.bf16.msra.mxu0 %v2126
    %2319 = vmatmul.bf16.gmra.mxu0 %v1807
    %v2320 = vpop.f32.mrf.mxu0
    %v2321 = vadd.f32 %v2232, %v2320
    %v2322 = vpop.f32.mrf.mxu0
    %v2323 = vadd.f32 %v2234, %v2322
    %2324 = vmatmul.bf16.gmra.mxu0 %v1809
    %v2325 = vpop.f32.mrf.mxu0
    %v2326 = vadd.f32 %v2237, %v2325
    %v2327 = vpop.f32.mrf.mxu0
    %v2328 = vadd.f32 %v2239, %v2327
    %2329 = vmatmul.bf16.gmra.mxu0 %v1811
    %v2330 = vpop.f32.mrf.mxu0
    %v2331 = vadd.f32 %v2242, %v2330
    %v2332 = vpop.f32.mrf.mxu0
    %v2333 = vadd.f32 %v2244, %v2332
    %2334 = vmatmul.bf16.gmra.mxu0 %v1813
    %v2335 = vpop.f32.mrf.mxu0
    %v2336 = vadd.f32 %v2247, %v2335
    %v2337 = vpop.f32.mrf.mxu0
    %v2338 = vadd.f32 %v2249, %v2337
    %2339 = vmatmul.bf16.gmra.mxu0 %v1815
    %v2340 = vpop.f32.mrf.mxu0
    %v2341 = vadd.f32 %v2252, %v2340
    %v2342 = vpop.f32.mrf.mxu0
    %v2343 = vadd.f32 %v2254, %v2342
    %2344 = vmatmul.bf16.gmra.mxu0 %v1817
    %v2345 = vpop.f32.mrf.mxu0
    %v2346 = vadd.f32 %v2257, %v2345
    %v2347 = vpop.f32.mrf.mxu0
    %v2348 = vadd.f32 %v2259, %v2347
    %2349 = vmatmul.bf16.gmra.mxu0 %v1819
    %v2350 = vpop.f32.mrf.mxu0
    %v2351 = vadd.f32 %v2262, %v2350
    %v2352 = vpop.f32.mrf.mxu0
    %v2353 = vadd.f32 %v2264, %v2352
    %2354 = vmatmul.bf16.gmra.mxu0 %v1821
    %v2355 = vpop.f32.mrf.mxu0
    %v2356 = vadd.f32 %v2267, %v2355
    %v2357 = vpop.f32.mrf.mxu0
    %v2358 = vadd.f32 %v2269, %v2357
    %2359 = vmatmul.bf16.gmra.mxu0 %v1823
    %v2360 = vpop.f32.mrf.mxu0
    %v2361 = vadd.f32 %v2272, %v2360
    %v2362 = vpop.f32.mrf.mxu0
    %v2363 = vadd.f32 %v2274, %v2362
    %2364 = vmatmul.bf16.gmra.mxu0 %v1825
    %v2365 = vpop.f32.mrf.mxu0
    %v2366 = vadd.f32 %v2277, %v2365
    %v2367 = vpop.f32.mrf.mxu0
    %v2368 = vadd.f32 %v2279, %v2367
    %2369 = vmatmul.bf16.gmra.mxu0 %v1827
    %v2370 = vpop.f32.mrf.mxu0
    %v2371 = vadd.f32 %v2282, %v2370
    %v2372 = vpop.f32.mrf.mxu0
    %v2373 = vadd.f32 %v2284, %v2372
    %2374 = vmatmul.bf16.gmra.mxu0 %v1829
    %v2375 = vpop.f32.mrf.mxu0
    %v2376 = vadd.f32 %v2287, %v2375
    %v2377 = vpop.f32.mrf.mxu0
    %v2378 = vadd.f32 %v2289, %v2377
    %2379 = vmatmul.bf16.gmra.mxu0 %v1831
    %v2380 = vpop.f32.mrf.mxu0
    %v2381 = vadd.f32 %v2292, %v2380
    %v2382 = vpop.f32.mrf.mxu0
    %v2383 = vadd.f32 %v2294, %v2382
    %2384 = vmatmul.bf16.gmra.mxu0 %v1833
    %v2385 = vpop.f32.mrf.mxu0
    %v2386 = vadd.f32 %v2297, %v2385
    %v2387 = vpop.f32.mrf.mxu0
    %v2388 = vadd.f32 %v2299, %v2387
    %2389 = vmatmul.bf16.gmra.mxu0 %v1835
    %v2390 = vpop.f32.mrf.mxu0
    %v2391 = vadd.f32 %v2302, %v2390
    %v2392 = vpop.f32.mrf.mxu0
    %v2393 = vadd.f32 %v2304, %v2392
    %2394 = vmatmul.bf16.gmra.mxu0 %v1837
    %v2395 = vpop.f32.mrf.mxu0
    %v2396 = vadd.f32 %v2307, %v2395
    %v2397 = vpop.f32.mrf.mxu0
    %v2398 = vadd.f32 %v2309, %v2397
    %2399 = vdwg.mxu0
    %2400 = vmatpush.bf16.msra.mxu0 %v2123
    %2401 = vmatpush.bf16.msra.mxu0 %v2119
    %2402 = vmatpush.bf16.msra.mxu0 %v2115
    %2403 = vmatpush.bf16.msra.mxu0 %v2111
    %2404 = vmatpush.bf16.msra.mxu0 %v2107
    %2405 = vmatpush.bf16.msra.mxu0 %v2103
    %2406 = vmatpush.bf16.msra.mxu0 %v2099
    %2407 = vmatpush.bf16.msra.mxu0 %v2095
    %2408 = vmatmul.bf16.gmra.mxu0 %v1806
    %v2409 = vpop.f32.mrf.mxu0
    %v2410 = vadd.f32 0.0, %v2409
    %v2411 = vpop.f32.mrf.mxu0
    %v2412 = vadd.f32 0.0, %v2411
    %2413 = vmatmul.bf16.gmra.mxu0 %v1808
    %v2414 = vpop.f32.mrf.mxu0
    %v2415 = vadd.f32 0.0, %v2414
    %v2416 = vpop.f32.mrf.mxu0
    %v2417 = vadd.f32 0.0, %v2416
    %2418 = vmatmul.bf16.gmra.mxu0 %v1810
    %v2419 = vpop.f32.mrf.mxu0
    %v2420 = vadd.f32 0.0, %v2419
    %v2421 = vpop.f32.mrf.mxu0
    %v2422 = vadd.f32 0.0, %v2421
    %2423 = vmatmul.bf16.gmra.mxu0 %v1812
    %v2424 = vpop.f32.mrf.mxu0
    %v2425 = vadd.f32 0.0, %v2424
    %v2426 = vpop.f32.mrf.mxu0
    %v2427 = vadd.f32 0.0, %v2426
    %2428 = vmatmul.bf16.gmra.mxu0 %v1814
    %v2429 = vpop.f32.mrf.mxu0
    %v2430 = vadd.f32 0.0, %v2429
    %v2431 = vpop.f32.mrf.mxu0
    %v2432 = vadd.f32 0.0, %v2431
    %2433 = vmatmul.bf16.gmra.mxu0 %v1816
    %v2434 = vpop.f32.mrf.mxu0
    %v2435 = vadd.f32 0.0, %v2434
    %v2436 = vpop.f32.mrf.mxu0
    %v2437 = vadd.f32 0.0, %v2436
    %2438 = vmatmul.bf16.gmra.mxu0 %v1818
    %v2439 = vpop.f32.mrf.mxu0
    %v2440 = vadd.f32 0.0, %v2439
    %v2441 = vpop.f32.mrf.mxu0
    %v2442 = vadd.f32 0.0, %v2441
    %2443 = vmatmul.bf16.gmra.mxu0 %v1820
    %v2444 = vpop.f32.mrf.mxu0
    %v2445 = vadd.f32 0.0, %v2444
    %v2446 = vpop.f32.mrf.mxu0
    %v2447 = vadd.f32 0.0, %v2446
    %2448 = vmatmul.bf16.gmra.mxu0 %v1822
    %v2449 = vpop.f32.mrf.mxu0
    %v2450 = vadd.f32 0.0, %v2449
    %v2451 = vpop.f32.mrf.mxu0
    %v2452 = vadd.f32 0.0, %v2451
    %2453 = vmatmul.bf16.gmra.mxu0 %v1824
    %v2454 = vpop.f32.mrf.mxu0
    %v2455 = vadd.f32 0.0, %v2454
    %v2456 = vpop.f32.mrf.mxu0
    %v2457 = vadd.f32 0.0, %v2456
    %2458 = vmatmul.bf16.gmra.mxu0 %v1826
    %v2459 = vpop.f32.mrf.mxu0
    %v2460 = vadd.f32 0.0, %v2459
    %v2461 = vpop.f32.mrf.mxu0
    %v2462 = vadd.f32 0.0, %v2461
    %2463 = vmatmul.bf16.gmra.mxu0 %v1828
    %v2464 = vpop.f32.mrf.mxu0
    %v2465 = vadd.f32 0.0, %v2464
    %v2466 = vpop.f32.mrf.mxu0
    %v2467 = vadd.f32 0.0, %v2466
    %2468 = vmatmul.bf16.gmra.mxu0 %v1830
    %v2469 = vpop.f32.mrf.mxu0
    %v2470 = vadd.f32 0.0, %v2469
    %v2471 = vpop.f32.mrf.mxu0
    %v2472 = vadd.f32 0.0, %v2471
    %2473 = vmatmul.bf16.gmra.mxu0 %v1832
    %v2474 = vpop.f32.mrf.mxu0
    %v2475 = vadd.f32 0.0, %v2474
    %v2476 = vpop.f32.mrf.mxu0
    %v2477 = vadd.f32 0.0, %v2476
    %2478 = vmatmul.bf16.gmra.mxu0 %v1834
    %v2479 = vpop.f32.mrf.mxu0
    %v2480 = vadd.f32 0.0, %v2479
    %v2481 = vpop.f32.mrf.mxu0
    %v2482 = vadd.f32 0.0, %v2481
    %2483 = vmatmul.bf16.gmra.mxu0 %v1836
    %v2484 = vpop.f32.mrf.mxu0
    %v2485 = vadd.f32 0.0, %v2484
    %v2486 = vpop.f32.mrf.mxu0
    %v2487 = vadd.f32 0.0, %v2486
    %2488 = vdwg.mxu0
    %2489 = vmatpush.bf16.msra.mxu0 %v2155
    %2490 = vmatpush.bf16.msra.mxu0 %v2151
    %2491 = vmatpush.bf16.msra.mxu0 %v2147
    %2492 = vmatpush.bf16.msra.mxu0 %v2143
    %2493 = vmatpush.bf16.msra.mxu0 %v2139
    %2494 = vmatpush.bf16.msra.mxu0 %v2135
    %2495 = vmatpush.bf16.msra.mxu0 %v2131
    %2496 = vmatpush.bf16.msra.mxu0 %v2127
    %2497 = vmatmul.bf16.gmra.mxu0 %v1807
    %v2498 = vpop.f32.mrf.mxu0
    %v2499 = vadd.f32 %v2410, %v2498
    %v2500 = vpop.f32.mrf.mxu0
    %v2501 = vadd.f32 %v2412, %v2500
    %2502 = vmatmul.bf16.gmra.mxu0 %v1809
    %v2503 = vpop.f32.mrf.mxu0
    %v2504 = vadd.f32 %v2415, %v2503
    %v2505 = vpop.f32.mrf.mxu0
    %v2506 = vadd.f32 %v2417, %v2505
    %2507 = vmatmul.bf16.gmra.mxu0 %v1811
    %v2508 = vpop.f32.mrf.mxu0
    %v2509 = vadd.f32 %v2420, %v2508
    %v2510 = vpop.f32.mrf.mxu0
    %v2511 = vadd.f32 %v2422, %v2510
    %2512 = vmatmul.bf16.gmra.mxu0 %v1813
    %v2513 = vpop.f32.mrf.mxu0
    %v2514 = vadd.f32 %v2425, %v2513
    %v2515 = vpop.f32.mrf.mxu0
    %v2516 = vadd.f32 %v2427, %v2515
    %2517 = vmatmul.bf16.gmra.mxu0 %v1815
    %v2518 = vpop.f32.mrf.mxu0
    %v2519 = vadd.f32 %v2430, %v2518
    %v2520 = vpop.f32.mrf.mxu0
    %v2521 = vadd.f32 %v2432, %v2520
    %2522 = vmatmul.bf16.gmra.mxu0 %v1817
    %v2523 = vpop.f32.mrf.mxu0
    %v2524 = vadd.f32 %v2435, %v2523
    %v2525 = vpop.f32.mrf.mxu0
    %v2526 = vadd.f32 %v2437, %v2525
    %2527 = vmatmul.bf16.gmra.mxu0 %v1819
    %v2528 = vpop.f32.mrf.mxu0
    %v2529 = vadd.f32 %v2440, %v2528
    %v2530 = vpop.f32.mrf.mxu0
    %v2531 = vadd.f32 %v2442, %v2530
    %2532 = vmatmul.bf16.gmra.mxu0 %v1821
    %v2533 = vpop.f32.mrf.mxu0
    %v2534 = vadd.f32 %v2445, %v2533
    %v2535 = vpop.f32.mrf.mxu0
    %v2536 = vadd.f32 %v2447, %v2535
    %2537 = vmatmul.bf16.gmra.mxu0 %v1823
    %v2538 = vpop.f32.mrf.mxu0
    %v2539 = vadd.f32 %v2450, %v2538
    %v2540 = vpop.f32.mrf.mxu0
    %v2541 = vadd.f32 %v2452, %v2540
    %2542 = vmatmul.bf16.gmra.mxu0 %v1825
    %v2543 = vpop.f32.mrf.mxu0
    %v2544 = vadd.f32 %v2455, %v2543
    %v2545 = vpop.f32.mrf.mxu0
    %v2546 = vadd.f32 %v2457, %v2545
    %2547 = vmatmul.bf16.gmra.mxu0 %v1827
    %v2548 = vpop.f32.mrf.mxu0
    %v2549 = vadd.f32 %v2460, %v2548
    %v2550 = vpop.f32.mrf.mxu0
    %v2551 = vadd.f32 %v2462, %v2550
    %2552 = vmatmul.bf16.gmra.mxu0 %v1829
    %v2553 = vpop.f32.mrf.mxu0
    %v2554 = vadd.f32 %v2465, %v2553
    %v2555 = vpop.f32.mrf.mxu0
    %v2556 = vadd.f32 %v2467, %v2555
    %2557 = vmatmul.bf16.gmra.mxu0 %v1831
    %v2558 = vpop.f32.mrf.mxu0
    %v2559 = vadd.f32 %v2470, %v2558
    %v2560 = vpop.f32.mrf.mxu0
    %v2561 = vadd.f32 %v2472, %v2560
    %2562 = vmatmul.bf16.gmra.mxu0 %v1833
    %v2563 = vpop.f32.mrf.mxu0
    %v2564 = vadd.f32 %v2475, %v2563
    %v2565 = vpop.f32.mrf.mxu0
    %v2566 = vadd.f32 %v2477, %v2565
    %2567 = vmatmul.bf16.gmra.mxu0 %v1835
    %v2568 = vpop.f32.mrf.mxu0
    %v2569 = vadd.f32 %v2480, %v2568
    %v2570 = vpop.f32.mrf.mxu0
    %v2571 = vadd.f32 %v2482, %v2570
    %2572 = vmatmul.bf16.gmra.mxu0 %v1837
    %v2573 = vpop.f32.mrf.mxu0
    %v2574 = vadd.f32 %v2485, %v2573
    %v2575 = vpop.f32.mrf.mxu0
    %v2576 = vadd.f32 %v2487, %v2575
    %2577 = vdwg.mxu0
    %2578 = vmatpush.bf16.msra.mxu0 %v2124
    %2579 = vmatpush.bf16.msra.mxu0 %v2120
    %2580 = vmatpush.bf16.msra.mxu0 %v2116
    %2581 = vmatpush.bf16.msra.mxu0 %v2112
    %2582 = vmatpush.bf16.msra.mxu0 %v2108
    %2583 = vmatpush.bf16.msra.mxu0 %v2104
    %2584 = vmatpush.bf16.msra.mxu0 %v2100
    %2585 = vmatpush.bf16.msra.mxu0 %v2096
    %2586 = vmatmul.bf16.gmra.mxu0 %v1806
    %v2587 = vpop.f32.mrf.mxu0
    %v2588 = vadd.f32 0.0, %v2587
    %v2589 = vpop.f32.mrf.mxu0
    %v2590 = vadd.f32 0.0, %v2589
    %2591 = vmatmul.bf16.gmra.mxu0 %v1808
    %v2592 = vpop.f32.mrf.mxu0
    %v2593 = vadd.f32 0.0, %v2592
    %v2594 = vpop.f32.mrf.mxu0
    %v2595 = vadd.f32 0.0, %v2594
    %2596 = vmatmul.bf16.gmra.mxu0 %v1810
    %v2597 = vpop.f32.mrf.mxu0
    %v2598 = vadd.f32 0.0, %v2597
    %v2599 = vpop.f32.mrf.mxu0
    %v2600 = vadd.f32 0.0, %v2599
    %2601 = vmatmul.bf16.gmra.mxu0 %v1812
    %v2602 = vpop.f32.mrf.mxu0
    %v2603 = vadd.f32 0.0, %v2602
    %v2604 = vpop.f32.mrf.mxu0
    %v2605 = vadd.f32 0.0, %v2604
    %2606 = vmatmul.bf16.gmra.mxu0 %v1814
    %v2607 = vpop.f32.mrf.mxu0
    %v2608 = vadd.f32 0.0, %v2607
    %v2609 = vpop.f32.mrf.mxu0
    %v2610 = vadd.f32 0.0, %v2609
    %2611 = vmatmul.bf16.gmra.mxu0 %v1816
    %v2612 = vpop.f32.mrf.mxu0
    %v2613 = vadd.f32 0.0, %v2612
    %v2614 = vpop.f32.mrf.mxu0
    %v2615 = vadd.f32 0.0, %v2614
    %2616 = vmatmul.bf16.gmra.mxu0 %v1818
    %v2617 = vpop.f32.mrf.mxu0
    %v2618 = vadd.f32 0.0, %v2617
    %v2619 = vpop.f32.mrf.mxu0
    %v2620 = vadd.f32 0.0, %v2619
    %2621 = vmatmul.bf16.gmra.mxu0 %v1820
    %v2622 = vpop.f32.mrf.mxu0
    %v2623 = vadd.f32 0.0, %v2622
    %v2624 = vpop.f32.mrf.mxu0
    %v2625 = vadd.f32 0.0, %v2624
    %2626 = vmatmul.bf16.gmra.mxu0 %v1822
    %v2627 = vpop.f32.mrf.mxu0
    %v2628 = vadd.f32 0.0, %v2627
    %v2629 = vpop.f32.mrf.mxu0
    %v2630 = vadd.f32 0.0, %v2629
    %2631 = vmatmul.bf16.gmra.mxu0 %v1824
    %v2632 = vpop.f32.mrf.mxu0
    %v2633 = vadd.f32 0.0, %v2632
    %v2634 = vpop.f32.mrf.mxu0
    %v2635 = vadd.f32 0.0, %v2634
    %2636 = vmatmul.bf16.gmra.mxu0 %v1826
    %v2637 = vpop.f32.mrf.mxu0
    %v2638 = vadd.f32 0.0, %v2637
    %v2639 = vpop.f32.mrf.mxu0
    %v2640 = vadd.f32 0.0, %v2639
    %2641 = vmatmul.bf16.gmra.mxu0 %v1828
    %v2642 = vpop.f32.mrf.mxu0
    %v2643 = vadd.f32 0.0, %v2642
    %v2644 = vpop.f32.mrf.mxu0
    %v2645 = vadd.f32 0.0, %v2644
    %2646 = vmatmul.bf16.gmra.mxu0 %v1830
    %v2647 = vpop.f32.mrf.mxu0
    %v2648 = vadd.f32 0.0, %v2647
    %v2649 = vpop.f32.mrf.mxu0
    %v2650 = vadd.f32 0.0, %v2649
    %2651 = vmatmul.bf16.gmra.mxu0 %v1832
    %v2652 = vpop.f32.mrf.mxu0
    %v2653 = vadd.f32 0.0, %v2652
    %v2654 = vpop.f32.mrf.mxu0
    %v2655 = vadd.f32 0.0, %v2654
    %2656 = vmatmul.bf16.gmra.mxu0 %v1834
    %v2657 = vpop.f32.mrf.mxu0
    %v2658 = vadd.f32 0.0, %v2657
    %v2659 = vpop.f32.mrf.mxu0
    %v2660 = vadd.f32 0.0, %v2659
    %2661 = vmatmul.bf16.gmra.mxu0 %v1836
    %v2662 = vpop.f32.mrf.mxu0
    %v2663 = vadd.f32 0.0, %v2662
    %v2664 = vpop.f32.mrf.mxu0
    %v2665 = vadd.f32 0.0, %v2664
    %2666 = vdwg.mxu0
    %2667 = vmatpush.bf16.msra.mxu0 %v2156
    %2668 = vmatpush.bf16.msra.mxu0 %v2152
    %2669 = vmatpush.bf16.msra.mxu0 %v2148
    %2670 = vmatpush.bf16.msra.mxu0 %v2144
    %2671 = vmatpush.bf16.msra.mxu0 %v2140
    %2672 = vmatpush.bf16.msra.mxu0 %v2136
    %2673 = vmatpush.bf16.msra.mxu0 %v2132
    %2674 = vmatpush.bf16.msra.mxu0 %v2128
    %2675 = vmatmul.bf16.gmra.mxu0 %v1807
    %v2676 = vpop.f32.mrf.mxu0
    %v2677 = vadd.f32 %v2588, %v2676
    %v2678 = vpop.f32.mrf.mxu0
    %v2679 = vadd.f32 %v2590, %v2678
    %2680 = vmatmul.bf16.gmra.mxu0 %v1809
    %v2681 = vpop.f32.mrf.mxu0
    %v2682 = vadd.f32 %v2593, %v2681
    %v2683 = vpop.f32.mrf.mxu0
    %v2684 = vadd.f32 %v2595, %v2683
    %2685 = vmatmul.bf16.gmra.mxu0 %v1811
    %v2686 = vpop.f32.mrf.mxu0
    %v2687 = vadd.f32 %v2598, %v2686
    %v2688 = vpop.f32.mrf.mxu0
    %v2689 = vadd.f32 %v2600, %v2688
    %2690 = vmatmul.bf16.gmra.mxu0 %v1813
    %v2691 = vpop.f32.mrf.mxu0
    %v2692 = vadd.f32 %v2603, %v2691
    %v2693 = vpop.f32.mrf.mxu0
    %v2694 = vadd.f32 %v2605, %v2693
    %2695 = vmatmul.bf16.gmra.mxu0 %v1815
    %v2696 = vpop.f32.mrf.mxu0
    %v2697 = vadd.f32 %v2608, %v2696
    %v2698 = vpop.f32.mrf.mxu0
    %v2699 = vadd.f32 %v2610, %v2698
    %2700 = vmatmul.bf16.gmra.mxu0 %v1817
    %v2701 = vpop.f32.mrf.mxu0
    %v2702 = vadd.f32 %v2613, %v2701
    %v2703 = vpop.f32.mrf.mxu0
    %v2704 = vadd.f32 %v2615, %v2703
    %2705 = vmatmul.bf16.gmra.mxu0 %v1819
    %v2706 = vpop.f32.mrf.mxu0
    %v2707 = vadd.f32 %v2618, %v2706
    %v2708 = vpop.f32.mrf.mxu0
    %v2709 = vadd.f32 %v2620, %v2708
    %2710 = vmatmul.bf16.gmra.mxu0 %v1821
    %v2711 = vpop.f32.mrf.mxu0
    %v2712 = vadd.f32 %v2623, %v2711
    %v2713 = vpop.f32.mrf.mxu0
    %v2714 = vadd.f32 %v2625, %v2713
    %2715 = vmatmul.bf16.gmra.mxu0 %v1823
    %v2716 = vpop.f32.mrf.mxu0
    %v2717 = vadd.f32 %v2628, %v2716
    %v2718 = vpop.f32.mrf.mxu0
    %v2719 = vadd.f32 %v2630, %v2718
    %2720 = vmatmul.bf16.gmra.mxu0 %v1825
    %v2721 = vpop.f32.mrf.mxu0
    %v2722 = vadd.f32 %v2633, %v2721
    %v2723 = vpop.f32.mrf.mxu0
    %v2724 = vadd.f32 %v2635, %v2723
    %2725 = vmatmul.bf16.gmra.mxu0 %v1827
    %v2726 = vpop.f32.mrf.mxu0
    %v2727 = vadd.f32 %v2638, %v2726
    %v2728 = vpop.f32.mrf.mxu0
    %v2729 = vadd.f32 %v2640, %v2728
    %2730 = vmatmul.bf16.gmra.mxu0 %v1829
    %v2731 = vpop.f32.mrf.mxu0
    %v2732 = vadd.f32 %v2643, %v2731
    %v2733 = vpop.f32.mrf.mxu0
    %v2734 = vadd.f32 %v2645, %v2733
    %2735 = vmatmul.bf16.gmra.mxu0 %v1831
    %v2736 = vpop.f32.mrf.mxu0
    %v2737 = vadd.f32 %v2648, %v2736
    %v2738 = vpop.f32.mrf.mxu0
    %v2739 = vadd.f32 %v2650, %v2738
    %2740 = vmatmul.bf16.gmra.mxu0 %v1833
    %v2741 = vpop.f32.mrf.mxu0
    %v2742 = vadd.f32 %v2653, %v2741
    %v2743 = vpop.f32.mrf.mxu0
    %v2744 = vadd.f32 %v2655, %v2743
    %2745 = vmatmul.bf16.gmra.mxu0 %v1835
    %v2746 = vpop.f32.mrf.mxu0
    %v2747 = vadd.f32 %v2658, %v2746
    %v2748 = vpop.f32.mrf.mxu0
    %v2749 = vadd.f32 %v2660, %v2748
    %2750 = vmatmul.bf16.gmra.mxu0 %v1837
    %v2751 = vpop.f32.mrf.mxu0
    %v2752 = vadd.f32 %v2663, %v2751
    %v2753 = vpop.f32.mrf.mxu0
    %v2754 = vadd.f32 %v2665, %v2753
    %2755 = vdwg.mxu0
    %2756 = vmatpush.bf16.msra.mxu0 %v2125
    %2757 = vmatpush.bf16.msra.mxu0 %v2121
    %2758 = vmatpush.bf16.msra.mxu0 %v2117
    %2759 = vmatpush.bf16.msra.mxu0 %v2113
    %2760 = vmatpush.bf16.msra.mxu0 %v2109
    %2761 = vmatpush.bf16.msra.mxu0 %v2105
    %2762 = vmatpush.bf16.msra.mxu0 %v2101
    %2763 = vmatpush.bf16.msra.mxu0 %v2097
    %2764 = vmatmul.bf16.gmra.mxu0 %v1806
    %v2765 = vpop.f32.mrf.mxu0
    %v2766 = vadd.f32 0.0, %v2765
    %v2767 = vpop.f32.mrf.mxu0
    %v2768 = vadd.f32 0.0, %v2767
    %2769 = vmatmul.bf16.gmra.mxu0 %v1808
    %v2770 = vpop.f32.mrf.mxu0
    %v2771 = vadd.f32 0.0, %v2770
    %v2772 = vpop.f32.mrf.mxu0
    %v2773 = vadd.f32 0.0, %v2772
    %2774 = vmatmul.bf16.gmra.mxu0 %v1810
    %v2775 = vpop.f32.mrf.mxu0
    %v2776 = vadd.f32 0.0, %v2775
    %v2777 = vpop.f32.mrf.mxu0
    %v2778 = vadd.f32 0.0, %v2777
    %2779 = vmatmul.bf16.gmra.mxu0 %v1812
    %v2780 = vpop.f32.mrf.mxu0
    %v2781 = vadd.f32 0.0, %v2780
    %v2782 = vpop.f32.mrf.mxu0
    %v2783 = vadd.f32 0.0, %v2782
    %2784 = vmatmul.bf16.gmra.mxu0 %v1814
    %v2785 = vpop.f32.mrf.mxu0
    %v2786 = vadd.f32 0.0, %v2785
    %v2787 = vpop.f32.mrf.mxu0
    %v2788 = vadd.f32 0.0, %v2787
    %2789 = vmatmul.bf16.gmra.mxu0 %v1816
    %v2790 = vpop.f32.mrf.mxu0
    %v2791 = vadd.f32 0.0, %v2790
    %v2792 = vpop.f32.mrf.mxu0
    %v2793 = vadd.f32 0.0, %v2792
    %2794 = vmatmul.bf16.gmra.mxu0 %v1818
    %v2795 = vpop.f32.mrf.mxu0
    %v2796 = vadd.f32 0.0, %v2795
    %v2797 = vpop.f32.mrf.mxu0
    %v2798 = vadd.f32 0.0, %v2797
    %2799 = vmatmul.bf16.gmra.mxu0 %v1820
    %v2800 = vpop.f32.mrf.mxu0
    %v2801 = vadd.f32 0.0, %v2800
    %v2802 = vpop.f32.mrf.mxu0
    %v2803 = vadd.f32 0.0, %v2802
    %2804 = vmatmul.bf16.gmra.mxu0 %v1822
    %v2805 = vpop.f32.mrf.mxu0
    %v2806 = vadd.f32 0.0, %v2805
    %v2807 = vpop.f32.mrf.mxu0
    %v2808 = vadd.f32 0.0, %v2807
    %2809 = vmatmul.bf16.gmra.mxu0 %v1824
    %v2810 = vpop.f32.mrf.mxu0
    %v2811 = vadd.f32 0.0, %v2810
    %v2812 = vpop.f32.mrf.mxu0
    %v2813 = vadd.f32 0.0, %v2812
    %2814 = vmatmul.bf16.gmra.mxu0 %v1826
    %v2815 = vpop.f32.mrf.mxu0
    %v2816 = vadd.f32 0.0, %v2815
    %v2817 = vpop.f32.mrf.mxu0
    %v2818 = vadd.f32 0.0, %v2817
    %2819 = vmatmul.bf16.gmra.mxu0 %v1828
    %v2820 = vpop.f32.mrf.mxu0
    %v2821 = vadd.f32 0.0, %v2820
    %v2822 = vpop.f32.mrf.mxu0
    %v2823 = vadd.f32 0.0, %v2822
    %2824 = vmatmul.bf16.gmra.mxu0 %v1830
    %v2825 = vpop.f32.mrf.mxu0
    %v2826 = vadd.f32 0.0, %v2825
    %v2827 = vpop.f32.mrf.mxu0
    %v2828 = vadd.f32 0.0, %v2827
    %2829 = vmatmul.bf16.gmra.mxu0 %v1832
    %v2830 = vpop.f32.mrf.mxu0
    %v2831 = vadd.f32 0.0, %v2830
    %v2832 = vpop.f32.mrf.mxu0
    %v2833 = vadd.f32 0.0, %v2832
    %2834 = vmatmul.bf16.gmra.mxu0 %v1834
    %v2835 = vpop.f32.mrf.mxu0
    %v2836 = vadd.f32 0.0, %v2835
    %v2837 = vpop.f32.mrf.mxu0
    %v2838 = vadd.f32 0.0, %v2837
    %2839 = vmatmul.bf16.gmra.mxu0 %v1836
    %v2840 = vpop.f32.mrf.mxu0
    %v2841 = vadd.f32 0.0, %v2840
    %v2842 = vpop.f32.mrf.mxu0
    %v2843 = vadd.f32 0.0, %v2842
    %2844 = vdwg.mxu0
    %2845 = vmatpush.bf16.msra.mxu0 %v2157
    %2846 = vmatpush.bf16.msra.mxu0 %v2153
    %2847 = vmatpush.bf16.msra.mxu0 %v2149
    %2848 = vmatpush.bf16.msra.mxu0 %v2145
    %2849 = vmatpush.bf16.msra.mxu0 %v2141
    %2850 = vmatpush.bf16.msra.mxu0 %v2137
    %2851 = vmatpush.bf16.msra.mxu0 %v2133
    %2852 = vmatpush.bf16.msra.mxu0 %v2129
    %2853 = vmatmul.bf16.gmra.mxu0 %v1807
    %v2854 = vpop.f32.mrf.mxu0
    %v2855 = vadd.f32 %v2766, %v2854
    %v2856 = vpop.f32.mrf.mxu0
    %v2857 = vadd.f32 %v2768, %v2856
    %2858 = vmatmul.bf16.gmra.mxu0 %v1809
    %v2859 = vpop.f32.mrf.mxu0
    %v2860 = vadd.f32 %v2771, %v2859
    %v2861 = vpop.f32.mrf.mxu0
    %v2862 = vadd.f32 %v2773, %v2861
    %2863 = vmatmul.bf16.gmra.mxu0 %v1811
    %v2864 = vpop.f32.mrf.mxu0
    %v2865 = vadd.f32 %v2776, %v2864
    %v2866 = vpop.f32.mrf.mxu0
    %v2867 = vadd.f32 %v2778, %v2866
    %2868 = vmatmul.bf16.gmra.mxu0 %v1813
    %v2869 = vpop.f32.mrf.mxu0
    %v2870 = vadd.f32 %v2781, %v2869
    %v2871 = vpop.f32.mrf.mxu0
    %v2872 = vadd.f32 %v2783, %v2871
    %2873 = vmatmul.bf16.gmra.mxu0 %v1815
    %v2874 = vpop.f32.mrf.mxu0
    %v2875 = vadd.f32 %v2786, %v2874
    %v2876 = vpop.f32.mrf.mxu0
    %v2877 = vadd.f32 %v2788, %v2876
    %2878 = vmatmul.bf16.gmra.mxu0 %v1817
    %v2879 = vpop.f32.mrf.mxu0
    %v2880 = vadd.f32 %v2791, %v2879
    %v2881 = vpop.f32.mrf.mxu0
    %v2882 = vadd.f32 %v2793, %v2881
    %2883 = vmatmul.bf16.gmra.mxu0 %v1819
    %v2884 = vpop.f32.mrf.mxu0
    %v2885 = vadd.f32 %v2796, %v2884
    %v2886 = vpop.f32.mrf.mxu0
    %v2887 = vadd.f32 %v2798, %v2886
    %2888 = vmatmul.bf16.gmra.mxu0 %v1821
    %v2889 = vpop.f32.mrf.mxu0
    %v2890 = vadd.f32 %v2801, %v2889
    %v2891 = vpop.f32.mrf.mxu0
    %v2892 = vadd.f32 %v2803, %v2891
    %2893 = vmatmul.bf16.gmra.mxu0 %v1823
    %v2894 = vpop.f32.mrf.mxu0
    %v2895 = vadd.f32 %v2806, %v2894
    %v2896 = vpop.f32.mrf.mxu0
    %v2897 = vadd.f32 %v2808, %v2896
    %2898 = vmatmul.bf16.gmra.mxu0 %v1825
    %v2899 = vpop.f32.mrf.mxu0
    %v2900 = vadd.f32 %v2811, %v2899
    %v2901 = vpop.f32.mrf.mxu0
    %v2902 = vadd.f32 %v2813, %v2901
    %2903 = vmatmul.bf16.gmra.mxu0 %v1827
    %v2904 = vpop.f32.mrf.mxu0
    %v2905 = vadd.f32 %v2816, %v2904
    %v2906 = vpop.f32.mrf.mxu0
    %v2907 = vadd.f32 %v2818, %v2906
    %2908 = vmatmul.bf16.gmra.mxu0 %v1829
    %v2909 = vpop.f32.mrf.mxu0
    %v2910 = vadd.f32 %v2821, %v2909
    %v2911 = vpop.f32.mrf.mxu0
    %v2912 = vadd.f32 %v2823, %v2911
    %2913 = vmatmul.bf16.gmra.mxu0 %v1831
    %v2914 = vpop.f32.mrf.mxu0
    %v2915 = vadd.f32 %v2826, %v2914
    %v2916 = vpop.f32.mrf.mxu0
    %v2917 = vadd.f32 %v2828, %v2916
    %2918 = vmatmul.bf16.gmra.mxu0 %v1833
    %v2919 = vpop.f32.mrf.mxu0
    %v2920 = vadd.f32 %v2831, %v2919
    %v2921 = vpop.f32.mrf.mxu0
    %v2922 = vadd.f32 %v2833, %v2921
    %2923 = vmatmul.bf16.gmra.mxu0 %v1835
    %v2924 = vpop.f32.mrf.mxu0
    %v2925 = vadd.f32 %v2836, %v2924
    %v2926 = vpop.f32.mrf.mxu0
    %v2927 = vadd.f32 %v2838, %v2926
    %2928 = vmatmul.bf16.gmra.mxu0 %v1837
    %v2929 = vpop.f32.mrf.mxu0
    %v2930 = vadd.f32 %v2841, %v2929
    %v2931 = vpop.f32.mrf.mxu0
    %v2932 = vadd.f32 %v2843, %v2931
    %2933 = vdwg.mxu0
    %v2938 = vrot.slane %v1751, 7
    %v2939 = vrot.slane %v1777, 6
    %v2940 = vrot.slane %v1803, 5
    %vm2941 = vcmask 1040384
    %v2942 = vsel %vm2941, %v1725, %v2938
    %v2943 = vsel %vm1359, %v2939, %v2940
    %vm2944 = vcmask 1041408
    %v2945 = vsel %vm2944, %v2942, %v2943
    %v2946 = vsel %vm1357, %v1725, %v2938
    %v2947 = vsel %vm1361, %v2939, %v2940
    %vm2948 = vcmask 1042433
    %v2949 = vsel %vm2948, %v2946, %v2947
    %v2950 = vrot.slane %v2949, 1
    %v2951 = vsel %vm1359, %v1725, %v2938
    %v2952 = vsel %vm1363, %v2939, %v2940
    %vm2953 = vcmask 1043458
    %v2954 = vsel %vm2953, %v2951, %v2952
    %v2955 = vrot.slane %v2954, 2
    %v2956 = vsel %vm1361, %v1725, %v2938
    %v2957 = vsel %vm1365, %v2939, %v2940
    %vm2958 = vcmask 1044483
    %v2959 = vsel %vm2958, %v2956, %v2957
    %v2960 = vrot.slane %v2959, 3
    %v2961 = vsel %vm1363, %v1725, %v2938
    %v2962 = vsel %vm1367, %v2939, %v2940
    %vm2963 = vcmask 1045508
    %v2964 = vsel %vm2963, %v2961, %v2962
    %v2965 = vrot.slane %v2964, 4
    %v2966 = vsel %vm1365, %v1725, %v2938
    %vm2967 = vcmask 1046528
    %v2968 = vsel %vm2967, %v2940, %v2939
    %vm2969 = vcmask 1046533
    %v2970 = vsel %vm2969, %v2966, %v2968
    %v2971 = vrot.slane %v2970, 5
    %v2972 = vsel %vm1367, %v1725, %v2938
    %v2973 = vsel %vm2941, %v2939, %v2940
    %vm2974 = vcmask 1045504
    %v2975 = vsel %vm2974, %v2973, %v2972
    %v2976 = vrot.slane %v2975, 6
    %v2977 = vsel %vm2967, %v2938, %v1725
    %v2978 = vsel %vm1357, %v2939, %v2940
    %vm2979 = vcmask 1046529
    %v2980 = vsel %vm2979, %v2978, %v2977
    %v2981 = vrot.slane %v2980, 7
    %v2982 = vperm.slane %v2945, 0
    %v2983 = vperm.slane %v2945, 1
    %v2984 = vperm.slane %v2945, 2
    %v2985 = vperm.slane %v2945, 3
    %v2986 = vperm.slane %v2950, 0
    %v2987 = vperm.slane %v2950, 1
    %v2988 = vperm.slane %v2950, 2
    %v2989 = vperm.slane %v2950, 3
    %v2990 = vperm.slane %v2955, 0
    %v2991 = vperm.slane %v2955, 1
    %v2992 = vperm.slane %v2955, 2
    %v2993 = vperm.slane %v2955, 3
    %v2994 = vperm.slane %v2960, 0
    %v2995 = vperm.slane %v2960, 1
    %v2996 = vperm.slane %v2960, 2
    %v2997 = vperm.slane %v2960, 3
    %v2998 = vperm.slane %v2965, 0
    %v2999 = vperm.slane %v2965, 1
    %v3000 = vperm.slane %v2965, 2
    %v3001 = vperm.slane %v2965, 3
    %v3002 = vperm.slane %v2971, 0
    %v3003 = vperm.slane %v2971, 1
    %v3004 = vperm.slane %v2971, 2
    %v3005 = vperm.slane %v2971, 3
    %v3006 = vperm.slane %v2976, 0
    %v3007 = vperm.slane %v2976, 1
    %v3008 = vperm.slane %v2976, 2
    %v3009 = vperm.slane %v2976, 3
    %v3010 = vperm.slane %v2981, 0
    %v3011 = vperm.slane %v2981, 1
    %v3012 = vperm.slane %v2981, 2
    %v3013 = vperm.slane %v2981, 3
    %v3046 = vadd.f32 %v2321, %v2982
    %v3047 = vadd.f32 %v2499, %v2983
    %v3048 = vadd.f32 %v2677, %v2984
    %v3049 = vadd.f32 %v2855, %v2985
    %v3050 = vadd.f32 %v2323, %v2982
    %v3051 = vadd.f32 %v2501, %v2983
    %v3052 = vadd.f32 %v2679, %v2984
    %v3053 = vadd.f32 %v2857, %v2985
    %v3054 = vadd.f32 %v2326, %v2982
    %v3055 = vadd.f32 %v2504, %v2983
    %v3056 = vadd.f32 %v2682, %v2984
    %v3057 = vadd.f32 %v2860, %v2985
    %v3058 = vadd.f32 %v2328, %v2982
    %v3059 = vadd.f32 %v2506, %v2983
    %v3060 = vadd.f32 %v2684, %v2984
    %v3061 = vadd.f32 %v2862, %v2985
    %v3062 = vadd.f32 %v2331, %v2986
    %v3063 = vadd.f32 %v2509, %v2987
    %v3064 = vadd.f32 %v2687, %v2988
    %v3065 = vadd.f32 %v2865, %v2989
    %v3066 = vadd.f32 %v2333, %v2986
    %v3067 = vadd.f32 %v2511, %v2987
    %v3068 = vadd.f32 %v2689, %v2988
    %v3069 = vadd.f32 %v2867, %v2989
    %v3070 = vadd.f32 %v2336, %v2986
    %v3071 = vadd.f32 %v2514, %v2987
    %v3072 = vadd.f32 %v2692, %v2988
    %v3073 = vadd.f32 %v2870, %v2989
    %v3074 = vadd.f32 %v2338, %v2986
    %v3075 = vadd.f32 %v2516, %v2987
    %v3076 = vadd.f32 %v2694, %v2988
    %v3077 = vadd.f32 %v2872, %v2989
    %v3078 = vadd.f32 %v2341, %v2990
    %v3079 = vadd.f32 %v2519, %v2991
    %v3080 = vadd.f32 %v2697, %v2992
    %v3081 = vadd.f32 %v2875, %v2993
    %v3082 = vadd.f32 %v2343, %v2990
    %v3083 = vadd.f32 %v2521, %v2991
    %v3084 = vadd.f32 %v2699, %v2992
    %v3085 = vadd.f32 %v2877, %v2993
    %v3086 = vadd.f32 %v2346, %v2990
    %v3087 = vadd.f32 %v2524, %v2991
    %v3088 = vadd.f32 %v2702, %v2992
    %v3089 = vadd.f32 %v2880, %v2993
    %v3090 = vadd.f32 %v2348, %v2990
    %v3091 = vadd.f32 %v2526, %v2991
    %v3092 = vadd.f32 %v2704, %v2992
    %v3093 = vadd.f32 %v2882, %v2993
    %v3094 = vadd.f32 %v2351, %v2994
    %v3095 = vadd.f32 %v2529, %v2995
    %v3096 = vadd.f32 %v2707, %v2996
    %v3097 = vadd.f32 %v2885, %v2997
    %v3098 = vadd.f32 %v2353, %v2994
    %v3099 = vadd.f32 %v2531, %v2995
    %v3100 = vadd.f32 %v2709, %v2996
    %v3101 = vadd.f32 %v2887, %v2997
    %v3102 = vadd.f32 %v2356, %v2994
    %v3103 = vadd.f32 %v2534, %v2995
    %v3104 = vadd.f32 %v2712, %v2996
    %v3105 = vadd.f32 %v2890, %v2997
    %v3106 = vadd.f32 %v2358, %v2994
    %v3107 = vadd.f32 %v2536, %v2995
    %v3108 = vadd.f32 %v2714, %v2996
    %v3109 = vadd.f32 %v2892, %v2997
    %v3110 = vadd.f32 %v2361, %v2998
    %v3111 = vadd.f32 %v2539, %v2999
    %v3112 = vadd.f32 %v2717, %v3000
    %v3113 = vadd.f32 %v2895, %v3001
    %v3114 = vadd.f32 %v2363, %v2998
    %v3115 = vadd.f32 %v2541, %v2999
    %v3116 = vadd.f32 %v2719, %v3000
    %v3117 = vadd.f32 %v2897, %v3001
    %v3118 = vadd.f32 %v2366, %v2998
    %v3119 = vadd.f32 %v2544, %v2999
    %v3120 = vadd.f32 %v2722, %v3000
    %v3121 = vadd.f32 %v2900, %v3001
    %v3122 = vadd.f32 %v2368, %v2998
    %v3123 = vadd.f32 %v2546, %v2999
    %v3124 = vadd.f32 %v2724, %v3000
    %v3125 = vadd.f32 %v2902, %v3001
    %v3126 = vadd.f32 %v2371, %v3002
    %v3127 = vadd.f32 %v2549, %v3003
    %v3128 = vadd.f32 %v2727, %v3004
    %v3129 = vadd.f32 %v2905, %v3005
    %v3130 = vadd.f32 %v2373, %v3002
    %v3131 = vadd.f32 %v2551, %v3003
    %v3132 = vadd.f32 %v2729, %v3004
    %v3133 = vadd.f32 %v2907, %v3005
    %v3134 = vadd.f32 %v2376, %v3002
    %v3135 = vadd.f32 %v2554, %v3003
    %v3136 = vadd.f32 %v2732, %v3004
    %v3137 = vadd.f32 %v2910, %v3005
    %v3138 = vadd.f32 %v2378, %v3002
    %v3139 = vadd.f32 %v2556, %v3003
    %v3140 = vadd.f32 %v2734, %v3004
    %v3141 = vadd.f32 %v2912, %v3005
    %v3142 = vadd.f32 %v2381, %v3006
    %v3143 = vadd.f32 %v2559, %v3007
    %v3144 = vadd.f32 %v2737, %v3008
    %v3145 = vadd.f32 %v2915, %v3009
    %v3146 = vadd.f32 %v2383, %v3006
    %v3147 = vadd.f32 %v2561, %v3007
    %v3148 = vadd.f32 %v2739, %v3008
    %v3149 = vadd.f32 %v2917, %v3009
    %v3150 = vadd.f32 %v2386, %v3006
    %v3151 = vadd.f32 %v2564, %v3007
    %v3152 = vadd.f32 %v2742, %v3008
    %v3153 = vadd.f32 %v2920, %v3009
    %v3154 = vadd.f32 %v2388, %v3006
    %v3155 = vadd.f32 %v2566, %v3007
    %v3156 = vadd.f32 %v2744, %v3008
    %v3157 = vadd.f32 %v2922, %v3009
    %v3158 = vadd.f32 %v2391, %v3010
    %v3159 = vadd.f32 %v2569, %v3011
    %v3160 = vadd.f32 %v2747, %v3012
    %v3161 = vadd.f32 %v2925, %v3013
    %v3162 = vadd.f32 %v2393, %v3010
    %v3163 = vadd.f32 %v2571, %v3011
    %v3164 = vadd.f32 %v2749, %v3012
    %v3165 = vadd.f32 %v2927, %v3013
    %v3166 = vadd.f32 %v2396, %v3010
    %v3167 = vadd.f32 %v2574, %v3011
    %v3168 = vadd.f32 %v2752, %v3012
    %v3169 = vadd.f32 %v2930, %v3013
    %v3170 = vadd.f32 %v2398, %v3010
    %v3171 = vadd.f32 %v2576, %v3011
    %v3172 = vadd.f32 %v2754, %v3012
    %v3173 = vadd.f32 %v2932, %v3013
    %v3174 = vld [vmem:[%s8] sm:$0xf]
    %v3176 = vperm.slane %v3174, 0
    %v3177 = vperm.slane %v3174, 1
    %v3178 = vperm.slane %v3174, 2
    %v3179 = vperm.slane %v3174, 3
    %v3184 = vmul.f32 %v3046, %v3176
    %v3185 = vmul.f32 %v3047, %v3177
    %v3186 = vmul.f32 %v3048, %v3178
    %v3187 = vmul.f32 %v3049, %v3179
    %v3188 = vmul.f32 %v3050, %v3176
    %v3189 = vmul.f32 %v3051, %v3177
    %v3190 = vmul.f32 %v3052, %v3178
    %v3191 = vmul.f32 %v3053, %v3179
    %v3192 = vmul.f32 %v3054, %v3176
    %v3193 = vmul.f32 %v3055, %v3177
    %v3194 = vmul.f32 %v3056, %v3178
    %v3195 = vmul.f32 %v3057, %v3179
    %v3196 = vmul.f32 %v3058, %v3176
    %v3197 = vmul.f32 %v3059, %v3177
    %v3198 = vmul.f32 %v3060, %v3178
    %v3199 = vmul.f32 %v3061, %v3179
    %v3200 = vmul.f32 %v3062, %v3176
    %v3201 = vmul.f32 %v3063, %v3177
    %v3202 = vmul.f32 %v3064, %v3178
    %v3203 = vmul.f32 %v3065, %v3179
    %v3204 = vmul.f32 %v3066, %v3176
    %v3205 = vmul.f32 %v3067, %v3177
    %v3206 = vmul.f32 %v3068, %v3178
    %v3207 = vmul.f32 %v3069, %v3179
    %v3208 = vmul.f32 %v3070, %v3176
    %v3209 = vmul.f32 %v3071, %v3177
    %v3210 = vmul.f32 %v3072, %v3178
    %v3211 = vmul.f32 %v3073, %v3179
    %v3212 = vmul.f32 %v3074, %v3176
    %v3213 = vmul.f32 %v3075, %v3177
    %v3214 = vmul.f32 %v3076, %v3178
    %v3215 = vmul.f32 %v3077, %v3179
    %v3216 = vmul.f32 %v3078, %v3176
    %v3217 = vmul.f32 %v3079, %v3177
    %v3218 = vmul.f32 %v3080, %v3178
    %v3219 = vmul.f32 %v3081, %v3179
    %v3220 = vmul.f32 %v3082, %v3176
    %v3221 = vmul.f32 %v3083, %v3177
    %v3222 = vmul.f32 %v3084, %v3178
    %v3223 = vmul.f32 %v3085, %v3179
    %v3224 = vmul.f32 %v3086, %v3176
    %v3225 = vmul.f32 %v3087, %v3177
    %v3226 = vmul.f32 %v3088, %v3178
    %v3227 = vmul.f32 %v3089, %v3179
    %v3228 = vmul.f32 %v3090, %v3176
    %v3229 = vmul.f32 %v3091, %v3177
    %v3230 = vmul.f32 %v3092, %v3178
    %v3231 = vmul.f32 %v3093, %v3179
    %v3232 = vmul.f32 %v3094, %v3176
    %v3233 = vmul.f32 %v3095, %v3177
    %v3234 = vmul.f32 %v3096, %v3178
    %v3235 = vmul.f32 %v3097, %v3179
    %v3236 = vmul.f32 %v3098, %v3176
    %v3237 = vmul.f32 %v3099, %v3177
    %v3238 = vmul.f32 %v3100, %v3178
    %v3239 = vmul.f32 %v3101, %v3179
    %v3240 = vmul.f32 %v3102, %v3176
    %v3241 = vmul.f32 %v3103, %v3177
    %v3242 = vmul.f32 %v3104, %v3178
    %v3243 = vmul.f32 %v3105, %v3179
    %v3244 = vmul.f32 %v3106, %v3176
    %v3245 = vmul.f32 %v3107, %v3177
    %v3246 = vmul.f32 %v3108, %v3178
    %v3247 = vmul.f32 %v3109, %v3179
    %v3248 = vmul.f32 %v3110, %v3176
    %v3249 = vmul.f32 %v3111, %v3177
    %v3250 = vmul.f32 %v3112, %v3178
    %v3251 = vmul.f32 %v3113, %v3179
    %v3252 = vmul.f32 %v3114, %v3176
    %v3253 = vmul.f32 %v3115, %v3177
    %v3254 = vmul.f32 %v3116, %v3178
    %v3255 = vmul.f32 %v3117, %v3179
    %v3256 = vmul.f32 %v3118, %v3176
    %v3257 = vmul.f32 %v3119, %v3177
    %v3258 = vmul.f32 %v3120, %v3178
    %v3259 = vmul.f32 %v3121, %v3179
    %v3260 = vmul.f32 %v3122, %v3176
    %v3261 = vmul.f32 %v3123, %v3177
    %v3262 = vmul.f32 %v3124, %v3178
    %v3263 = vmul.f32 %v3125, %v3179
    %v3264 = vmul.f32 %v3126, %v3176
    %v3265 = vmul.f32 %v3127, %v3177
    %v3266 = vmul.f32 %v3128, %v3178
    %v3267 = vmul.f32 %v3129, %v3179
    %v3268 = vmul.f32 %v3130, %v3176
    %v3269 = vmul.f32 %v3131, %v3177
    %v3270 = vmul.f32 %v3132, %v3178
    %v3271 = vmul.f32 %v3133, %v3179
    %v3272 = vmul.f32 %v3134, %v3176
    %v3273 = vmul.f32 %v3135, %v3177
    %v3274 = vmul.f32 %v3136, %v3178
    %v3275 = vmul.f32 %v3137, %v3179
    %v3276 = vmul.f32 %v3138, %v3176
    %v3277 = vmul.f32 %v3139, %v3177
    %v3278 = vmul.f32 %v3140, %v3178
    %v3279 = vmul.f32 %v3141, %v3179
    %v3280 = vmul.f32 %v3142, %v3176
    %v3281 = vmul.f32 %v3143, %v3177
    %v3282 = vmul.f32 %v3144, %v3178
    %v3283 = vmul.f32 %v3145, %v3179
    %v3284 = vmul.f32 %v3146, %v3176
    %v3285 = vmul.f32 %v3147, %v3177
    %v3286 = vmul.f32 %v3148, %v3178
    %v3287 = vmul.f32 %v3149, %v3179
    %v3288 = vmul.f32 %v3150, %v3176
    %v3289 = vmul.f32 %v3151, %v3177
    %v3290 = vmul.f32 %v3152, %v3178
    %v3291 = vmul.f32 %v3153, %v3179
    %v3292 = vmul.f32 %v3154, %v3176
    %v3293 = vmul.f32 %v3155, %v3177
    %v3294 = vmul.f32 %v3156, %v3178
    %v3295 = vmul.f32 %v3157, %v3179
    %v3296 = vmul.f32 %v3158, %v3176
    %v3297 = vmul.f32 %v3159, %v3177
    %v3298 = vmul.f32 %v3160, %v3178
    %v3299 = vmul.f32 %v3161, %v3179
    %v3300 = vmul.f32 %v3162, %v3176
    %v3301 = vmul.f32 %v3163, %v3177
    %v3302 = vmul.f32 %v3164, %v3178
    %v3303 = vmul.f32 %v3165, %v3179
    %v3304 = vmul.f32 %v3166, %v3176
    %v3305 = vmul.f32 %v3167, %v3177
    %v3306 = vmul.f32 %v3168, %v3178
    %v3307 = vmul.f32 %v3169, %v3179
    %v3308 = vmul.f32 %v3170, %v3176
    %v3309 = vmul.f32 %v3171, %v3177
    %v3310 = vmul.f32 %v3172, %v3178
    %v3311 = vmul.f32 %v3173, %v3179
    %v3312 = vld [vmem:[%s9] sm:$0xf]
    %v3314 = vperm.slane %v3312, 0
    %v3315 = vperm.slane %v3312, 1
    %v3316 = vperm.slane %v3312, 2
    %v3317 = vperm.slane %v3312, 3
    %v3322 = vadd.f32 %v3184, %v3314
    %v3323 = vadd.f32 %v3185, %v3315
    %v3324 = vadd.f32 %v3186, %v3316
    %v3325 = vadd.f32 %v3187, %v3317
    %v3326 = vadd.f32 %v3188, %v3314
    %v3327 = vadd.f32 %v3189, %v3315
    %v3328 = vadd.f32 %v3190, %v3316
    %v3329 = vadd.f32 %v3191, %v3317
    %v3330 = vadd.f32 %v3192, %v3314
    %v3331 = vadd.f32 %v3193, %v3315
    %v3332 = vadd.f32 %v3194, %v3316
    %v3333 = vadd.f32 %v3195, %v3317
    %v3334 = vadd.f32 %v3196, %v3314
    %v3335 = vadd.f32 %v3197, %v3315
    %v3336 = vadd.f32 %v3198, %v3316
    %v3337 = vadd.f32 %v3199, %v3317
    %v3338 = vadd.f32 %v3200, %v3314
    %v3339 = vadd.f32 %v3201, %v3315
    %v3340 = vadd.f32 %v3202, %v3316
    %v3341 = vadd.f32 %v3203, %v3317
    %v3342 = vadd.f32 %v3204, %v3314
    %v3343 = vadd.f32 %v3205, %v3315
    %v3344 = vadd.f32 %v3206, %v3316
    %v3345 = vadd.f32 %v3207, %v3317
    %v3346 = vadd.f32 %v3208, %v3314
    %v3347 = vadd.f32 %v3209, %v3315
    %v3348 = vadd.f32 %v3210, %v3316
    %v3349 = vadd.f32 %v3211, %v3317
    %v3350 = vadd.f32 %v3212, %v3314
    %v3351 = vadd.f32 %v3213, %v3315
    %v3352 = vadd.f32 %v3214, %v3316
    %v3353 = vadd.f32 %v3215, %v3317
    %v3354 = vadd.f32 %v3216, %v3314
    %v3355 = vadd.f32 %v3217, %v3315
    %v3356 = vadd.f32 %v3218, %v3316
    %v3357 = vadd.f32 %v3219, %v3317
    %v3358 = vadd.f32 %v3220, %v3314
    %v3359 = vadd.f32 %v3221, %v3315
    %v3360 = vadd.f32 %v3222, %v3316
    %v3361 = vadd.f32 %v3223, %v3317
    %v3362 = vadd.f32 %v3224, %v3314
    %v3363 = vadd.f32 %v3225, %v3315
    %v3364 = vadd.f32 %v3226, %v3316
    %v3365 = vadd.f32 %v3227, %v3317
    %v3366 = vadd.f32 %v3228, %v3314
    %v3367 = vadd.f32 %v3229, %v3315
    %v3368 = vadd.f32 %v3230, %v3316
    %v3369 = vadd.f32 %v3231, %v3317
    %v3370 = vadd.f32 %v3232, %v3314
    %v3371 = vadd.f32 %v3233, %v3315
    %v3372 = vadd.f32 %v3234, %v3316
    %v3373 = vadd.f32 %v3235, %v3317
    %v3374 = vadd.f32 %v3236, %v3314
    %v3375 = vadd.f32 %v3237, %v3315
    %v3376 = vadd.f32 %v3238, %v3316
    %v3377 = vadd.f32 %v3239, %v3317
    %v3378 = vadd.f32 %v3240, %v3314
    %v3379 = vadd.f32 %v3241, %v3315
    %v3380 = vadd.f32 %v3242, %v3316
    %v3381 = vadd.f32 %v3243, %v3317
    %v3382 = vadd.f32 %v3244, %v3314
    %v3383 = vadd.f32 %v3245, %v3315
    %v3384 = vadd.f32 %v3246, %v3316
    %v3385 = vadd.f32 %v3247, %v3317
    %v3386 = vadd.f32 %v3248, %v3314
    %v3387 = vadd.f32 %v3249, %v3315
    %v3388 = vadd.f32 %v3250, %v3316
    %v3389 = vadd.f32 %v3251, %v3317
    %v3390 = vadd.f32 %v3252, %v3314
    %v3391 = vadd.f32 %v3253, %v3315
    %v3392 = vadd.f32 %v3254, %v3316
    %v3393 = vadd.f32 %v3255, %v3317
    %v3394 = vadd.f32 %v3256, %v3314
    %v3395 = vadd.f32 %v3257, %v3315
    %v3396 = vadd.f32 %v3258, %v3316
    %v3397 = vadd.f32 %v3259, %v3317
    %v3398 = vadd.f32 %v3260, %v3314
    %v3399 = vadd.f32 %v3261, %v3315
    %v3400 = vadd.f32 %v3262, %v3316
    %v3401 = vadd.f32 %v3263, %v3317
    %v3402 = vadd.f32 %v3264, %v3314
    %v3403 = vadd.f32 %v3265, %v3315
    %v3404 = vadd.f32 %v3266, %v3316
    %v3405 = vadd.f32 %v3267, %v3317
    %v3406 = vadd.f32 %v3268, %v3314
    %v3407 = vadd.f32 %v3269, %v3315
    %v3408 = vadd.f32 %v3270, %v3316
    %v3409 = vadd.f32 %v3271, %v3317
    %v3410 = vadd.f32 %v3272, %v3314
    %v3411 = vadd.f32 %v3273, %v3315
    %v3412 = vadd.f32 %v3274, %v3316
    %v3413 = vadd.f32 %v3275, %v3317
    %v3414 = vadd.f32 %v3276, %v3314
    %v3415 = vadd.f32 %v3277, %v3315
    %v3416 = vadd.f32 %v3278, %v3316
    %v3417 = vadd.f32 %v3279, %v3317
    %v3418 = vadd.f32 %v3280, %v3314
    %v3419 = vadd.f32 %v3281, %v3315
    %v3420 = vadd.f32 %v3282, %v3316
    %v3421 = vadd.f32 %v3283, %v3317
    %v3422 = vadd.f32 %v3284, %v3314
    %v3423 = vadd.f32 %v3285, %v3315
    %v3424 = vadd.f32 %v3286, %v3316
    %v3425 = vadd.f32 %v3287, %v3317
    %v3426 = vadd.f32 %v3288, %v3314
    %v3427 = vadd.f32 %v3289, %v3315
    %v3428 = vadd.f32 %v3290, %v3316
    %v3429 = vadd.f32 %v3291, %v3317
    %v3430 = vadd.f32 %v3292, %v3314
    %v3431 = vadd.f32 %v3293, %v3315
    %v3432 = vadd.f32 %v3294, %v3316
    %v3433 = vadd.f32 %v3295, %v3317
    %v3434 = vadd.f32 %v3296, %v3314
    %v3435 = vadd.f32 %v3297, %v3315
    %v3436 = vadd.f32 %v3298, %v3316
    %v3437 = vadd.f32 %v3299, %v3317
    %v3438 = vadd.f32 %v3300, %v3314
    %v3439 = vadd.f32 %v3301, %v3315
    %v3440 = vadd.f32 %v3302, %v3316
    %v3441 = vadd.f32 %v3303, %v3317
    %v3442 = vadd.f32 %v3304, %v3314
    %v3443 = vadd.f32 %v3305, %v3315
    %v3444 = vadd.f32 %v3306, %v3316
    %v3445 = vadd.f32 %v3307, %v3317
    %v3446 = vadd.f32 %v3308, %v3314
    %v3447 = vadd.f32 %v3309, %v3315
    %v3448 = vadd.f32 %v3310, %v3316
    %v3449 = vadd.f32 %v3311, %v3317
    %v3450 = vmax.f32 %v3322, 0.0
    %v3451 = vmax.f32 %v3323, 0.0
    %v3452 = vmax.f32 %v3324, 0.0
    %v3453 = vmax.f32 %v3325, 0.0
    %v3454 = vmax.f32 %v3326, 0.0
    %v3455 = vmax.f32 %v3327, 0.0
    %v3456 = vmax.f32 %v3328, 0.0
    %v3457 = vmax.f32 %v3329, 0.0
    %v3458 = vmax.f32 %v3330, 0.0
    %v3459 = vmax.f32 %v3331, 0.0
    %v3460 = vmax.f32 %v3332, 0.0
    %v3461 = vmax.f32 %v3333, 0.0
    %v3462 = vmax.f32 %v3334, 0.0
    %v3463 = vmax.f32 %v3335, 0.0
    %v3464 = vmax.f32 %v3336, 0.0
    %v3465 = vmax.f32 %v3337, 0.0
    %v3466 = vmax.f32 %v3338, 0.0
    %v3467 = vmax.f32 %v3339, 0.0
    %v3468 = vmax.f32 %v3340, 0.0
    %v3469 = vmax.f32 %v3341, 0.0
    %v3470 = vmax.f32 %v3342, 0.0
    %v3471 = vmax.f32 %v3343, 0.0
    %v3472 = vmax.f32 %v3344, 0.0
    %v3473 = vmax.f32 %v3345, 0.0
    %v3474 = vmax.f32 %v3346, 0.0
    %v3475 = vmax.f32 %v3347, 0.0
    %v3476 = vmax.f32 %v3348, 0.0
    %v3477 = vmax.f32 %v3349, 0.0
    %v3478 = vmax.f32 %v3350, 0.0
    %v3479 = vmax.f32 %v3351, 0.0
    %v3480 = vmax.f32 %v3352, 0.0
    %v3481 = vmax.f32 %v3353, 0.0
    %v3482 = vmax.f32 %v3354, 0.0
    %v3483 = vmax.f32 %v3355, 0.0
    %v3484 = vmax.f32 %v3356, 0.0
    %v3485 = vmax.f32 %v3357, 0.0
    %v3486 = vmax.f32 %v3358, 0.0
    %v3487 = vmax.f32 %v3359, 0.0
    %v3488 = vmax.f32 %v3360, 0.0
    %v3489 = vmax.f32 %v3361, 0.0
    %v3490 = vmax.f32 %v3362, 0.0
    %v3491 = vmax.f32 %v3363, 0.0
    %v3492 = vmax.f32 %v3364, 0.0
    %v3493 = vmax.f32 %v3365, 0.0
    %v3494 = vmax.f32 %v3366, 0.0
    %v3495 = vmax.f32 %v3367, 0.0
    %v3496 = vmax.f32 %v3368, 0.0
    %v3497 = vmax.f32 %v3369, 0.0
    %v3498 = vmax.f32 %v3370, 0.0
    %v3499 = vmax.f32 %v3371, 0.0
    %v3500 = vmax.f32 %v3372, 0.0
    %v3501 = vmax.f32 %v3373, 0.0
    %v3502 = vmax.f32 %v3374, 0.0
    %v3503 = vmax.f32 %v3375, 0.0
    %v3504 = vmax.f32 %v3376, 0.0
    %v3505 = vmax.f32 %v3377, 0.0
    %v3506 = vmax.f32 %v3378, 0.0
    %v3507 = vmax.f32 %v3379, 0.0
    %v3508 = vmax.f32 %v3380, 0.0
    %v3509 = vmax.f32 %v3381, 0.0
    %v3510 = vmax.f32 %v3382, 0.0
    %v3511 = vmax.f32 %v3383, 0.0
    %v3512 = vmax.f32 %v3384, 0.0
    %v3513 = vmax.f32 %v3385, 0.0
    %v3514 = vmax.f32 %v3386, 0.0
    %v3515 = vmax.f32 %v3387, 0.0
    %v3516 = vmax.f32 %v3388, 0.0
    %v3517 = vmax.f32 %v3389, 0.0
    %v3518 = vmax.f32 %v3390, 0.0
    %v3519 = vmax.f32 %v3391, 0.0
    %v3520 = vmax.f32 %v3392, 0.0
    %v3521 = vmax.f32 %v3393, 0.0
    %v3522 = vmax.f32 %v3394, 0.0
    %v3523 = vmax.f32 %v3395, 0.0
    %v3524 = vmax.f32 %v3396, 0.0
    %v3525 = vmax.f32 %v3397, 0.0
    %v3526 = vmax.f32 %v3398, 0.0
    %v3527 = vmax.f32 %v3399, 0.0
    %v3528 = vmax.f32 %v3400, 0.0
    %v3529 = vmax.f32 %v3401, 0.0
    %v3530 = vmax.f32 %v3402, 0.0
    %v3531 = vmax.f32 %v3403, 0.0
    %v3532 = vmax.f32 %v3404, 0.0
    %v3533 = vmax.f32 %v3405, 0.0
    %v3534 = vmax.f32 %v3406, 0.0
    %v3535 = vmax.f32 %v3407, 0.0
    %v3536 = vmax.f32 %v3408, 0.0
    %v3537 = vmax.f32 %v3409, 0.0
    %v3538 = vmax.f32 %v3410, 0.0
    %v3539 = vmax.f32 %v3411, 0.0
    %v3540 = vmax.f32 %v3412, 0.0
    %v3541 = vmax.f32 %v3413, 0.0
    %v3542 = vmax.f32 %v3414, 0.0
    %v3543 = vmax.f32 %v3415, 0.0
    %v3544 = vmax.f32 %v3416, 0.0
    %v3545 = vmax.f32 %v3417, 0.0
    %v3546 = vmax.f32 %v3418, 0.0
    %v3547 = vmax.f32 %v3419, 0.0
    %v3548 = vmax.f32 %v3420, 0.0
    %v3549 = vmax.f32 %v3421, 0.0
    %v3550 = vmax.f32 %v3422, 0.0
    %v3551 = vmax.f32 %v3423, 0.0
    %v3552 = vmax.f32 %v3424, 0.0
    %v3553 = vmax.f32 %v3425, 0.0
    %v3554 = vmax.f32 %v3426, 0.0
    %v3555 = vmax.f32 %v3427, 0.0
    %v3556 = vmax.f32 %v3428, 0.0
    %v3557 = vmax.f32 %v3429, 0.0
    %v3558 = vmax.f32 %v3430, 0.0
    %v3559 = vmax.f32 %v3431, 0.0
    %v3560 = vmax.f32 %v3432, 0.0
    %v3561 = vmax.f32 %v3433, 0.0
    %v3562 = vmax.f32 %v3434, 0.0
    %v3563 = vmax.f32 %v3435, 0.0
    %v3564 = vmax.f32 %v3436, 0.0
    %v3565 = vmax.f32 %v3437, 0.0
    %v3566 = vmax.f32 %v3438, 0.0
    %v3567 = vmax.f32 %v3439, 0.0
    %v3568 = vmax.f32 %v3440, 0.0
    %v3569 = vmax.f32 %v3441, 0.0
    %v3570 = vmax.f32 %v3442, 0.0
    %v3571 = vmax.f32 %v3443, 0.0
    %v3572 = vmax.f32 %v3444, 0.0
    %v3573 = vmax.f32 %v3445, 0.0
    %v3574 = vmax.f32 %v3446, 0.0
    %v3575 = vmax.f32 %v3447, 0.0
    %v3576 = vmax.f32 %v3448, 0.0
    %v3577 = vmax.f32 %v3449, 0.0
    %v3578 = vpack.c.bf16 %v3454, %v3450
    %v3579 = vpack.c.bf16 %v3455, %v3451
    %v3580 = vpack.c.bf16 %v3456, %v3452
    %v3581 = vpack.c.bf16 %v3457, %v3453
    %v3582 = vpack.c.bf16 %v3462, %v3458
    %v3583 = vpack.c.bf16 %v3463, %v3459
    %v3584 = vpack.c.bf16 %v3464, %v3460
    %v3585 = vpack.c.bf16 %v3465, %v3461
    %v3586 = vpack.c.bf16 %v3470, %v3466
    %v3587 = vpack.c.bf16 %v3471, %v3467
    %v3588 = vpack.c.bf16 %v3472, %v3468
    %v3589 = vpack.c.bf16 %v3473, %v3469
    %v3590 = vpack.c.bf16 %v3478, %v3474
    %v3591 = vpack.c.bf16 %v3479, %v3475
    %v3592 = vpack.c.bf16 %v3480, %v3476
    %v3593 = vpack.c.bf16 %v3481, %v3477
    %v3594 = vpack.c.bf16 %v3486, %v3482
    %v3595 = vpack.c.bf16 %v3487, %v3483
    %v3596 = vpack.c.bf16 %v3488, %v3484
    %v3597 = vpack.c.bf16 %v3489, %v3485
    %v3598 = vpack.c.bf16 %v3494, %v3490
    %v3599 = vpack.c.bf16 %v3495, %v3491
    %v3600 = vpack.c.bf16 %v3496, %v3492
    %v3601 = vpack.c.bf16 %v3497, %v3493
    %v3602 = vpack.c.bf16 %v3502, %v3498
    %v3603 = vpack.c.bf16 %v3503, %v3499
    %v3604 = vpack.c.bf16 %v3504, %v3500
    %v3605 = vpack.c.bf16 %v3505, %v3501
    %v3606 = vpack.c.bf16 %v3510, %v3506
    %v3607 = vpack.c.bf16 %v3511, %v3507
    %v3608 = vpack.c.bf16 %v3512, %v3508
    %v3609 = vpack.c.bf16 %v3513, %v3509
    %v3610 = vpack.c.bf16 %v3518, %v3514
    %v3611 = vpack.c.bf16 %v3519, %v3515
    %v3612 = vpack.c.bf16 %v3520, %v3516
    %v3613 = vpack.c.bf16 %v3521, %v3517
    %v3614 = vpack.c.bf16 %v3526, %v3522
    %v3615 = vpack.c.bf16 %v3527, %v3523
    %v3616 = vpack.c.bf16 %v3528, %v3524
    %v3617 = vpack.c.bf16 %v3529, %v3525
    %v3618 = vpack.c.bf16 %v3534, %v3530
    %v3619 = vpack.c.bf16 %v3535, %v3531
    %v3620 = vpack.c.bf16 %v3536, %v3532
    %v3621 = vpack.c.bf16 %v3537, %v3533
    %v3622 = vpack.c.bf16 %v3542, %v3538
    %v3623 = vpack.c.bf16 %v3543, %v3539
    %v3624 = vpack.c.bf16 %v3544, %v3540
    %v3625 = vpack.c.bf16 %v3545, %v3541
    %v3626 = vpack.c.bf16 %v3550, %v3546
    %v3627 = vpack.c.bf16 %v3551, %v3547
    %v3628 = vpack.c.bf16 %v3552, %v3548
    %v3629 = vpack.c.bf16 %v3553, %v3549
    %v3630 = vpack.c.bf16 %v3558, %v3554
    %v3631 = vpack.c.bf16 %v3559, %v3555
    %v3632 = vpack.c.bf16 %v3560, %v3556
    %v3633 = vpack.c.bf16 %v3561, %v3557
    %v3634 = vpack.c.bf16 %v3566, %v3562
    %v3635 = vpack.c.bf16 %v3567, %v3563
    %v3636 = vpack.c.bf16 %v3568, %v3564
    %v3637 = vpack.c.bf16 %v3569, %v3565
    %v3638 = vpack.c.bf16 %v3574, %v3570
    %v3639 = vpack.c.bf16 %v3575, %v3571
    %v3640 = vpack.c.bf16 %v3576, %v3572
    %v3641 = vpack.c.bf16 %v3577, %v3573
    %v3642 = vld [vmem:[#allocation7] sm:$0xff]
    %v3643 = vld [vmem:[#allocation7 + $0x8] sm:$0xff]
    %v3644 = vld [vmem:[#allocation7 + $0x10] sm:$0xff]
    %v3645 = vld [vmem:[#allocation7 + $0x18] sm:$0xff]
    %v3646 = vld [vmem:[#allocation7 + $0x20] sm:$0xff]
    %v3647 = vld [vmem:[#allocation7 + $0x28] sm:$0xff]
    %v3648 = vld [vmem:[#allocation7 + $0x30] sm:$0xff]
    %v3649 = vld [vmem:[#allocation7 + $0x38] sm:$0xff]
    %v3650 = vld [vmem:[#allocation7 + $0x40] sm:$0xff]
    %v3651 = vld [vmem:[#allocation7 + $0x48] sm:$0xff]
    %v3652 = vld [vmem:[#allocation7 + $0x50] sm:$0xff]
    %v3653 = vld [vmem:[#allocation7 + $0x58] sm:$0xff]
    %v3654 = vld [vmem:[#allocation7 + $0x60] sm:$0xff]
    %v3655 = vld [vmem:[#allocation7 + $0x68] sm:$0xff]
    %v3656 = vld [vmem:[#allocation7 + $0x70] sm:$0xff]
    %v3657 = vld [vmem:[#allocation7 + $0x78] sm:$0xff]
    %v3658 = vld [vmem:[#allocation7 + $0x80] sm:$0xff]
    %v3659 = vld [vmem:[#allocation7 + $0x88] sm:$0xff]
    %v3660 = vld [vmem:[#allocation7 + $0x90] sm:$0xff]
    %v3661 = vld [vmem:[#allocation7 + $0x98] sm:$0xff]
    %v3662 = vld [vmem:[#allocation7 + $0xa0] sm:$0xff]
    %v3663 = vld [vmem:[#allocation7 + $0xa8] sm:$0xff]
    %v3664 = vld [vmem:[#allocation7 + $0xb0] sm:$0xff]
    %v3665 = vld [vmem:[#allocation7 + $0xb8] sm:$0xff]
    %v3666 = vld [vmem:[#allocation7 + $0xc0] sm:$0xff]
    %v3667 = vld [vmem:[#allocation7 + $0xc8] sm:$0xff]
    %v3668 = vld [vmem:[#allocation7 + $0xd0] sm:$0xff]
    %v3669 = vld [vmem:[#allocation7 + $0xd8] sm:$0xff]
    %v3670 = vld [vmem:[#allocation7 + $0xe0] sm:$0xff]
    %v3671 = vld [vmem:[#allocation7 + $0xe8] sm:$0xff]
    %v3672 = vld [vmem:[#allocation7 + $0xf0] sm:$0xff]
    %v3673 = vld [vmem:[#allocation7 + $0xf8] sm:$0xff]
    %v3674 = vld [vmem:[#allocation7 + $0x100] sm:$0xff]
    %v3675 = vld [vmem:[#allocation7 + $0x108] sm:$0xff]
    %v3676 = vld [vmem:[#allocation7 + $0x110] sm:$0xff]
    %v3677 = vld [vmem:[#allocation7 + $0x118] sm:$0xff]
    %v3678 = vld [vmem:[#allocation7 + $0x120] sm:$0xff]
    %v3679 = vld [vmem:[#allocation7 + $0x128] sm:$0xff]
    %v3680 = vld [vmem:[#allocation7 + $0x130] sm:$0xff]
    %v3681 = vld [vmem:[#allocation7 + $0x138] sm:$0xff]
    %v3682 = vld [vmem:[#allocation7 + $0x140] sm:$0xff]
    %v3683 = vld [vmem:[#allocation7 + $0x148] sm:$0xff]
    %v3684 = vld [vmem:[#allocation7 + $0x150] sm:$0xff]
    %v3685 = vld [vmem:[#allocation7 + $0x158] sm:$0xff]
    %v3686 = vld [vmem:[#allocation7 + $0x160] sm:$0xff]
    %v3687 = vld [vmem:[#allocation7 + $0x168] sm:$0xff]
    %v3688 = vld [vmem:[#allocation7 + $0x170] sm:$0xff]
    %v3689 = vld [vmem:[#allocation7 + $0x178] sm:$0xff]
    %v3690 = vld [vmem:[#allocation7 + $0x180] sm:$0xff]
    %v3691 = vld [vmem:[#allocation7 + $0x188] sm:$0xff]
    %v3692 = vld [vmem:[#allocation7 + $0x190] sm:$0xff]
    %v3693 = vld [vmem:[#allocation7 + $0x198] sm:$0xff]
    %v3694 = vld [vmem:[#allocation7 + $0x1a0] sm:$0xff]
    %v3695 = vld [vmem:[#allocation7 + $0x1a8] sm:$0xff]
    %v3696 = vld [vmem:[#allocation7 + $0x1b0] sm:$0xff]
    %v3697 = vld [vmem:[#allocation7 + $0x1b8] sm:$0xff]
    %v3698 = vld [vmem:[#allocation7 + $0x1c0] sm:$0xff]
    %v3699 = vld [vmem:[#allocation7 + $0x1c8] sm:$0xff]
    %v3700 = vld [vmem:[#allocation7 + $0x1d0] sm:$0xff]
    %v3701 = vld [vmem:[#allocation7 + $0x1d8] sm:$0xff]
    %v3702 = vld [vmem:[#allocation7 + $0x1e0] sm:$0xff]
    %v3703 = vld [vmem:[#allocation7 + $0x1e8] sm:$0xff]
    %v3704 = vld [vmem:[#allocation7 + $0x1f0] sm:$0xff]
    %v3705 = vld [vmem:[#allocation7 + $0x1f8] sm:$0xff]
    %v3706 = vld [vmem:[%s11] sm:$0x3]
    %v3708 = vperm.slane %v3706, 0
    %v3709 = vperm.slane %v3706, 1
    %v3776 = vunpack.c.l.b16 %v3642
    %v3777 = vunpack.c.h.b16 %v3642
    %v3778 = vunpack.c.l.b16 %v3643
    %v3779 = vunpack.c.h.b16 %v3643
    %v3780 = vunpack.c.l.b16 %v3644
    %v3781 = vunpack.c.h.b16 %v3644
    %v3782 = vunpack.c.l.b16 %v3645
    %v3783 = vunpack.c.h.b16 %v3645
    %v3784 = vunpack.c.l.b16 %v3646
    %v3785 = vunpack.c.h.b16 %v3646
    %v3786 = vunpack.c.l.b16 %v3647
    %v3787 = vunpack.c.h.b16 %v3647
    %v3788 = vunpack.c.l.b16 %v3648
    %v3789 = vunpack.c.h.b16 %v3648
    %v3790 = vunpack.c.l.b16 %v3649
    %v3791 = vunpack.c.h.b16 %v3649
    %v3792 = vunpack.c.l.b16 %v3650
    %v3793 = vunpack.c.h.b16 %v3650
    %v3794 = vunpack.c.l.b16 %v3651
    %v3795 = vunpack.c.h.b16 %v3651
    %v3796 = vunpack.c.l.b16 %v3652
    %v3797 = vunpack.c.h.b16 %v3652
    %v3798 = vunpack.c.l.b16 %v3653
    %v3799 = vunpack.c.h.b16 %v3653
    %v3800 = vunpack.c.l.b16 %v3654
    %v3801 = vunpack.c.h.b16 %v3654
    %v3802 = vunpack.c.l.b16 %v3655
    %v3803 = vunpack.c.h.b16 %v3655
    %v3804 = vunpack.c.l.b16 %v3656
    %v3805 = vunpack.c.h.b16 %v3656
    %v3806 = vunpack.c.l.b16 %v3657
    %v3807 = vunpack.c.h.b16 %v3657
    %v3808 = vunpack.c.l.b16 %v3658
    %v3809 = vunpack.c.h.b16 %v3658
    %v3810 = vunpack.c.l.b16 %v3659
    %v3811 = vunpack.c.h.b16 %v3659
    %v3812 = vunpack.c.l.b16 %v3660
    %v3813 = vunpack.c.h.b16 %v3660
    %v3814 = vunpack.c.l.b16 %v3661
    %v3815 = vunpack.c.h.b16 %v3661
    %v3816 = vunpack.c.l.b16 %v3662
    %v3817 = vunpack.c.h.b16 %v3662
    %v3818 = vunpack.c.l.b16 %v3663
    %v3819 = vunpack.c.h.b16 %v3663
    %v3820 = vunpack.c.l.b16 %v3664
    %v3821 = vunpack.c.h.b16 %v3664
    %v3822 = vunpack.c.l.b16 %v3665
    %v3823 = vunpack.c.h.b16 %v3665
    %v3824 = vunpack.c.l.b16 %v3666
    %v3825 = vunpack.c.h.b16 %v3666
    %v3826 = vunpack.c.l.b16 %v3667
    %v3827 = vunpack.c.h.b16 %v3667
    %v3828 = vunpack.c.l.b16 %v3668
    %v3829 = vunpack.c.h.b16 %v3668
    %v3830 = vunpack.c.l.b16 %v3669
    %v3831 = vunpack.c.h.b16 %v3669
    %v3832 = vunpack.c.l.b16 %v3670
    %v3833 = vunpack.c.h.b16 %v3670
    %v3834 = vunpack.c.l.b16 %v3671
    %v3835 = vunpack.c.h.b16 %v3671
    %v3836 = vunpack.c.l.b16 %v3672
    %v3837 = vunpack.c.h.b16 %v3672
    %v3838 = vunpack.c.l.b16 %v3673
    %v3839 = vunpack.c.h.b16 %v3673
    %v3840 = vunpack.c.l.b16 %v3674
    %v3841 = vunpack.c.h.b16 %v3674
    %v3842 = vunpack.c.l.b16 %v3675
    %v3843 = vunpack.c.h.b16 %v3675
    %v3844 = vunpack.c.l.b16 %v3676
    %v3845 = vunpack.c.h.b16 %v3676
    %v3846 = vunpack.c.l.b16 %v3677
    %v3847 = vunpack.c.h.b16 %v3677
    %v3848 = vunpack.c.l.b16 %v3678
    %v3849 = vunpack.c.h.b16 %v3678
    %v3850 = vunpack.c.l.b16 %v3679
    %v3851 = vunpack.c.h.b16 %v3679
    %v3852 = vunpack.c.l.b16 %v3680
    %v3853 = vunpack.c.h.b16 %v3680
    %v3854 = vunpack.c.l.b16 %v3681
    %v3855 = vunpack.c.h.b16 %v3681
    %v3856 = vunpack.c.l.b16 %v3682
    %v3857 = vunpack.c.h.b16 %v3682
    %v3858 = vunpack.c.l.b16 %v3683
    %v3859 = vunpack.c.h.b16 %v3683
    %v3860 = vunpack.c.l.b16 %v3684
    %v3861 = vunpack.c.h.b16 %v3684
    %v3862 = vunpack.c.l.b16 %v3685
    %v3863 = vunpack.c.h.b16 %v3685
    %v3864 = vunpack.c.l.b16 %v3686
    %v3865 = vunpack.c.h.b16 %v3686
    %v3866 = vunpack.c.l.b16 %v3687
    %v3867 = vunpack.c.h.b16 %v3687
    %v3868 = vunpack.c.l.b16 %v3688
    %v3869 = vunpack.c.h.b16 %v3688
    %v3870 = vunpack.c.l.b16 %v3689
    %v3871 = vunpack.c.h.b16 %v3689
    %v3872 = vunpack.c.l.b16 %v3690
    %v3873 = vunpack.c.h.b16 %v3690
    %v3874 = vunpack.c.l.b16 %v3691
    %v3875 = vunpack.c.h.b16 %v3691
    %v3876 = vunpack.c.l.b16 %v3692
    %v3877 = vunpack.c.h.b16 %v3692
    %v3878 = vunpack.c.l.b16 %v3693
    %v3879 = vunpack.c.h.b16 %v3693
    %v3880 = vunpack.c.l.b16 %v3694
    %v3881 = vunpack.c.h.b16 %v3694
    %v3882 = vunpack.c.l.b16 %v3695
    %v3883 = vunpack.c.h.b16 %v3695
    %v3884 = vunpack.c.l.b16 %v3696
    %v3885 = vunpack.c.h.b16 %v3696
    %v3886 = vunpack.c.l.b16 %v3697
    %v3887 = vunpack.c.h.b16 %v3697
    %v3888 = vunpack.c.l.b16 %v3698
    %v3889 = vunpack.c.h.b16 %v3698
    %v3890 = vunpack.c.l.b16 %v3699
    %v3891 = vunpack.c.h.b16 %v3699
    %v3892 = vunpack.c.l.b16 %v3700
    %v3893 = vunpack.c.h.b16 %v3700
    %v3894 = vunpack.c.l.b16 %v3701
    %v3895 = vunpack.c.h.b16 %v3701
    %v3896 = vunpack.c.l.b16 %v3702
    %v3897 = vunpack.c.h.b16 %v3702
    %v3898 = vunpack.c.l.b16 %v3703
    %v3899 = vunpack.c.h.b16 %v3703
    %v3900 = vunpack.c.l.b16 %v3704
    %v3901 = vunpack.c.h.b16 %v3704
    %v3902 = vunpack.c.l.b16 %v3705
    %v3903 = vunpack.c.h.b16 %v3705
    %v3904 = vpack.c.b16 %v3778, %v3776
    %v3905 = vpack.c.b16 %v3779, %v3777
    %v3906 = vpack.c.b16 %v3782, %v3780
    %v3907 = vpack.c.b16 %v3783, %v3781
    %v3908 = vpack.c.b16 %v3786, %v3784
    %v3909 = vpack.c.b16 %v3787, %v3785
    %v3910 = vpack.c.b16 %v3790, %v3788
    %v3911 = vpack.c.b16 %v3791, %v3789
    %v3912 = vpack.c.b16 %v3794, %v3792
    %v3913 = vpack.c.b16 %v3795, %v3793
    %v3914 = vpack.c.b16 %v3798, %v3796
    %v3915 = vpack.c.b16 %v3799, %v3797
    %v3916 = vpack.c.b16 %v3802, %v3800
    %v3917 = vpack.c.b16 %v3803, %v3801
    %v3918 = vpack.c.b16 %v3806, %v3804
    %v3919 = vpack.c.b16 %v3807, %v3805
    %v3920 = vpack.c.b16 %v3810, %v3808
    %v3921 = vpack.c.b16 %v3811, %v3809
    %v3922 = vpack.c.b16 %v3814, %v3812
    %v3923 = vpack.c.b16 %v3815, %v3813
    %v3924 = vpack.c.b16 %v3818, %v3816
    %v3925 = vpack.c.b16 %v3819, %v3817
    %v3926 = vpack.c.b16 %v3822, %v3820
    %v3927 = vpack.c.b16 %v3823, %v3821
    %v3928 = vpack.c.b16 %v3826, %v3824
    %v3929 = vpack.c.b16 %v3827, %v3825
    %v3930 = vpack.c.b16 %v3830, %v3828
    %v3931 = vpack.c.b16 %v3831, %v3829
    %v3932 = vpack.c.b16 %v3834, %v3832
    %v3933 = vpack.c.b16 %v3835, %v3833
    %v3934 = vpack.c.b16 %v3838, %v3836
    %v3935 = vpack.c.b16 %v3839, %v3837
    %v3936 = vpack.c.b16 %v3842, %v3840
    %v3937 = vpack.c.b16 %v3843, %v3841
    %v3938 = vpack.c.b16 %v3846, %v3844
    %v3939 = vpack.c.b16 %v3847, %v3845
    %v3940 = vpack.c.b16 %v3850, %v3848
    %v3941 = vpack.c.b16 %v3851, %v3849
    %v3942 = vpack.c.b16 %v3854, %v3852
    %v3943 = vpack.c.b16 %v3855, %v3853
    %v3944 = vpack.c.b16 %v3858, %v3856
    %v3945 = vpack.c.b16 %v3859, %v3857
    %v3946 = vpack.c.b16 %v3862, %v3860
    %v3947 = vpack.c.b16 %v3863, %v3861
    %v3948 = vpack.c.b16 %v3866, %v3864
    %v3949 = vpack.c.b16 %v3867, %v3865
    %v3950 = vpack.c.b16 %v3870, %v3868
    %v3951 = vpack.c.b16 %v3871, %v3869
    %v3952 = vpack.c.b16 %v3874, %v3872
    %v3953 = vpack.c.b16 %v3875, %v3873
    %v3954 = vpack.c.b16 %v3878, %v3876
    %v3955 = vpack.c.b16 %v3879, %v3877
    %v3956 = vpack.c.b16 %v3882, %v3880
    %v3957 = vpack.c.b16 %v3883, %v3881
    %v3958 = vpack.c.b16 %v3886, %v3884
    %v3959 = vpack.c.b16 %v3887, %v3885
    %v3960 = vpack.c.b16 %v3890, %v3888
    %v3961 = vpack.c.b16 %v3891, %v3889
    %v3962 = vpack.c.b16 %v3894, %v3892
    %v3963 = vpack.c.b16 %v3895, %v3893
    %v3964 = vpack.c.b16 %v3898, %v3896
    %v3965 = vpack.c.b16 %v3899, %v3897
    %v3966 = vpack.c.b16 %v3902, %v3900
    %v3967 = vpack.c.b16 %v3903, %v3901
    %4032 = vmatpush.bf16.msra.mxu0 %v3918
    %4033 = vmatpush.bf16.msra.mxu0 %v3916
    %4034 = vmatpush.bf16.msra.mxu0 %v3914
    %4035 = vmatpush.bf16.msra.mxu0 %v3912
    %4036 = vmatpush.bf16.msra.mxu0 %v3910
    %4037 = vmatpush.bf16.msra.mxu0 %v3908
    %4038 = vmatpush.bf16.msra.mxu0 %v3906
    %4039 = vmatpush.bf16.msra.mxu0 %v3904
    %4040 = vmatmul.bf16.gmra.mxu0 %v3578
    %v4041 = vpop.f32.mrf.mxu0
    %v4042 = vadd.f32 %v3708, %v4041
    %v4043 = vpop.f32.mrf.mxu0
    %v4044 = vadd.f32 %v3708, %v4043
    %4045 = vmatmul.bf16.gmra.mxu0 %v3582
    %v4046 = vpop.f32.mrf.mxu0
    %v4047 = vadd.f32 %v3708, %v4046
    %v4048 = vpop.f32.mrf.mxu0
    %v4049 = vadd.f32 %v3708, %v4048
    %4050 = vmatmul.bf16.gmra.mxu0 %v3586
    %v4051 = vpop.f32.mrf.mxu0
    %v4052 = vadd.f32 %v3708, %v4051
    %v4053 = vpop.f32.mrf.mxu0
    %v4054 = vadd.f32 %v3708, %v4053
    %4055 = vmatmul.bf16.gmra.mxu0 %v3590
    %v4056 = vpop.f32.mrf.mxu0
    %v4057 = vadd.f32 %v3708, %v4056
    %v4058 = vpop.f32.mrf.mxu0
    %v4059 = vadd.f32 %v3708, %v4058
    %4060 = vmatmul.bf16.gmra.mxu0 %v3594
    %v4061 = vpop.f32.mrf.mxu0
    %v4062 = vadd.f32 %v3708, %v4061
    %v4063 = vpop.f32.mrf.mxu0
    %v4064 = vadd.f32 %v3708, %v4063
    %4065 = vmatmul.bf16.gmra.mxu0 %v3598
    %v4066 = vpop.f32.mrf.mxu0
    %v4067 = vadd.f32 %v3708, %v4066
    %v4068 = vpop.f32.mrf.mxu0
    %v4069 = vadd.f32 %v3708, %v4068
    %4070 = vmatmul.bf16.gmra.mxu0 %v3602
    %v4071 = vpop.f32.mrf.mxu0
    %v4072 = vadd.f32 %v3708, %v4071
    %v4073 = vpop.f32.mrf.mxu0
    %v4074 = vadd.f32 %v3708, %v4073
    %4075 = vmatmul.bf16.gmra.mxu0 %v3606
    %v4076 = vpop.f32.mrf.mxu0
    %v4077 = vadd.f32 %v3708, %v4076
    %v4078 = vpop.f32.mrf.mxu0
    %v4079 = vadd.f32 %v3708, %v4078
    %4080 = vmatmul.bf16.gmra.mxu0 %v3610
    %v4081 = vpop.f32.mrf.mxu0
    %v4082 = vadd.f32 %v3708, %v4081
    %v4083 = vpop.f32.mrf.mxu0
    %v4084 = vadd.f32 %v3708, %v4083
    %4085 = vmatmul.bf16.gmra.mxu0 %v3614
    %v4086 = vpop.f32.mrf.mxu0
    %v4087 = vadd.f32 %v3708, %v4086
    %v4088 = vpop.f32.mrf.mxu0
    %v4089 = vadd.f32 %v3708, %v4088
    %4090 = vmatmul.bf16.gmra.mxu0 %v3618
    %v4091 = vpop.f32.mrf.mxu0
    %v4092 = vadd.f32 %v3708, %v4091
    %v4093 = vpop.f32.mrf.mxu0
    %v4094 = vadd.f32 %v3708, %v4093
    %4095 = vmatmul.bf16.gmra.mxu0 %v3622
    %v4096 = vpop.f32.mrf.mxu0
    %v4097 = vadd.f32 %v3708, %v4096
    %v4098 = vpop.f32.mrf.mxu0
    %v4099 = vadd.f32 %v3708, %v4098
    %4100 = vmatmul.bf16.gmra.mxu0 %v3626
    %v4101 = vpop.f32.mrf.mxu0
    %v4102 = vadd.f32 %v3708, %v4101
    %v4103 = vpop.f32.mrf.mxu0
    %v4104 = vadd.f32 %v3708, %v4103
    %4105 = vmatmul.bf16.gmra.mxu0 %v3630
    %v4106 = vpop.f32.mrf.mxu0
    %v4107 = vadd.f32 %v3708, %v4106
    %v4108 = vpop.f32.mrf.mxu0
    %v4109 = vadd.f32 %v3708, %v4108
    %4110 = vmatmul.bf16.gmra.mxu0 %v3634
    %v4111 = vpop.f32.mrf.mxu0
    %v4112 = vadd.f32 %v3708, %v4111
    %v4113 = vpop.f32.mrf.mxu0
    %v4114 = vadd.f32 %v3708, %v4113
    %4115 = vmatmul.bf16.gmra.mxu0 %v3638
    %v4116 = vpop.f32.mrf.mxu0
    %v4117 = vadd.f32 %v3708, %v4116
    %v4118 = vpop.f32.mrf.mxu0
    %v4119 = vadd.f32 %v3708, %v4118
    %4120 = vdwg.mxu0
    %4121 = vmatpush.bf16.msra.mxu0 %v3934
    %4122 = vmatpush.bf16.msra.mxu0 %v3932
    %4123 = vmatpush.bf16.msra.mxu0 %v3930
    %4124 = vmatpush.bf16.msra.mxu0 %v3928
    %4125 = vmatpush.bf16.msra.mxu0 %v3926
    %4126 = vmatpush.bf16.msra.mxu0 %v3924
    %4127 = vmatpush.bf16.msra.mxu0 %v3922
    %4128 = vmatpush.bf16.msra.mxu0 %v3920
    %4129 = vmatmul.bf16.gmra.mxu0 %v3579
    %v4130 = vpop.f32.mrf.mxu0
    %v4131 = vadd.f32 %v4042, %v4130
    %v4132 = vpop.f32.mrf.mxu0
    %v4133 = vadd.f32 %v4044, %v4132
    %4134 = vmatmul.bf16.gmra.mxu0 %v3583
    %v4135 = vpop.f32.mrf.mxu0
    %v4136 = vadd.f32 %v4047, %v4135
    %v4137 = vpop.f32.mrf.mxu0
    %v4138 = vadd.f32 %v4049, %v4137
    %4139 = vmatmul.bf16.gmra.mxu0 %v3587
    %v4140 = vpop.f32.mrf.mxu0
    %v4141 = vadd.f32 %v4052, %v4140
    %v4142 = vpop.f32.mrf.mxu0
    %v4143 = vadd.f32 %v4054, %v4142
    %4144 = vmatmul.bf16.gmra.mxu0 %v3591
    %v4145 = vpop.f32.mrf.mxu0
    %v4146 = vadd.f32 %v4057, %v4145
    %v4147 = vpop.f32.mrf.mxu0
    %v4148 = vadd.f32 %v4059, %v4147
    %4149 = vmatmul.bf16.gmra.mxu0 %v3595
    %v4150 = vpop.f32.mrf.mxu0
    %v4151 = vadd.f32 %v4062, %v4150
    %v4152 = vpop.f32.mrf.mxu0
    %v4153 = vadd.f32 %v4064, %v4152
    %4154 = vmatmul.bf16.gmra.mxu0 %v3599
    %v4155 = vpop.f32.mrf.mxu0
    %v4156 = vadd.f32 %v4067, %v4155
    %v4157 = vpop.f32.mrf.mxu0
    %v4158 = vadd.f32 %v4069, %v4157
    %4159 = vmatmul.bf16.gmra.mxu0 %v3603
    %v4160 = vpop.f32.mrf.mxu0
    %v4161 = vadd.f32 %v4072, %v4160
    %v4162 = vpop.f32.mrf.mxu0
    %v4163 = vadd.f32 %v4074, %v4162
    %4164 = vmatmul.bf16.gmra.mxu0 %v3607
    %v4165 = vpop.f32.mrf.mxu0
    %v4166 = vadd.f32 %v4077, %v4165
    %v4167 = vpop.f32.mrf.mxu0
    %v4168 = vadd.f32 %v4079, %v4167
    %4169 = vmatmul.bf16.gmra.mxu0 %v3611
    %v4170 = vpop.f32.mrf.mxu0
    %v4171 = vadd.f32 %v4082, %v4170
    %v4172 = vpop.f32.mrf.mxu0
    %v4173 = vadd.f32 %v4084, %v4172
    %4174 = vmatmul.bf16.gmra.mxu0 %v3615
    %v4175 = vpop.f32.mrf.mxu0
    %v4176 = vadd.f32 %v4087, %v4175
    %v4177 = vpop.f32.mrf.mxu0
    %v4178 = vadd.f32 %v4089, %v4177
    %4179 = vmatmul.bf16.gmra.mxu0 %v3619
    %v4180 = vpop.f32.mrf.mxu0
    %v4181 = vadd.f32 %v4092, %v4180
    %v4182 = vpop.f32.mrf.mxu0
    %v4183 = vadd.f32 %v4094, %v4182
    %4184 = vmatmul.bf16.gmra.mxu0 %v3623
    %v4185 = vpop.f32.mrf.mxu0
    %v4186 = vadd.f32 %v4097, %v4185
    %v4187 = vpop.f32.mrf.mxu0
    %v4188 = vadd.f32 %v4099, %v4187
    %4189 = vmatmul.bf16.gmra.mxu0 %v3627
    %v4190 = vpop.f32.mrf.mxu0
    %v4191 = vadd.f32 %v4102, %v4190
    %v4192 = vpop.f32.mrf.mxu0
    %v4193 = vadd.f32 %v4104, %v4192
    %4194 = vmatmul.bf16.gmra.mxu0 %v3631
    %v4195 = vpop.f32.mrf.mxu0
    %v4196 = vadd.f32 %v4107, %v4195
    %v4197 = vpop.f32.mrf.mxu0
    %v4198 = vadd.f32 %v4109, %v4197
    %4199 = vmatmul.bf16.gmra.mxu0 %v3635
    %v4200 = vpop.f32.mrf.mxu0
    %v4201 = vadd.f32 %v4112, %v4200
    %v4202 = vpop.f32.mrf.mxu0
    %v4203 = vadd.f32 %v4114, %v4202
    %4204 = vmatmul.bf16.gmra.mxu0 %v3639
    %v4205 = vpop.f32.mrf.mxu0
    %v4206 = vadd.f32 %v4117, %v4205
    %v4207 = vpop.f32.mrf.mxu0
    %v4208 = vadd.f32 %v4119, %v4207
    %4209 = vdwg.mxu0
    %4210 = vmatpush.bf16.msra.mxu0 %v3950
    %4211 = vmatpush.bf16.msra.mxu0 %v3948
    %4212 = vmatpush.bf16.msra.mxu0 %v3946
    %4213 = vmatpush.bf16.msra.mxu0 %v3944
    %4214 = vmatpush.bf16.msra.mxu0 %v3942
    %4215 = vmatpush.bf16.msra.mxu0 %v3940
    %4216 = vmatpush.bf16.msra.mxu0 %v3938
    %4217 = vmatpush.bf16.msra.mxu0 %v3936
    %4218 = vmatmul.bf16.gmra.mxu0 %v3580
    %v4219 = vpop.f32.mrf.mxu0
    %v4220 = vadd.f32 %v4131, %v4219
    %v4221 = vpop.f32.mrf.mxu0
    %v4222 = vadd.f32 %v4133, %v4221
    %4223 = vmatmul.bf16.gmra.mxu0 %v3584
    %v4224 = vpop.f32.mrf.mxu0
    %v4225 = vadd.f32 %v4136, %v4224
    %v4226 = vpop.f32.mrf.mxu0
    %v4227 = vadd.f32 %v4138, %v4226
    %4228 = vmatmul.bf16.gmra.mxu0 %v3588
    %v4229 = vpop.f32.mrf.mxu0
    %v4230 = vadd.f32 %v4141, %v4229
    %v4231 = vpop.f32.mrf.mxu0
    %v4232 = vadd.f32 %v4143, %v4231
    %4233 = vmatmul.bf16.gmra.mxu0 %v3592
    %v4234 = vpop.f32.mrf.mxu0
    %v4235 = vadd.f32 %v4146, %v4234
    %v4236 = vpop.f32.mrf.mxu0
    %v4237 = vadd.f32 %v4148, %v4236
    %4238 = vmatmul.bf16.gmra.mxu0 %v3596
    %v4239 = vpop.f32.mrf.mxu0
    %v4240 = vadd.f32 %v4151, %v4239
    %v4241 = vpop.f32.mrf.mxu0
    %v4242 = vadd.f32 %v4153, %v4241
    %4243 = vmatmul.bf16.gmra.mxu0 %v3600
    %v4244 = vpop.f32.mrf.mxu0
    %v4245 = vadd.f32 %v4156, %v4244
    %v4246 = vpop.f32.mrf.mxu0
    %v4247 = vadd.f32 %v4158, %v4246
    %4248 = vmatmul.bf16.gmra.mxu0 %v3604
    %v4249 = vpop.f32.mrf.mxu0
    %v4250 = vadd.f32 %v4161, %v4249
    %v4251 = vpop.f32.mrf.mxu0
    %v4252 = vadd.f32 %v4163, %v4251
    %4253 = vmatmul.bf16.gmra.mxu0 %v3608
    %v4254 = vpop.f32.mrf.mxu0
    %v4255 = vadd.f32 %v4166, %v4254
    %v4256 = vpop.f32.mrf.mxu0
    %v4257 = vadd.f32 %v4168, %v4256
    %4258 = vmatmul.bf16.gmra.mxu0 %v3612
    %v4259 = vpop.f32.mrf.mxu0
    %v4260 = vadd.f32 %v4171, %v4259
    %v4261 = vpop.f32.mrf.mxu0
    %v4262 = vadd.f32 %v4173, %v4261
    %4263 = vmatmul.bf16.gmra.mxu0 %v3616
    %v4264 = vpop.f32.mrf.mxu0
    %v4265 = vadd.f32 %v4176, %v4264
    %v4266 = vpop.f32.mrf.mxu0
    %v4267 = vadd.f32 %v4178, %v4266
    %4268 = vmatmul.bf16.gmra.mxu0 %v3620
    %v4269 = vpop.f32.mrf.mxu0
    %v4270 = vadd.f32 %v4181, %v4269
    %v4271 = vpop.f32.mrf.mxu0
    %v4272 = vadd.f32 %v4183, %v4271
    %4273 = vmatmul.bf16.gmra.mxu0 %v3624
    %v4274 = vpop.f32.mrf.mxu0
    %v4275 = vadd.f32 %v4186, %v4274
    %v4276 = vpop.f32.mrf.mxu0
    %v4277 = vadd.f32 %v4188, %v4276
    %4278 = vmatmul.bf16.gmra.mxu0 %v3628
    %v4279 = vpop.f32.mrf.mxu0
    %v4280 = vadd.f32 %v4191, %v4279
    %v4281 = vpop.f32.mrf.mxu0
    %v4282 = vadd.f32 %v4193, %v4281
    %4283 = vmatmul.bf16.gmra.mxu0 %v3632
    %v4284 = vpop.f32.mrf.mxu0
    %v4285 = vadd.f32 %v4196, %v4284
    %v4286 = vpop.f32.mrf.mxu0
    %v4287 = vadd.f32 %v4198, %v4286
    %4288 = vmatmul.bf16.gmra.mxu0 %v3636
    %v4289 = vpop.f32.mrf.mxu0
    %v4290 = vadd.f32 %v4201, %v4289
    %v4291 = vpop.f32.mrf.mxu0
    %v4292 = vadd.f32 %v4203, %v4291
    %4293 = vmatmul.bf16.gmra.mxu0 %v3640
    %v4294 = vpop.f32.mrf.mxu0
    %v4295 = vadd.f32 %v4206, %v4294
    %v4296 = vpop.f32.mrf.mxu0
    %v4297 = vadd.f32 %v4208, %v4296
    %4298 = vdwg.mxu0
    %4299 = vmatpush.bf16.msra.mxu0 %v3966
    %4300 = vmatpush.bf16.msra.mxu0 %v3964
    %4301 = vmatpush.bf16.msra.mxu0 %v3962
    %4302 = vmatpush.bf16.msra.mxu0 %v3960
    %4303 = vmatpush.bf16.msra.mxu0 %v3958
    %4304 = vmatpush.bf16.msra.mxu0 %v3956
    %4305 = vmatpush.bf16.msra.mxu0 %v3954
    %4306 = vmatpush.bf16.msra.mxu0 %v3952
    %4307 = vmatmul.bf16.gmra.mxu0 %v3581
    %v4308 = vpop.f32.mrf.mxu0
    %v4309 = vadd.f32 %v4220, %v4308
    %v4310 = vpop.f32.mrf.mxu0
    %v4311 = vadd.f32 %v4222, %v4310
    %4312 = vmatmul.bf16.gmra.mxu0 %v3585
    %v4313 = vpop.f32.mrf.mxu0
    %v4314 = vadd.f32 %v4225, %v4313
    %v4315 = vpop.f32.mrf.mxu0
    %v4316 = vadd.f32 %v4227, %v4315
    %4317 = vmatmul.bf16.gmra.mxu0 %v3589
    %v4318 = vpop.f32.mrf.mxu0
    %v4319 = vadd.f32 %v4230, %v4318
    %v4320 = vpop.f32.mrf.mxu0
    %v4321 = vadd.f32 %v4232, %v4320
    %4322 = vmatmul.bf16.gmra.mxu0 %v3593
    %v4323 = vpop.f32.mrf.mxu0
    %v4324 = vadd.f32 %v4235, %v4323
    %v4325 = vpop.f32.mrf.mxu0
    %v4326 = vadd.f32 %v4237, %v4325
    %4327 = vmatmul.bf16.gmra.mxu0 %v3597
    %v4328 = vpop.f32.mrf.mxu0
    %v4329 = vadd.f32 %v4240, %v4328
    %v4330 = vpop.f32.mrf.mxu0
    %v4331 = vadd.f32 %v4242, %v4330
    %4332 = vmatmul.bf16.gmra.mxu0 %v3601
    %v4333 = vpop.f32.mrf.mxu0
    %v4334 = vadd.f32 %v4245, %v4333
    %v4335 = vpop.f32.mrf.mxu0
    %v4336 = vadd.f32 %v4247, %v4335
    %4337 = vmatmul.bf16.gmra.mxu0 %v3605
    %v4338 = vpop.f32.mrf.mxu0
    %v4339 = vadd.f32 %v4250, %v4338
    %v4340 = vpop.f32.mrf.mxu0
    %v4341 = vadd.f32 %v4252, %v4340
    %4342 = vmatmul.bf16.gmra.mxu0 %v3609
    %v4343 = vpop.f32.mrf.mxu0
    %v4344 = vadd.f32 %v4255, %v4343
    %v4345 = vpop.f32.mrf.mxu0
    %v4346 = vadd.f32 %v4257, %v4345
    %4347 = vmatmul.bf16.gmra.mxu0 %v3613
    %v4348 = vpop.f32.mrf.mxu0
    %v4349 = vadd.f32 %v4260, %v4348
    %v4350 = vpop.f32.mrf.mxu0
    %v4351 = vadd.f32 %v4262, %v4350
    %4352 = vmatmul.bf16.gmra.mxu0 %v3617
    %v4353 = vpop.f32.mrf.mxu0
    %v4354 = vadd.f32 %v4265, %v4353
    %v4355 = vpop.f32.mrf.mxu0
    %v4356 = vadd.f32 %v4267, %v4355
    %4357 = vmatmul.bf16.gmra.mxu0 %v3621
    %v4358 = vpop.f32.mrf.mxu0
    %v4359 = vadd.f32 %v4270, %v4358
    %v4360 = vpop.f32.mrf.mxu0
    %v4361 = vadd.f32 %v4272, %v4360
    %4362 = vmatmul.bf16.gmra.mxu0 %v3625
    %v4363 = vpop.f32.mrf.mxu0
    %v4364 = vadd.f32 %v4275, %v4363
    %v4365 = vpop.f32.mrf.mxu0
    %v4366 = vadd.f32 %v4277, %v4365
    %4367 = vmatmul.bf16.gmra.mxu0 %v3629
    %v4368 = vpop.f32.mrf.mxu0
    %v4369 = vadd.f32 %v4280, %v4368
    %v4370 = vpop.f32.mrf.mxu0
    %v4371 = vadd.f32 %v4282, %v4370
    %4372 = vmatmul.bf16.gmra.mxu0 %v3633
    %v4373 = vpop.f32.mrf.mxu0
    %v4374 = vadd.f32 %v4285, %v4373
    %v4375 = vpop.f32.mrf.mxu0
    %v4376 = vadd.f32 %v4287, %v4375
    %4377 = vmatmul.bf16.gmra.mxu0 %v3637
    %v4378 = vpop.f32.mrf.mxu0
    %v4379 = vadd.f32 %v4290, %v4378
    %v4380 = vpop.f32.mrf.mxu0
    %v4381 = vadd.f32 %v4292, %v4380
    %4382 = vmatmul.bf16.gmra.mxu0 %v3641
    %v4383 = vpop.f32.mrf.mxu0
    %v4384 = vadd.f32 %v4295, %v4383
    %v4385 = vpop.f32.mrf.mxu0
    %v4386 = vadd.f32 %v4297, %v4385
    %4387 = vdwg.mxu0
    %4388 = vmatpush.bf16.msra.mxu0 %v3919
    %4389 = vmatpush.bf16.msra.mxu0 %v3917
    %4390 = vmatpush.bf16.msra.mxu0 %v3915
    %4391 = vmatpush.bf16.msra.mxu0 %v3913
    %4392 = vmatpush.bf16.msra.mxu0 %v3911
    %4393 = vmatpush.bf16.msra.mxu0 %v3909
    %4394 = vmatpush.bf16.msra.mxu0 %v3907
    %4395 = vmatpush.bf16.msra.mxu0 %v3905
    %4396 = vmatmul.bf16.gmra.mxu0 %v3578
    %v4397 = vpop.f32.mrf.mxu0
    %v4398 = vadd.f32 %v3709, %v4397
    %v4399 = vpop.f32.mrf.mxu0
    %v4400 = vadd.f32 %v3709, %v4399
    %4401 = vmatmul.bf16.gmra.mxu0 %v3582
    %v4402 = vpop.f32.mrf.mxu0
    %v4403 = vadd.f32 %v3709, %v4402
    %v4404 = vpop.f32.mrf.mxu0
    %v4405 = vadd.f32 %v3709, %v4404
    %4406 = vmatmul.bf16.gmra.mxu0 %v3586
    %v4407 = vpop.f32.mrf.mxu0
    %v4408 = vadd.f32 %v3709, %v4407
    %v4409 = vpop.f32.mrf.mxu0
    %v4410 = vadd.f32 %v3709, %v4409
    %4411 = vmatmul.bf16.gmra.mxu0 %v3590
    %v4412 = vpop.f32.mrf.mxu0
    %v4413 = vadd.f32 %v3709, %v4412
    %v4414 = vpop.f32.mrf.mxu0
    %v4415 = vadd.f32 %v3709, %v4414
    %4416 = vmatmul.bf16.gmra.mxu0 %v3594
    %v4417 = vpop.f32.mrf.mxu0
    %v4418 = vadd.f32 %v3709, %v4417
    %v4419 = vpop.f32.mrf.mxu0
    %v4420 = vadd.f32 %v3709, %v4419
    %4421 = vmatmul.bf16.gmra.mxu0 %v3598
    %v4422 = vpop.f32.mrf.mxu0
    %v4423 = vadd.f32 %v3709, %v4422
    %v4424 = vpop.f32.mrf.mxu0
    %v4425 = vadd.f32 %v3709, %v4424
    %4426 = vmatmul.bf16.gmra.mxu0 %v3602
    %v4427 = vpop.f32.mrf.mxu0
    %v4428 = vadd.f32 %v3709, %v4427
    %v4429 = vpop.f32.mrf.mxu0
    %v4430 = vadd.f32 %v3709, %v4429
    %4431 = vmatmul.bf16.gmra.mxu0 %v3606
    %v4432 = vpop.f32.mrf.mxu0
    %v4433 = vadd.f32 %v3709, %v4432
    %v4434 = vpop.f32.mrf.mxu0
    %v4435 = vadd.f32 %v3709, %v4434
    %4436 = vmatmul.bf16.gmra.mxu0 %v3610
    %v4437 = vpop.f32.mrf.mxu0
    %v4438 = vadd.f32 %v3709, %v4437
    %v4439 = vpop.f32.mrf.mxu0
    %v4440 = vadd.f32 %v3709, %v4439
    %4441 = vmatmul.bf16.gmra.mxu0 %v3614
    %v4442 = vpop.f32.mrf.mxu0
    %v4443 = vadd.f32 %v3709, %v4442
    %v4444 = vpop.f32.mrf.mxu0
    %v4445 = vadd.f32 %v3709, %v4444
    %4446 = vmatmul.bf16.gmra.mxu0 %v3618
    %v4447 = vpop.f32.mrf.mxu0
    %v4448 = vadd.f32 %v3709, %v4447
    %v4449 = vpop.f32.mrf.mxu0
    %v4450 = vadd.f32 %v3709, %v4449
    %4451 = vmatmul.bf16.gmra.mxu0 %v3622
    %v4452 = vpop.f32.mrf.mxu0
    %v4453 = vadd.f32 %v3709, %v4452
    %v4454 = vpop.f32.mrf.mxu0
    %v4455 = vadd.f32 %v3709, %v4454
    %4456 = vmatmul.bf16.gmra.mxu0 %v3626
    %v4457 = vpop.f32.mrf.mxu0
    %v4458 = vadd.f32 %v3709, %v4457
    %v4459 = vpop.f32.mrf.mxu0
    %v4460 = vadd.f32 %v3709, %v4459
    %4461 = vmatmul.bf16.gmra.mxu0 %v3630
    %v4462 = vpop.f32.mrf.mxu0
    %v4463 = vadd.f32 %v3709, %v4462
    %v4464 = vpop.f32.mrf.mxu0
    %v4465 = vadd.f32 %v3709, %v4464
    %4466 = vmatmul.bf16.gmra.mxu0 %v3634
    %v4467 = vpop.f32.mrf.mxu0
    %v4468 = vadd.f32 %v3709, %v4467
    %v4469 = vpop.f32.mrf.mxu0
    %v4470 = vadd.f32 %v3709, %v4469
    %4471 = vmatmul.bf16.gmra.mxu0 %v3638
    %v4472 = vpop.f32.mrf.mxu0
    %v4473 = vadd.f32 %v3709, %v4472
    %v4474 = vpop.f32.mrf.mxu0
    %v4475 = vadd.f32 %v3709, %v4474
    %4476 = vdwg.mxu0
    %4477 = vmatpush.bf16.msra.mxu0 %v3935
    %4478 = vmatpush.bf16.msra.mxu0 %v3933
    %4479 = vmatpush.bf16.msra.mxu0 %v3931
    %4480 = vmatpush.bf16.msra.mxu0 %v3929
    %4481 = vmatpush.bf16.msra.mxu0 %v3927
    %4482 = vmatpush.bf16.msra.mxu0 %v3925
    %4483 = vmatpush.bf16.msra.mxu0 %v3923
    %4484 = vmatpush.bf16.msra.mxu0 %v3921
    %4485 = vmatmul.bf16.gmra.mxu0 %v3579
    %v4486 = vpop.f32.mrf.mxu0
    %v4487 = vadd.f32 %v4398, %v4486
    %v4488 = vpop.f32.mrf.mxu0
    %v4489 = vadd.f32 %v4400, %v4488
    %4490 = vmatmul.bf16.gmra.mxu0 %v3583
    %v4491 = vpop.f32.mrf.mxu0
    %v4492 = vadd.f32 %v4403, %v4491
    %v4493 = vpop.f32.mrf.mxu0
    %v4494 = vadd.f32 %v4405, %v4493
    %4495 = vmatmul.bf16.gmra.mxu0 %v3587
    %v4496 = vpop.f32.mrf.mxu0
    %v4497 = vadd.f32 %v4408, %v4496
    %v4498 = vpop.f32.mrf.mxu0
    %v4499 = vadd.f32 %v4410, %v4498
    %4500 = vmatmul.bf16.gmra.mxu0 %v3591
    %v4501 = vpop.f32.mrf.mxu0
    %v4502 = vadd.f32 %v4413, %v4501
    %v4503 = vpop.f32.mrf.mxu0
    %v4504 = vadd.f32 %v4415, %v4503
    %4505 = vmatmul.bf16.gmra.mxu0 %v3595
    %v4506 = vpop.f32.mrf.mxu0
    %v4507 = vadd.f32 %v4418, %v4506
    %v4508 = vpop.f32.mrf.mxu0
    %v4509 = vadd.f32 %v4420, %v4508
    %4510 = vmatmul.bf16.gmra.mxu0 %v3599
    %v4511 = vpop.f32.mrf.mxu0
    %v4512 = vadd.f32 %v4423, %v4511
    %v4513 = vpop.f32.mrf.mxu0
    %v4514 = vadd.f32 %v4425, %v4513
    %4515 = vmatmul.bf16.gmra.mxu0 %v3603
    %v4516 = vpop.f32.mrf.mxu0
    %v4517 = vadd.f32 %v4428, %v4516
    %v4518 = vpop.f32.mrf.mxu0
    %v4519 = vadd.f32 %v4430, %v4518
    %4520 = vmatmul.bf16.gmra.mxu0 %v3607
    %v4521 = vpop.f32.mrf.mxu0
    %v4522 = vadd.f32 %v4433, %v4521
    %v4523 = vpop.f32.mrf.mxu0
    %v4524 = vadd.f32 %v4435, %v4523
    %4525 = vmatmul.bf16.gmra.mxu0 %v3611
    %v4526 = vpop.f32.mrf.mxu0
    %v4527 = vadd.f32 %v4438, %v4526
    %v4528 = vpop.f32.mrf.mxu0
    %v4529 = vadd.f32 %v4440, %v4528
    %4530 = vmatmul.bf16.gmra.mxu0 %v3615
    %v4531 = vpop.f32.mrf.mxu0
    %v4532 = vadd.f32 %v4443, %v4531
    %v4533 = vpop.f32.mrf.mxu0
    %v4534 = vadd.f32 %v4445, %v4533
    %4535 = vmatmul.bf16.gmra.mxu0 %v3619
    %v4536 = vpop.f32.mrf.mxu0
    %v4537 = vadd.f32 %v4448, %v4536
    %v4538 = vpop.f32.mrf.mxu0
    %v4539 = vadd.f32 %v4450, %v4538
    %4540 = vmatmul.bf16.gmra.mxu0 %v3623
    %v4541 = vpop.f32.mrf.mxu0
    %v4542 = vadd.f32 %v4453, %v4541
    %v4543 = vpop.f32.mrf.mxu0
    %v4544 = vadd.f32 %v4455, %v4543
    %4545 = vmatmul.bf16.gmra.mxu0 %v3627
    %v4546 = vpop.f32.mrf.mxu0
    %v4547 = vadd.f32 %v4458, %v4546
    %v4548 = vpop.f32.mrf.mxu0
    %v4549 = vadd.f32 %v4460, %v4548
    %4550 = vmatmul.bf16.gmra.mxu0 %v3631
    %v4551 = vpop.f32.mrf.mxu0
    %v4552 = vadd.f32 %v4463, %v4551
    %v4553 = vpop.f32.mrf.mxu0
    %v4554 = vadd.f32 %v4465, %v4553
    %4555 = vmatmul.bf16.gmra.mxu0 %v3635
    %v4556 = vpop.f32.mrf.mxu0
    %v4557 = vadd.f32 %v4468, %v4556
    %v4558 = vpop.f32.mrf.mxu0
    %v4559 = vadd.f32 %v4470, %v4558
    %4560 = vmatmul.bf16.gmra.mxu0 %v3639
    %v4561 = vpop.f32.mrf.mxu0
    %v4562 = vadd.f32 %v4473, %v4561
    %v4563 = vpop.f32.mrf.mxu0
    %v4564 = vadd.f32 %v4475, %v4563
    %4565 = vdwg.mxu0
    %4566 = vmatpush.bf16.msra.mxu0 %v3951
    %4567 = vmatpush.bf16.msra.mxu0 %v3949
    %4568 = vmatpush.bf16.msra.mxu0 %v3947
    %4569 = vmatpush.bf16.msra.mxu0 %v3945
    %4570 = vmatpush.bf16.msra.mxu0 %v3943
    %4571 = vmatpush.bf16.msra.mxu0 %v3941
    %4572 = vmatpush.bf16.msra.mxu0 %v3939
    %4573 = vmatpush.bf16.msra.mxu0 %v3937
    %4574 = vmatmul.bf16.gmra.mxu0 %v3580
    %v4575 = vpop.f32.mrf.mxu0
    %v4576 = vadd.f32 %v4487, %v4575
    %v4577 = vpop.f32.mrf.mxu0
    %v4578 = vadd.f32 %v4489, %v4577
    %4579 = vmatmul.bf16.gmra.mxu0 %v3584
    %v4580 = vpop.f32.mrf.mxu0
    %v4581 = vadd.f32 %v4492, %v4580
    %v4582 = vpop.f32.mrf.mxu0
    %v4583 = vadd.f32 %v4494, %v4582
    %4584 = vmatmul.bf16.gmra.mxu0 %v3588
    %v4585 = vpop.f32.mrf.mxu0
    %v4586 = vadd.f32 %v4497, %v4585
    %v4587 = vpop.f32.mrf.mxu0
    %v4588 = vadd.f32 %v4499, %v4587
    %4589 = vmatmul.bf16.gmra.mxu0 %v3592
    %v4590 = vpop.f32.mrf.mxu0
    %v4591 = vadd.f32 %v4502, %v4590
    %v4592 = vpop.f32.mrf.mxu0
    %v4593 = vadd.f32 %v4504, %v4592
    %4594 = vmatmul.bf16.gmra.mxu0 %v3596
    %v4595 = vpop.f32.mrf.mxu0
    %v4596 = vadd.f32 %v4507, %v4595
    %v4597 = vpop.f32.mrf.mxu0
    %v4598 = vadd.f32 %v4509, %v4597
    %4599 = vmatmul.bf16.gmra.mxu0 %v3600
    %v4600 = vpop.f32.mrf.mxu0
    %v4601 = vadd.f32 %v4512, %v4600
    %v4602 = vpop.f32.mrf.mxu0
    %v4603 = vadd.f32 %v4514, %v4602
    %4604 = vmatmul.bf16.gmra.mxu0 %v3604
    %v4605 = vpop.f32.mrf.mxu0
    %v4606 = vadd.f32 %v4517, %v4605
    %v4607 = vpop.f32.mrf.mxu0
    %v4608 = vadd.f32 %v4519, %v4607
    %4609 = vmatmul.bf16.gmra.mxu0 %v3608
    %v4610 = vpop.f32.mrf.mxu0
    %v4611 = vadd.f32 %v4522, %v4610
    %v4612 = vpop.f32.mrf.mxu0
    %v4613 = vadd.f32 %v4524, %v4612
    %4614 = vmatmul.bf16.gmra.mxu0 %v3612
    %v4615 = vpop.f32.mrf.mxu0
    %v4616 = vadd.f32 %v4527, %v4615
    %v4617 = vpop.f32.mrf.mxu0
    %v4618 = vadd.f32 %v4529, %v4617
    %4619 = vmatmul.bf16.gmra.mxu0 %v3616
    %v4620 = vpop.f32.mrf.mxu0
    %v4621 = vadd.f32 %v4532, %v4620
    %v4622 = vpop.f32.mrf.mxu0
    %v4623 = vadd.f32 %v4534, %v4622
    %4624 = vmatmul.bf16.gmra.mxu0 %v3620
    %v4625 = vpop.f32.mrf.mxu0
    %v4626 = vadd.f32 %v4537, %v4625
    %v4627 = vpop.f32.mrf.mxu0
    %v4628 = vadd.f32 %v4539, %v4627
    %4629 = vmatmul.bf16.gmra.mxu0 %v3624
    %v4630 = vpop.f32.mrf.mxu0
    %v4631 = vadd.f32 %v4542, %v4630
    %v4632 = vpop.f32.mrf.mxu0
    %v4633 = vadd.f32 %v4544, %v4632
    %4634 = vmatmul.bf16.gmra.mxu0 %v3628
    %v4635 = vpop.f32.mrf.mxu0
    %v4636 = vadd.f32 %v4547, %v4635
    %v4637 = vpop.f32.mrf.mxu0
    %v4638 = vadd.f32 %v4549, %v4637
    %4639 = vmatmul.bf16.gmra.mxu0 %v3632
    %v4640 = vpop.f32.mrf.mxu0
    %v4641 = vadd.f32 %v4552, %v4640
    %v4642 = vpop.f32.mrf.mxu0
    %v4643 = vadd.f32 %v4554, %v4642
    %4644 = vmatmul.bf16.gmra.mxu0 %v3636
    %v4645 = vpop.f32.mrf.mxu0
    %v4646 = vadd.f32 %v4557, %v4645
    %v4647 = vpop.f32.mrf.mxu0
    %v4648 = vadd.f32 %v4559, %v4647
    %4649 = vmatmul.bf16.gmra.mxu0 %v3640
    %v4650 = vpop.f32.mrf.mxu0
    %v4651 = vadd.f32 %v4562, %v4650
    %v4652 = vpop.f32.mrf.mxu0
    %v4653 = vadd.f32 %v4564, %v4652
    %4654 = vdwg.mxu0
    %4655 = vmatpush.bf16.msra.mxu0 %v3967
    %4656 = vmatpush.bf16.msra.mxu0 %v3965
    %4657 = vmatpush.bf16.msra.mxu0 %v3963
    %4658 = vmatpush.bf16.msra.mxu0 %v3961
    %4659 = vmatpush.bf16.msra.mxu0 %v3959
    %4660 = vmatpush.bf16.msra.mxu0 %v3957
    %4661 = vmatpush.bf16.msra.mxu0 %v3955
    %4662 = vmatpush.bf16.msra.mxu0 %v3953
    %4663 = vmatmul.bf16.gmra.mxu0 %v3581
    %v4664 = vpop.f32.mrf.mxu0
    %v4665 = vadd.f32 %v4576, %v4664
    %v4666 = vpop.f32.mrf.mxu0
    %v4667 = vadd.f32 %v4578, %v4666
    %4668 = vmatmul.bf16.gmra.mxu0 %v3585
    %v4669 = vpop.f32.mrf.mxu0
    %v4670 = vadd.f32 %v4581, %v4669
    %v4671 = vpop.f32.mrf.mxu0
    %v4672 = vadd.f32 %v4583, %v4671
    %4673 = vmatmul.bf16.gmra.mxu0 %v3589
    %v4674 = vpop.f32.mrf.mxu0
    %v4675 = vadd.f32 %v4586, %v4674
    %v4676 = vpop.f32.mrf.mxu0
    %v4677 = vadd.f32 %v4588, %v4676
    %4678 = vmatmul.bf16.gmra.mxu0 %v3593
    %v4679 = vpop.f32.mrf.mxu0
    %v4680 = vadd.f32 %v4591, %v4679
    %v4681 = vpop.f32.mrf.mxu0
    %v4682 = vadd.f32 %v4593, %v4681
    %4683 = vmatmul.bf16.gmra.mxu0 %v3597
    %v4684 = vpop.f32.mrf.mxu0
    %v4685 = vadd.f32 %v4596, %v4684
    %v4686 = vpop.f32.mrf.mxu0
    %v4687 = vadd.f32 %v4598, %v4686
    %4688 = vmatmul.bf16.gmra.mxu0 %v3601
    %v4689 = vpop.f32.mrf.mxu0
    %v4690 = vadd.f32 %v4601, %v4689
    %v4691 = vpop.f32.mrf.mxu0
    %v4692 = vadd.f32 %v4603, %v4691
    %4693 = vmatmul.bf16.gmra.mxu0 %v3605
    %v4694 = vpop.f32.mrf.mxu0
    %v4695 = vadd.f32 %v4606, %v4694
    %v4696 = vpop.f32.mrf.mxu0
    %v4697 = vadd.f32 %v4608, %v4696
    %4698 = vmatmul.bf16.gmra.mxu0 %v3609
    %v4699 = vpop.f32.mrf.mxu0
    %v4700 = vadd.f32 %v4611, %v4699
    %v4701 = vpop.f32.mrf.mxu0
    %v4702 = vadd.f32 %v4613, %v4701
    %4703 = vmatmul.bf16.gmra.mxu0 %v3613
    %v4704 = vpop.f32.mrf.mxu0
    %v4705 = vadd.f32 %v4616, %v4704
    %v4706 = vpop.f32.mrf.mxu0
    %v4707 = vadd.f32 %v4618, %v4706
    %4708 = vmatmul.bf16.gmra.mxu0 %v3617
    %v4709 = vpop.f32.mrf.mxu0
    %v4710 = vadd.f32 %v4621, %v4709
    %v4711 = vpop.f32.mrf.mxu0
    %v4712 = vadd.f32 %v4623, %v4711
    %4713 = vmatmul.bf16.gmra.mxu0 %v3621
    %v4714 = vpop.f32.mrf.mxu0
    %v4715 = vadd.f32 %v4626, %v4714
    %v4716 = vpop.f32.mrf.mxu0
    %v4717 = vadd.f32 %v4628, %v4716
    %4718 = vmatmul.bf16.gmra.mxu0 %v3625
    %v4719 = vpop.f32.mrf.mxu0
    %v4720 = vadd.f32 %v4631, %v4719
    %v4721 = vpop.f32.mrf.mxu0
    %v4722 = vadd.f32 %v4633, %v4721
    %4723 = vmatmul.bf16.gmra.mxu0 %v3629
    %v4724 = vpop.f32.mrf.mxu0
    %v4725 = vadd.f32 %v4636, %v4724
    %v4726 = vpop.f32.mrf.mxu0
    %v4727 = vadd.f32 %v4638, %v4726
    %4728 = vmatmul.bf16.gmra.mxu0 %v3633
    %v4729 = vpop.f32.mrf.mxu0
    %v4730 = vadd.f32 %v4641, %v4729
    %v4731 = vpop.f32.mrf.mxu0
    %v4732 = vadd.f32 %v4643, %v4731
    %4733 = vmatmul.bf16.gmra.mxu0 %v3637
    %v4734 = vpop.f32.mrf.mxu0
    %v4735 = vadd.f32 %v4646, %v4734
    %v4736 = vpop.f32.mrf.mxu0
    %v4737 = vadd.f32 %v4648, %v4736
    %4738 = vmatmul.bf16.gmra.mxu0 %v3641
    %v4739 = vpop.f32.mrf.mxu0
    %v4740 = vadd.f32 %v4651, %v4739
    %v4741 = vpop.f32.mrf.mxu0
    %v4742 = vadd.f32 %v4653, %v4741
    %4743 = vdwg.mxu0
    %v4744 = vmax.f32 %v4309, %v4311
    %v4745 = vmax.f32 %v4744, %v4314
    %v4746 = vmax.f32 %v4745, %v4316
    %v4747 = vrot.slane %v4746, 4
    %v4748 = vmax.f32 %v4746, %v4747
    %v4749 = vrot.slane %v4748, 2
    %v4750 = vmax.f32 %v4748, %v4749
    %v4751 = vrot.slane %v4750, 1
    %v4752 = vmax.f32 %v4750, %v4751
    %v4753 = vmax.f32 %v4665, %v4667
    %v4754 = vmax.f32 %v4753, %v4670
    %v4755 = vmax.f32 %v4754, %v4672
    %v4756 = vrot.slane %v4755, 4
    %v4757 = vmax.f32 %v4755, %v4756
    %v4758 = vrot.slane %v4757, 2
    %v4759 = vmax.f32 %v4757, %v4758
    %v4760 = vrot.slane %v4759, 1
    %v4761 = vmax.f32 %v4759, %v4760
    %v4762 = vmax.f32 %v4319, %v4321
    %v4763 = vmax.f32 %v4762, %v4324
    %v4764 = vmax.f32 %v4763, %v4326
    %v4765 = vrot.slane %v4764, 4
    %v4766 = vmax.f32 %v4764, %v4765
    %v4767 = vrot.slane %v4766, 2
    %v4768 = vmax.f32 %v4766, %v4767
    %v4769 = vrot.slane %v4768, 1
    %v4770 = vmax.f32 %v4768, %v4769
    %v4771 = vmax.f32 %v4675, %v4677
    %v4772 = vmax.f32 %v4771, %v4680
    %v4773 = vmax.f32 %v4772, %v4682
    %v4774 = vrot.slane %v4773, 4
    %v4775 = vmax.f32 %v4773, %v4774
    %v4776 = vrot.slane %v4775, 2
    %v4777 = vmax.f32 %v4775, %v4776
    %v4778 = vrot.slane %v4777, 1
    %v4779 = vmax.f32 %v4777, %v4778
    %v4780 = vmax.f32 %v4329, %v4331
    %v4781 = vmax.f32 %v4780, %v4334
    %v4782 = vmax.f32 %v4781, %v4336
    %v4783 = vrot.slane %v4782, 4
    %v4784 = vmax.f32 %v4782, %v4783
    %v4785 = vrot.slane %v4784, 2
    %v4786 = vmax.f32 %v4784, %v4785
    %v4787 = vrot.slane %v4786, 1
    %v4788 = vmax.f32 %v4786, %v4787
    %v4789 = vmax.f32 %v4685, %v4687
    %v4790 = vmax.f32 %v4789, %v4690
    %v4791 = vmax.f32 %v4790, %v4692
    %v4792 = vrot.slane %v4791, 4
    %v4793 = vmax.f32 %v4791, %v4792
    %v4794 = vrot.slane %v4793, 2
    %v4795 = vmax.f32 %v4793, %v4794
    %v4796 = vrot.slane %v4795, 1
    %v4797 = vmax.f32 %v4795, %v4796
    %v4798 = vmax.f32 %v4339, %v4341
    %v4799 = vmax.f32 %v4798, %v4344
    %v4800 = vmax.f32 %v4799, %v4346
    %v4801 = vrot.slane %v4800, 4
    %v4802 = vmax.f32 %v4800, %v4801
    %v4803 = vrot.slane %v4802, 2
    %v4804 = vmax.f32 %v4802, %v4803
    %v4805 = vrot.slane %v4804, 1
    %v4806 = vmax.f32 %v4804, %v4805
    %v4807 = vmax.f32 %v4695, %v4697
    %v4808 = vmax.f32 %v4807, %v4700
    %v4809 = vmax.f32 %v4808, %v4702
    %v4810 = vrot.slane %v4809, 4
    %v4811 = vmax.f32 %v4809, %v4810
    %v4812 = vrot.slane %v4811, 2
    %v4813 = vmax.f32 %v4811, %v4812
    %v4814 = vrot.slane %v4813, 1
    %v4815 = vmax.f32 %v4813, %v4814
    %v4816 = vmax.f32 %v4349, %v4351
    %v4817 = vmax.f32 %v4816, %v4354
    %v4818 = vmax.f32 %v4817, %v4356
    %v4819 = vrot.slane %v4818, 4
    %v4820 = vmax.f32 %v4818, %v4819
    %v4821 = vrot.slane %v4820, 2
    %v4822 = vmax.f32 %v4820, %v4821
    %v4823 = vrot.slane %v4822, 1
    %v4824 = vmax.f32 %v4822, %v4823
    %v4825 = vmax.f32 %v4705, %v4707
    %v4826 = vmax.f32 %v4825, %v4710
    %v4827 = vmax.f32 %v4826, %v4712
    %v4828 = vrot.slane %v4827, 4
    %v4829 = vmax.f32 %v4827, %v4828
    %v4830 = vrot.slane %v4829, 2
    %v4831 = vmax.f32 %v4829, %v4830
    %v4832 = vrot.slane %v4831, 1
    %v4833 = vmax.f32 %v4831, %v4832
    %v4834 = vmax.f32 %v4359, %v4361
    %v4835 = vmax.f32 %v4834, %v4364
    %v4836 = vmax.f32 %v4835, %v4366
    %v4837 = vrot.slane %v4836, 4
    %v4838 = vmax.f32 %v4836, %v4837
    %v4839 = vrot.slane %v4838, 2
    %v4840 = vmax.f32 %v4838, %v4839
    %v4841 = vrot.slane %v4840, 1
    %v4842 = vmax.f32 %v4840, %v4841
    %v4843 = vmax.f32 %v4715, %v4717
    %v4844 = vmax.f32 %v4843, %v4720
    %v4845 = vmax.f32 %v4844, %v4722
    %v4846 = vrot.slane %v4845, 4
    %v4847 = vmax.f32 %v4845, %v4846
    %v4848 = vrot.slane %v4847, 2
    %v4849 = vmax.f32 %v4847, %v4848
    %v4850 = vrot.slane %v4849, 1
    %v4851 = vmax.f32 %v4849, %v4850
    %v4852 = vmax.f32 %v4369, %v4371
    %v4853 = vmax.f32 %v4852, %v4374
    %v4854 = vmax.f32 %v4853, %v4376
    %v4855 = vrot.slane %v4854, 4
    %v4856 = vmax.f32 %v4854, %v4855
    %v4857 = vrot.slane %v4856, 2
    %v4858 = vmax.f32 %v4856, %v4857
    %v4859 = vrot.slane %v4858, 1
    %v4860 = vmax.f32 %v4858, %v4859
    %v4861 = vmax.f32 %v4725, %v4727
    %v4862 = vmax.f32 %v4861, %v4730
    %v4863 = vmax.f32 %v4862, %v4732
    %v4864 = vrot.slane %v4863, 4
    %v4865 = vmax.f32 %v4863, %v4864
    %v4866 = vrot.slane %v4865, 2
    %v4867 = vmax.f32 %v4865, %v4866
    %v4868 = vrot.slane %v4867, 1
    %v4869 = vmax.f32 %v4867, %v4868
    %v4870 = vmax.f32 %v4379, %v4381
    %v4871 = vmax.f32 %v4870, %v4384
    %v4872 = vmax.f32 %v4871, %v4386
    %v4873 = vrot.slane %v4872, 4
    %v4874 = vmax.f32 %v4872, %v4873
    %v4875 = vrot.slane %v4874, 2
    %v4876 = vmax.f32 %v4874, %v4875
    %v4877 = vrot.slane %v4876, 1
    %v4878 = vmax.f32 %v4876, %v4877
    %v4879 = vmax.f32 %v4735, %v4737
    %v4880 = vmax.f32 %v4879, %v4740
    %v4881 = vmax.f32 %v4880, %v4742
    %v4882 = vrot.slane %v4881, 4
    %v4883 = vmax.f32 %v4881, %v4882
    %v4884 = vrot.slane %v4883, 2
    %v4885 = vmax.f32 %v4883, %v4884
    %v4886 = vrot.slane %v4885, 1
    %v4887 = vmax.f32 %v4885, %v4886
    %v4904 = vsel %vm1357, %v4770, %v4752
    %v4905 = vsel %vm1359, %v4788, %v4904
    %v4906 = vsel %vm1361, %v4806, %v4905
    %v4907 = vsel %vm1363, %v4824, %v4906
    %v4908 = vsel %vm1365, %v4842, %v4907
    %v4909 = vsel %vm1367, %v4860, %v4908
    %v4910 = vsel %vm1369, %v4878, %v4909
    %v4911 = vsel %vm1357, %v4779, %v4761
    %v4912 = vsel %vm1359, %v4797, %v4911
    %v4913 = vsel %vm1361, %v4815, %v4912
    %v4914 = vsel %vm1363, %v4833, %v4913
    %v4915 = vsel %vm1365, %v4851, %v4914
    %v4916 = vsel %vm1367, %v4869, %v4915
    %v4917 = vsel %vm1369, %v4887, %v4916
    %4920 = vst [vmem:[#allocation8] sm:$0xff] %v4910
    %4921 = vst [vmem:[#allocation8 + $0x8] sm:$0xff] %v4917
    // Predicated region
    $region62: #{tpu_custom_call.1} parent=1 // pred_check
      _
    $region63: #{tpu_custom_call.1} parent=1 // pred_check_branch
      %4923 = sbr.rel (0) target = $region65
    $region64: #{tpu_custom_call.1} parent=1 // pred_region
      %4925 = vsyncadd [#allocation4], 0
      %s4927 = sshll.u32 [#allocation8], 4
      %s4928 = int_to_ptr.vmem [resolvable:$true] %s4927
      %s4929 = sshll.u32 %s12, 4
      %s4930 = int_to_ptr.hbm [resolvable:$true] %s4929
      %4932 = dma.vmem_to_hbm [thread:$0]  %s4928, 256, %s4930, [#allocation4]
    $region65: #{tpu_custom_call.1} parent=1 // pred_fallthru
      _
    // Predicated region
    $region66: #{tpu_custom_call.1} parent=1 // pred_check
      _
    $region67: #{tpu_custom_call.1} parent=1 // pred_check_branch
      %4934 = sbr.rel (0) target = $region69
    $region68: #{tpu_custom_call.1} parent=1 // pred_region
      %4936 = dma.done [#allocation4], 256
    $region69: #{tpu_custom_call.1} parent=1 // pred_fallthru
      _
    %4937 = vsyncpa [#allocation3], 1
    %4938 = vsyncpa [#allocation6], 1
    %4939 = vsyncpa [#allocation4], 1

</llo_original>
